<compile_context>
chip_gen: v5e
topology: v5e:2x2
jax: 0.10.0
libtpu: 0.0.40
codegen_flags: <defaults>
</compile_context>

<pallas_src>
import math
import numpy as np
import jax
import jax.numpy as jnp
from jax.experimental import pallas as pl
from jax.experimental.pallas import tpu as pltpu


# ----------------------------------------------------------------------------
# Static configuration
# ----------------------------------------------------------------------------
_BINS = (1, 2, 3, 6)
_ZROWS = ((0, 1), (1, 5), (5, 14), (14, 50))   # per-branch row range in the packed (50, D) tensor
_ZTOT = 50                                     # 1^2 + 2^2 + 3^2 + 6^2
_P3 = 36                                       # sum_b 3 * k_b  (conv-shifted upsample width)


def _vmem_limit_bytes():
    """Generation-aware scoped-VMEM budget (~3/4 of physical)."""
    try:
        cap = int(pltpu.get_tpu_info().vmem_capacity_bytes)
    except Exception:
        cap = 64 * 1024 * 1024          # conservative fallback (valid on every gen)
    return max(32 * 1024 * 1024, (cap * 3) // 4)


def _pick_c_tile(C):
    for t in (512, 256, 128):
        if C % t == 0:
            return t
    return C


def _pick_h_tile(H, vmem_limit):
    # larger row tiles on 128 MiB parts (less halo DMA, fewer finalize epilogues)
    cap = 16 if vmem_limit >= 90 * 1024 * 1024 else 8
    for t in range(min(cap, H), 1, -1):
        if H % t == 0:
            return t
    return H


# ----------------------------------------------------------------------------
# Trace-time constant matrices (numpy)
# ----------------------------------------------------------------------------
def _adaptive_pool_matrix(in_size, out_size):
    """P with pooled[i] = sum_h P[i, h] * x[h]  (PyTorch adaptive_avg_pool)."""
    P = np.zeros((out_size, in_size), np.float32)
    for i in range(out_size):
        s = (i * in_size) // out_size
        e = -((-(i + 1) * in_size) // out_size)
        P[i, s:e] = 1.0 / float(e - s)
    return P


def _bilinear_matrix(in_size, out_size):
    """U with up[h] = sum_i U[h, i] * x[i]  (bilinear, align_corners=True)."""
    U = np.zeros((out_size, in_size), np.float32)
    if in_size == 1:
        U[:, 0] = 1.0
        return U
    if out_size == 1:
        U[0, 0] = 1.0
        return U
    scale = (in_size - 1) / (out_size - 1)
    for h in range(out_size):
        src = h * scale
        i0 = min(int(np.floor(src)), in_size - 1)
        lam = src - i0
        i1 = min(i0 + 1, in_size - 1)
        U[h, i0] += 1.0 - lam
        U[h, i1] += lam
    return U


def _build_pool_matrix(H, W):
    """(50, H*W): pooled cells of all four pyramid scales in one matrix."""
    blocks = []
    for k in _BINS:
        ph = _adaptive_pool_matrix(H, k)   # (k, H)
        pw = _adaptive_pool_matrix(W, k)   # (k, W)
        blocks.append(np.einsum('ih,jw->ijhw', ph, pw).reshape(k * k, H * W))
    return np.concatenate(blocks, axis=0).astype(np.float32)


def _shift3(u):
    """(S, k) upsample matrix -> (S, 3k): out[s, t*k + i] = u_pad[s + t, i],
    where u_pad is u zero-padded by one row on each side (the 3x3-conv shift
    and zero padding baked into the upsample matrix)."""
    S, k = u.shape
    up = np.zeros((S + 2, k), np.float32)
    up[1:S + 1] = u
    out = np.zeros((S, 3 * k), np.float32)
    for t in range(3):
        out[:, t * k:(t + 1) * k] = up[t:t + S]
    return out


# ----------------------------------------------------------------------------
# Parameter helpers
# ----------------------------------------------------------------------------
def init_psp_head_params(key, in_channels):
    C = in_channels
    D = C // 4
    eps = 1e-5
    k1, k2 = jax.random.split(key)
    std1 = math.sqrt(2.0 / (1 * 1 * D))      # PyTorch: n = kh*kw*out_channels
    stdf = math.sqrt(2.0 / (3 * 3 * D))
    bn_scale = 1.0 / math.sqrt(1.0 + eps)    # folded eval-mode BN
    return {
        "branch_w": jax.random.normal(k1, (4, C, D), jnp.float32) * std1,
        "branch_scale": jnp.full((4, D), bn_scale, jnp.float32),
        "branch_bias": jnp.zeros((4, D), jnp.float32),
        "fusion_w": jax.random.normal(k2, (9, 2 * C, D), jnp.float32) * stdf,
        "fusion_scale": jnp.full((D,), bn_scale, jnp.float32),
        "fusion_bias": jnp.zeros((D,), jnp.float32),
    }


def _expand_branch_bn(params, D):
    parts_s, parts_b = [], []
    for b in range(4):
        kk = _BINS[b] ** 2
        parts_s.append(jnp.broadcast_to(params["branch_scale"][b], (kk, D)))
        parts_b.append(jnp.broadcast_to(params["branch_bias"][b], (kk, D)))
    return jnp.concatenate(parts_s, axis=0), jnp.concatenate(parts_b, axis=0)


def _pack_fusion_x_weight(fusion_w, C, D):
    """(9, 2C, D) -> (3, C, 3D) bf16 with wxc[dy, :, dx*D:(dx+1)*D] = W[dy*3+dx, :C]."""
    wx = fusion_w[:, :C, :]                                    # (9, C, D)
    wxc = wx.reshape(3, 3, C, D).transpose(0, 2, 1, 3).reshape(3, C, 3 * D)
    return wxc.astype(jnp.bfloat16)


def _fold_branch_conv(z, fusion_w, C, D, H):
    """Fold the 3x3 fusion conv's branch weights into z and upsample along H.

    yh[n, h, q_b + dx*k + j, :] = sum_{dy,i} Uh_pad_b[h+dy, i] *
                                  (z_b[n, i*k+j, :] @ Wb[b, dy*3+dx]),
    so the fusion kernel only applies the W-direction upsample (dx shift baked
    into the packed (W, 36) matrix) and adds.  All the D^2 conv work of the
    pyramid half happens here on the tiny (50, D) tensor.
    """
    N = z.shape[0]
    wb = fusion_w[:, C:, :].reshape(9, 4, D, D)        # [tap, branch, Din, Dout]
    parts = []
    for b in range(4):
        k = _BINS[b]
        r0, r1 = _ZROWS[b]
        zb = z[:, r0:r1, :]                            # (N, k*k, D)
        y = jnp.einsum('nre,ted->ntrd', zb, wb[:, b],
                       preferred_element_type=jnp.float32)            # (N, 9, k*k, D)
        yg = y.reshape(N, 3, 3, k, k, D).transpose(0, 1, 3, 2, 4, 5)
        yg = yg.reshape(N, 3 * k, 3 * k, D)            # p = (dy, i), q = (dx, j)
        uh3_b = jnp.asarray(_shift3(_bilinear_matrix(k, H)), jnp.float32)  # (H, 3k)
        parts.append(jnp.einsum('hp,npqd->nhqd', uh3_b, yg,
                                preferred_element_type=jnp.float32))
    return jnp.concatenate(parts, axis=2)              # (N, H, 36, D) f32


# ----------------------------------------------------------------------------
# Kernel 1: pyramid branches (pool -> 1x1 conv -> BN -> ReLU) -> z (N, 50, D)
#           Grid (N, C-tiles, H-row-tiles); pooled accumulates in a (50, tc)
#           scratch over h, the conv accumulates into the resident output over c.
# ----------------------------------------------------------------------------
def _branch_kernel(x_ref, p_ref, w_ref, sc_ref, bi_ref, o_ref, pacc_ref):
    cc = pl.program_id(1)
    hh = pl.program_id(2)
    nc = pl.num_programs(1)
    nh = pl.num_programs(2)
    _, th, W, tc = x_ref.shape

    @pl.when(jnp.logical_and(cc == 0, hh == 0))
    def _init_out():
        o_ref[0] = jnp.zeros(o_ref.shape[1:], o_ref.dtype)

    @pl.when(hh == 0)
    def _init_pool():
        pacc_ref[...] = jnp.zeros(pacc_ref.shape, pacc_ref.dtype)

    # pooling for all 4 scales at once: one MXU matmul per row-tile (bf16, f32 acc)
    xflat = x_ref[0].reshape(th * W, tc)                       # bf16
    pacc_ref[...] += jnp.dot(p_ref[...], xflat,
                             preferred_element_type=jnp.float32)

    @pl.when(hh == nh - 1)
    def _conv1x1():
        pooled_bf = pacc_ref[...].astype(jnp.bfloat16)         # (50, tc)
        parts = []
        for b in range(4):
            r0, r1 = _ZROWS[b]
            parts.append(jnp.dot(pooled_bf[r0:r1, :], w_ref[b],
                                 preferred_element_type=jnp.float32))
        o_ref[0] = o_ref[0] + jnp.concatenate(parts, axis=0)

    @pl.when(jnp.logical_and(cc == nc - 1, hh == nh - 1))
    def _bn_relu():
        o_ref[0] = jnp.maximum(o_ref[0] * sc_ref[...] + bi_ref[...], 0.0)


def _psp_branches(x_bf, p_all_bf, w_all_bf, scale_all, bias_all, *, tc, th, vmem_limit):
    N, H, W, C = x_bf.shape
    D = w_all_bf.shape[2]
    nc = C // tc
    nh = H // th
    return pl.pallas_call(
        _branch_kernel,
        out_shape=jax.ShapeDtypeStruct((N, _ZTOT, D), jnp.float32),
        grid=(N, nc, nh),
        in_specs=[
            pl.BlockSpec((1, th, W, tc), lambda n, c, h: (n, h, 0, c)),
            pl.BlockSpec((_ZTOT, th * W), lambda n, c, h: (0, h)),
            pl.BlockSpec((4, tc, D), lambda n, c, h: (0, c, 0)),
            pl.BlockSpec((_ZTOT, D), lambda n, c, h: (0, 0)),
            pl.BlockSpec((_ZTOT, D), lambda n, c, h: (0, 0)),
        ],
        out_specs=pl.BlockSpec((1, _ZTOT, D), lambda n, c, h: (n, 0, 0)),
        scratch_shapes=[pltpu.VMEM((_ZTOT, tc), jnp.float32)],
        compiler_params=pltpu.CompilerParams(
            dimension_semantics=("parallel", "arbitrary", "arbitrary"),
            vmem_limit_bytes=vmem_limit),
    )(x_bf, p_all_bf, w_all_bf, scale_all, bias_all)


# ----------------------------------------------------------------------------
# Kernel 2: fusion bottleneck = 3x3 conv (pad=1) over [x, up1..up4] -> BN -> ReLU
#           Grid (N, H-row-tiles, C-tiles).  Neither xcat nor xpad exist in HBM.
# ----------------------------------------------------------------------------
def _fusion_kernel(xm_ref, xt_ref, xb_ref, wxc_ref, uw_ref, yh_ref,
                   sc_ref, bi_ref, o_ref, acc_ref):
    th, W, D = o_ref.shape[1], o_ref.shape[2], o_ref.shape[3]
    tc = xm_ref.shape[3]
    hh = pl.program_id(1)
    cc = pl.program_id(2)
    nh = pl.num_programs(1)
    nc = pl.num_programs(2)

    @pl.when(cc == 0)
    def _init():
        acc_ref[...] = jnp.zeros(acc_ref.shape, acc_ref.dtype)

    # ---- x half of the 3x3 conv for this C-tile (bf16 MXU operands, f32 acc) ----
    xm = xm_ref[0]                                            # (th, W, tc) bf16
    top_row = xt_ref[0, 0]
    bot_row = xb_ref[0, 0]
    top = jnp.where(hh > 0, top_row, jnp.zeros_like(top_row))          # zero at image top
    bot = jnp.where(hh < nh - 1, bot_row, jnp.zeros_like(bot_row))     # zero at image bottom
    xext = jnp.concatenate([top[None], xm, bot[None]], axis=0)         # (th+2, W, tc)

    # 3 dy-major matmuls against (tc, 3D)-packed weights -> only 3 accumulator
    # read-modify-writes per C-step (was 9).  wxc_ref is either the full
    # resident (3, C, 3D) block (sliced with pl.ds) or a per-C-tile block;
    # the choice is static (made in the wrapper from the VMEM budget).
    s = None
    for dy in range(3):
        if wxc_ref.shape[1] == tc:
            w_dy = wxc_ref[dy]                                # (tc, 3D) bf16
        else:
            c0 = pl.multiple_of(cc * tc, tc)
            w_dy = wxc_ref[dy, pl.ds(c0, tc), :]              # resident weights, C-slice
        rows = xext[dy:dy + th].reshape(th * W, tc)
        part = jnp.dot(rows, w_dy, preferred_element_type=jnp.float32)
        s = part if s is None else s + part                   # (th*W, 3D) f32

    for dx in range(3):
        acc_ref[dx] += s[:, dx * D:(dx + 1) * D].reshape(th, W, D)

    # ---- finalize: deferred dx shift + pyramid contribution + BN + ReLU ----
    @pl.when(cc == nc - 1)
    def _finalize():
        a0 = acc_ref[0]
        a1 = acc_ref[1]
        a2 = acc_ref[2]
        out = a1
        if W > 1:
            zero_col = jnp.zeros((th, 1, D), jnp.float32)
            out = out + jnp.concatenate([zero_col, a0[:, :W - 1, :]], axis=1)
            out = out + jnp.concatenate([a2[:, 1:, :], zero_col], axis=1)
        # TODO(synk): the two column shifts could use pltpu.roll (XLU) + an iota
        # mask; kept as concatenate for lowering portability (finalize-only cost).

        # Pyramid branches: W-direction separable upsample of the conv-folded,
        # H-upsampled yh tile.  All D^2 conv work was pre-folded in the wrapper,
        # so this is th tiny (W, 36) x (36, D) matmuls, entirely in VMEM.
        uw = uw_ref[...]                                      # (W, 36) f32
        rows = [jnp.dot(uw, yh_ref[0, hl],
                        preferred_element_type=jnp.float32)[None]
                for hl in range(th)]
        out = out + jnp.concatenate(rows, axis=0)             # (th, W, D)

        out = jnp.maximum(out * sc_ref[...] + bi_ref[...], 0.0)   # folded BN + ReLU
        o_ref[0] = out.astype(o_ref.dtype)


def _psp_fusion(x_bf, yh, wxc_bf, uw3, fsc, fbi, *, th, tc, wx_resident, vmem_limit):
    N, H, W, C = x_bf.shape
    D = fsc.shape[1]
    nh = H // th
    nc = C // tc

    if wx_resident:
        # full weights with a constant index_map: fetched once, never re-streamed
        # per (n, h).  (On v7x-sized budgets the wrapper falls back to streaming;
        # pipeline_mode=pl.Buffered(1) would let the resident form fit there too.)
        wx_spec = pl.BlockSpec((3, C, 3 * D), lambda n, h, c: (0, 0, 0))
    else:
        wx_spec = pl.BlockSpec((3, tc, 3 * D), lambda n, h, c: (0, c, 0))

    return pl.pallas_call(
        _fusion_kernel,
        out_shape=jax.ShapeDtypeStruct((N, H, W, D), jnp.float32),
        grid=(N, nh, nc),
        in_specs=[
            pl.BlockSpec((1, th, W, tc), lambda n, h, c: (n, h, 0, c)),
            pl.BlockSpec((1, 1, W, tc),
                         lambda n, h, c: (n, jnp.maximum(h * th - 1, 0), 0, c)),
            pl.BlockSpec((1, 1, W, tc),
                         lambda n, h, c: (n, jnp.minimum(h * th + th, H - 1), 0, c)),
            wx_spec,
            pl.BlockSpec((W, _P3), lambda n, h, c: (0, 0)),
            pl.BlockSpec((1, th, _P3, D), lambda n, h, c: (n, h, 0, 0)),
            pl.BlockSpec((1, D), lambda n, h, c: (0, 0)),
            pl.BlockSpec((1, D), lambda n, h, c: (0, 0)),
        ],
        out_specs=pl.BlockSpec((1, th, W, D), lambda n, h, c: (n, h, 0, 0)),
        scratch_shapes=[pltpu.VMEM((3, th, W, D), jnp.float32)],
        compiler_params=pltpu.CompilerParams(
            dimension_semantics=("parallel", "parallel", "arbitrary"),
            vmem_limit_bytes=vmem_limit),
    )(x_bf, x_bf, x_bf, wxc_bf, uw3, yh, fsc, fbi)


# ----------------------------------------------------------------------------
# Forward pass (Pallas kernels + thin JAX glue)
# ----------------------------------------------------------------------------
def psp_head_forward_nhwc(params, x_nhwc):
    N, H, W, C = x_nhwc.shape
    D = C // 4
    vmem_limit = _vmem_limit_bytes()
    tc = _pick_c_tile(C)
    th = _pick_h_tile(H, vmem_limit)

    # x is only ever an MXU operand -> bf16 end-to-end (halves HBM + VMEM traffic)
    x_bf = x_nhwc.astype(jnp.bfloat16)

    # trace-time constant matrices
    p_all = jnp.asarray(_build_pool_matrix(H, W), jnp.bfloat16)               # (50, H*W)
    uw3 = jnp.asarray(np.concatenate([_shift3(_bilinear_matrix(k, W))
                                      for k in _BINS], axis=1), jnp.float32)  # (W, 36)

    # weights
    w_all_bf = params["branch_w"].astype(jnp.bfloat16)
    scale_all, bias_all = _expand_branch_bn(params, D)
    wxc_bf = _pack_fusion_x_weight(params["fusion_w"], C, D)                  # (3, C, 3D)
    fsc = params["fusion_scale"].reshape(1, D)
    fbi = params["fusion_bias"].reshape(1, D)

    # Kernel 1: pyramid pool + 1x1 conv + BN + ReLU -> z (N, 50, D)
    z = _psp_branches(x_bf, p_all, w_all_bf, scale_all, bias_all,
                      tc=tc, th=th, vmem_limit=vmem_limit)

    # Fold the 3x3 fusion conv's branch weights into z, pre-upsample along H.
    yh = _fold_branch_conv(z, params["fusion_w"], C, D, H)                    # (N, H, 36, D)

    # Keep the packed 3x3 x-weights resident in VMEM when the (double-buffered)
    # block fits comfortably in this generation's budget.
    wx_resident = (2 * (3 * C * 3 * D * 2)) <= (vmem_limit // 2)

    out = _psp_fusion(x_bf, yh, wxc_bf, uw3, fsc, fbi,
                      th=th, tc=tc, wx_resident=wx_resident, vmem_limit=vmem_limit)
    # TODO(synk): Dropout2d(0.1) is identity in eval mode; train-mode channel
    # dropout not implemented.
    # Note: the demo D = C//4 = 2 gives lane-sparse stores; real PSP sizes
    # (D a multiple of 128) are lane-dense as recommended.
    return out                                                                 # NHWC, f32


def psp_head_forward(params, x_nchw):
    # NCHW wrapper (PyTorch layout).  NHWC pipelines should call
    # psp_head_forward_nhwc directly and skip both transposes (each is a full
    # HBM round trip of x / out outside the pipelined kernels).
    x_nhwc = jnp.transpose(x_nchw, (0, 2, 3, 1))
    out = psp_head_forward_nhwc(params, x_nhwc)
    return jnp.transpose(out, (0, 3, 1, 2))


# ----------------------------------------------------------------------------
# Pure-JAX reference (straightforward pool/upsample/conv formulation; same
# bf16-operand policy for x / pooling / 1x1 & x-half conv weights)
# ----------------------------------------------------------------------------
def psp_head_reference(params, x_nchw):
    N, C, H, W = x_nchw.shape
    D = C // 4
    x = jnp.transpose(x_nchw, (0, 2, 3, 1)).astype(jnp.float32)
    x_bf = x.astype(jnp.bfloat16)

    # branches -> z (post BN+ReLU)
    p_all = jnp.asarray(_build_pool_matrix(H, W), jnp.bfloat16)
    pooled = jnp.einsum('pq,nqc->npc', p_all, x_bf.reshape(N, H * W, C),
                        preferred_element_type=jnp.float32)
    pooled_bf = pooled.astype(jnp.bfloat16)
    w_all_bf = params["branch_w"].astype(jnp.bfloat16)
    z_parts = []
    for b in range(4):
        r0, r1 = _ZROWS[b]
        z_parts.append(jnp.einsum('npc,cd->npd', pooled_bf[:, r0:r1, :],
                                  w_all_bf[b], preferred_element_type=jnp.float32))
    z = jnp.concatenate(z_parts, axis=1)
    scale_all, bias_all = _expand_branch_bn(params, D)
    z = jnp.maximum(z * scale_all[None] + bias_all[None], 0.0)

    # fusion: x part (bf16 operands, f32 accumulate)
    wx_bf = params["fusion_w"][:, :C, :].astype(jnp.bfloat16)
    acc = jnp.zeros((N, H, W, D), jnp.float32)
    xpad_bf = jnp.pad(x_bf, ((0, 0), (1, 1), (1, 1), (0, 0)))
    for dy in range(3):
        for dx in range(3):
            acc = acc + jnp.einsum('nhwc,cd->nhwd',
                                   xpad_bf[:, dy:dy + H, dx:dx + W, :],
                                   wx_bf[dy * 3 + dx],
                                   preferred_element_type=jnp.float32)

    # fusion: branch part (upsample then 3x3 conv, f32)
    wb = params["fusion_w"][:, C:, :].reshape(9, 4, D, D)
    for b in range(4):
        k = _BINS[b]
        r0, r1 = _ZROWS[b]
        uh = jnp.asarray(_bilinear_matrix(k, H), jnp.float32)     # (H, k)
        uw = jnp.asarray(_bilinear_matrix(k, W), jnp.float32)     # (W, k)
        zb = z[:, r0:r1, :].reshape(N, k, k, D)
        up = jnp.einsum('hi,wj,nijd->nhwd', uh, uw, zb)           # (N, H, W, D)
        up_pad = jnp.pad(up, ((0, 0), (1, 1), (1, 1), (0, 0)))
        for dy in range(3):
            for dx in range(3):
                acc = acc + jnp.einsum('nhwd,de->nhwe',
                                       up_pad[:, dy:dy + H, dx:dx + W, :],
                                       wb[dy * 3 + dx, b],
                                       preferred_element_type=jnp.float32)

    out = jnp.maximum(acc * params["fusion_scale"] + params["fusion_bias"], 0.0)
    return jnp.transpose(out, (0, 3, 1, 2))


if __name__ == "__main__":
    key = jax.random.PRNGKey(0)
    k_param, k_x = jax.random.split(key)
    in_channels = 8                    # must be divisible by 4 (demo; real PSP uses 2048)
    N, H, W = 2, 16, 16
    params = init_psp_head_params(k_param, in_channels)
    x = jax.random.normal(k_x, (N, in_channels, H, W), jnp.float32)

    fwd = jax.jit(psp_head_forward)
    out = jax.block_until_ready(fwd(params, x))
    ref = jax.block_until_ready(psp_head_reference(params, x))

    assert out.shape == (N, in_channels // 4, H, W), out.shape
    err = float(jnp.max(jnp.abs(out - ref)))
    assert err < 5e-2, f"max abs err {err}"
    print("KERNEL_OK")
</pallas_src>

<mosaic_0001>
module attributes {stable_mosaic.version = 11 : i64} {
  func.func @_branch_kernel(%arg0: i32, %arg1: i32, %arg2: i32, %arg3: memref<1x8x16x8xbf16, #tpu.memory_space<vmem>>, %arg4: memref<50x128xbf16, #tpu.memory_space<vmem>>, %arg5: memref<4x8x2xbf16, #tpu.memory_space<vmem>>, %arg6: memref<50x2xf32, #tpu.memory_space<vmem>>, %arg7: memref<50x2xf32, #tpu.memory_space<vmem>>, %arg8: memref<1x50x2xf32, #tpu.memory_space<vmem>>, %arg9: memref<50x8xf32, #tpu.memory_space<vmem>>) attributes {dimension_semantics = [#tpu.dimension_semantics<parallel>, #tpu.dimension_semantics<arbitrary>, #tpu.dimension_semantics<arbitrary>], iteration_bounds = array<i64: 2, 1, 2>, scalar_prefetch = 0 : i64, scratch_operands = 1 : i64, tpu.core_type = #tpu.core_type<tc>, window_params = [{transform_indices = @transform_0, window_bounds = array<i64: 1, 8, 16, 8>}, {transform_indices = @transform_1, window_bounds = array<i64: 50, 128>}, {transform_indices = @transform_2, window_bounds = array<i64: 4, 8, 2>}, {pipeline_mode = #tpu.pipeline_mode<synchronous>, transform_indices = @transform_3, window_bounds = array<i64: 50, 2>}, {pipeline_mode = #tpu.pipeline_mode<synchronous>, transform_indices = @transform_4, window_bounds = array<i64: 50, 2>}, {transform_indices = @transform_5, window_bounds = array<i64: 1, 50, 2>}]} {
    %c0_i32 = arith.constant 0 : i32
    %0 = arith.cmpi eq, %arg1, %c0_i32 : i32
    %c0_i32_0 = arith.constant 0 : i32
    %1 = arith.cmpi eq, %arg2, %c0_i32_0 : i32
    %2 = arith.andi %0, %1 : i1
    %3 = arith.extui %2 : i1 to i32
    %c0_i32_1 = arith.constant 0 : i32
    %4 = arith.cmpi ne, %3, %c0_i32_1 : i32
    scf.if %4 {
      %cst_17 = arith.constant 0.000000e+00 : f32
      %24 = vector.broadcast %cst_17 : f32 to vector<50x2xf32>
      %c0_18 = arith.constant 0 : index
      %c0_19 = arith.constant 0 : index
      %c0_20 = arith.constant 0 : index
      %25 = vector.load %arg8[%c0_18, %c0_19, %c0_20] : memref<1x50x2xf32, #tpu.memory_space<vmem>>, vector<1x50x2xf32>
      %26 = vector.shape_cast %25 : vector<1x50x2xf32> to vector<50x2xf32>
      %27 = vector.shape_cast %24 : vector<50x2xf32> to vector<1x50x2xf32>
      tpu.vector_store %arg8[%c0_18, %c0_19, %c0_20], %27 {strides = array<i32>} : memref<1x50x2xf32, #tpu.memory_space<vmem>>, vector<1x50x2xf32>,
    } else {
    }
    %c0_i32_2 = arith.constant 0 : i32
    %5 = arith.cmpi eq, %arg2, %c0_i32_2 : i32
    %6 = arith.extui %5 : i1 to i32
    %c0_i32_3 = arith.constant 0 : i32
    %7 = arith.cmpi ne, %6, %c0_i32_3 : i32
    scf.if %7 {
      %cst_17 = arith.constant 0.000000e+00 : f32
      %24 = vector.broadcast %cst_17 : f32 to vector<50x8xf32>
      %c0_18 = arith.constant 0 : index
      %c0_19 = arith.constant 0 : index
      %25 = vector.load %arg9[%c0_18, %c0_19] : memref<50x8xf32, #tpu.memory_space<vmem>>, vector<50x8xf32>
      tpu.vector_store %arg9[%c0_18, %c0_19], %24 {strides = array<i32>} : memref<50x8xf32, #tpu.memory_space<vmem>>, vector<50x8xf32>,
    } else {
    }
    %c0 = arith.constant 0 : index
    %c0_4 = arith.constant 0 : index
    %c0_5 = arith.constant 0 : index
    %c0_6 = arith.constant 0 : index
    %8 = vector.load %arg3[%c0, %c0_4, %c0_5, %c0_6] : memref<1x8x16x8xbf16, #tpu.memory_space<vmem>>, vector<1x8x16x8xbf16>
    %9 = vector.shape_cast %8 : vector<1x8x16x8xbf16> to vector<8x16x8xbf16>
    %10 = vector.shape_cast %9 : vector<8x16x8xbf16> to vector<128x8xbf16>
    %c0_7 = arith.constant 0 : index
    %c0_8 = arith.constant 0 : index
    %11 = vector.load %arg9[%c0_7, %c0_8] : memref<50x8xf32, #tpu.memory_space<vmem>>, vector<50x8xf32>
    %c0_9 = arith.constant 0 : index
    %c0_10 = arith.constant 0 : index
    %12 = vector.load %arg4[%c0_9, %c0_10] : memref<50x128xbf16, #tpu.memory_space<vmem>>, vector<50x128xbf16>
    %cst = arith.constant dense<0.000000e+00> : vector<50x8xf32>
    %13 = tpu.matmul %12, %10, %cst {dimension_numbers = #tpu.dot_dimension_numbers<[1], [0], [0], [1], [0, 0, 1, 1], [], []>} : vector<50x128xbf16>, vector<128x8xbf16>, vector<50x8xf32> -> vector<50x8xf32>
    %14 = arith.addf %11, %13 : vector<50x8xf32>
    %c0_11 = arith.constant 0 : index
    %c0_12 = arith.constant 0 : index
    %15 = vector.load %arg9[%c0_11, %c0_12] : memref<50x8xf32, #tpu.memory_space<vmem>>, vector<50x8xf32>
    tpu.vector_store %arg9[%c0_11, %c0_12], %14 {strides = array<i32>} : memref<50x8xf32, #tpu.memory_space<vmem>>, vector<50x8xf32>,
    %c1_i32 = arith.constant 1 : i32
    %16 = arith.cmpi eq, %arg2, %c1_i32 : i32
    %17 = arith.extui %16 : i1 to i32
    %c0_i32_13 = arith.constant 0 : i32
    %18 = arith.cmpi ne, %17, %c0_i32_13 : i32
    scf.if %18 {
      %c0_17 = arith.constant 0 : index
      %c0_18 = arith.constant 0 : index
      %24 = vector.load %arg9[%c0_17, %c0_18] : memref<50x8xf32, #tpu.memory_space<vmem>>, vector<50x8xf32>
      %25 = arith.truncf %24 : vector<50x8xf32> to vector<50x8xbf16>
      %26 = vector.extract_strided_slice %25 {offsets = [0, 0], sizes = [1, 8], strides = [1, 1]} : vector<50x8xbf16> to vector<1x8xbf16>
      %c0_19 = arith.constant 0 : index
      %c0_20 = arith.constant 0 : index
      %c0_21 = arith.constant 0 : index
      %27 = vector.load %arg5[%c0_19, %c0_20, %c0_21] : memref<4x8x2xbf16, #tpu.memory_space<vmem>>, vector<1x8x2xbf16>
      %28 = vector.shape_cast %27 : vector<1x8x2xbf16> to vector<8x2xbf16>
      %cst_22 = arith.constant dense<0.000000e+00> : vector<1x2xf32>
      %29 = tpu.matmul %26, %28, %cst_22 {dimension_numbers = #tpu.dot_dimension_numbers<[1], [0], [0], [1], [0, 0, 1, 1], [], []>} : vector<1x8xbf16>, vector<8x2xbf16>, vector<1x2xf32> -> vector<1x2xf32>
      %30 = vector.extract_strided_slice %25 {offsets = [1, 0], sizes = [4, 8], strides = [1, 1]} : vector<50x8xbf16> to vector<4x8xbf16>
      %c1 = arith.constant 1 : index
      %c0_23 = arith.constant 0 : index
      %c0_24 = arith.constant 0 : index
      %31 = vector.load %arg5[%c1, %c0_23, %c0_24] : memref<4x8x2xbf16, #tpu.memory_space<vmem>>, vector<1x8x2xbf16>
      %32 = vector.shape_cast %31 : vector<1x8x2xbf16> to vector<8x2xbf16>
      %cst_25 = arith.constant dense<0.000000e+00> : vector<4x2xf32>
      %33 = tpu.matmul %30, %32, %cst_25 {dimension_numbers = #tpu.dot_dimension_numbers<[1], [0], [0], [1], [0, 0, 1, 1], [], []>} : vector<4x8xbf16>, vector<8x2xbf16>, vector<4x2xf32> -> vector<4x2xf32>
      %34 = vector.extract_strided_slice %25 {offsets = [5, 0], sizes = [9, 8], strides = [1, 1]} : vector<50x8xbf16> to vector<9x8xbf16>
      %c2 = arith.constant 2 : index
      %c0_26 = arith.constant 0 : index
      %c0_27 = arith.constant 0 : index
      %35 = vector.load %arg5[%c2, %c0_26, %c0_27] : memref<4x8x2xbf16, #tpu.memory_space<vmem>>, vector<1x8x2xbf16>
      %36 = vector.shape_cast %35 : vector<1x8x2xbf16> to vector<8x2xbf16>
      %cst_28 = arith.constant dense<0.000000e+00> : vector<9x2xf32>
      %37 = tpu.matmul %34, %36, %cst_28 {dimension_numbers = #tpu.dot_dimension_numbers<[1], [0], [0], [1], [0, 0, 1, 1], [], []>} : vector<9x8xbf16>, vector<8x2xbf16>, vector<9x2xf32> -> vector<9x2xf32>
      %38 = vector.extract_strided_slice %25 {offsets = [14, 0], sizes = [36, 8], strides = [1, 1]} : vector<50x8xbf16> to vector<36x8xbf16>
      %c3 = arith.constant 3 : index
      %c0_29 = arith.constant 0 : index
      %c0_30 = arith.constant 0 : index
      %39 = vector.load %arg5[%c3, %c0_29, %c0_30] : memref<4x8x2xbf16, #tpu.memory_space<vmem>>, vector<1x8x2xbf16>
      %40 = vector.shape_cast %39 : vector<1x8x2xbf16> to vector<8x2xbf16>
      %cst_31 = arith.constant dense<0.000000e+00> : vector<36x2xf32>
      %41 = tpu.matmul %38, %40, %cst_31 {dimension_numbers = #tpu.dot_dimension_numbers<[1], [0], [0], [1], [0, 0, 1, 1], [], []>} : vector<36x8xbf16>, vector<8x2xbf16>, vector<36x2xf32> -> vector<36x2xf32>
      %c0_32 = arith.constant 0 : index
      %c0_33 = arith.constant 0 : index
      %c0_34 = arith.constant 0 : index
      %42 = vector.load %arg8[%c0_32, %c0_33, %c0_34] : memref<1x50x2xf32, #tpu.memory_space<vmem>>, vector<1x50x2xf32>
      %43 = vector.shape_cast %42 : vector<1x50x2xf32> to vector<50x2xf32>
      %44 = tpu.concatenate %29, %33, %37, %41 in 0 : vector<1x2xf32>, vector<4x2xf32>, vector<9x2xf32>, vector<36x2xf32> -> vector<50x2xf32>
      %45 = arith.addf %43, %44 : vector<50x2xf32>
      %c0_35 = arith.constant 0 : index
      %c0_36 = arith.constant 0 : index
      %c0_37 = arith.constant 0 : index
      %46 = vector.load %arg8[%c0_35, %c0_36, %c0_37] : memref<1x50x2xf32, #tpu.memory_space<vmem>>, vector<1x50x2xf32>
      %47 = vector.shape_cast %46 : vector<1x50x2xf32> to vector<50x2xf32>
      %48 = vector.shape_cast %45 : vector<50x2xf32> to vector<1x50x2xf32>
      tpu.vector_store %arg8[%c0_35, %c0_36, %c0_37], %48 {strides = array<i32>} : memref<1x50x2xf32, #tpu.memory_space<vmem>>, vector<1x50x2xf32>,
    } else {
    }
    %c0_i32_14 = arith.constant 0 : i32
    %19 = arith.cmpi eq, %arg1, %c0_i32_14 : i32
    %c1_i32_15 = arith.constant 1 : i32
    %20 = arith.cmpi eq, %arg2, %c1_i32_15 : i32
    %21 = arith.andi %19, %20 : i1
    %22 = arith.extui %21 : i1 to i32
    %c0_i32_16 = arith.constant 0 : i32
    %23 = arith.cmpi ne, %22, %c0_i32_16 : i32
    scf.if %23 {
      %c0_17 = arith.constant 0 : index
      %c0_18 = arith.constant 0 : index
      %c0_19 = arith.constant 0 : index
      %24 = vector.load %arg8[%c0_17, %c0_18, %c0_19] : memref<1x50x2xf32, #tpu.memory_space<vmem>>, vector<1x50x2xf32>
      %25 = vector.shape_cast %24 : vector<1x50x2xf32> to vector<50x2xf32>
      %c0_20 = arith.constant 0 : index
      %c0_21 = arith.constant 0 : index
      %26 = vector.load %arg6[%c0_20, %c0_21] : memref<50x2xf32, #tpu.memory_space<vmem>>, vector<50x2xf32>
      %27 = arith.mulf %25, %26 : vector<50x2xf32>
      %c0_22 = arith.constant 0 : index
      %c0_23 = arith.constant 0 : index
      %28 = vector.load %arg7[%c0_22, %c0_23] : memref<50x2xf32, #tpu.memory_space<vmem>>, vector<50x2xf32>
      %29 = arith.addf %27, %28 : vector<50x2xf32>
      %cst_24 = arith.constant 0.000000e+00 : f32
      %30 = vector.broadcast %cst_24 : f32 to vector<50x2xf32>
      %31 = arith.maximumf %29, %30 : vector<50x2xf32>
      %c0_25 = arith.constant 0 : index
      %c0_26 = arith.constant 0 : index
      %c0_27 = arith.constant 0 : index
      %32 = vector.load %arg8[%c0_25, %c0_26, %c0_27] : memref<1x50x2xf32, #tpu.memory_space<vmem>>, vector<1x50x2xf32>
      %33 = vector.shape_cast %32 : vector<1x50x2xf32> to vector<50x2xf32>
      %34 = vector.shape_cast %31 : vector<50x2xf32> to vector<1x50x2xf32>
      tpu.vector_store %arg8[%c0_25, %c0_26, %c0_27], %34 {strides = array<i32>} : memref<1x50x2xf32, #tpu.memory_space<vmem>>, vector<1x50x2xf32>,
    } else {
    }
    return
  }
  func.func @transform_0(%arg0: i32, %arg1: i32, %arg2: i32) -> (i32, i32, i32, i32) {
    %c0_i32 = arith.constant 0 : i32
    %c0_i32_0 = arith.constant 0 : i32
    return %arg0, %arg2, %c0_i32, %arg1 : i32, i32, i32, i32
  }
  func.func @transform_1(%arg0: i32, %arg1: i32, %arg2: i32) -> (i32, i32) {
    %c0_i32 = arith.constant 0 : i32
    %c0_i32_0 = arith.constant 0 : i32
    return %c0_i32, %arg2 : i32, i32
  }
  func.func @transform_2(%arg0: i32, %arg1: i32, %arg2: i32) -> (i32, i32, i32) {
    %c0_i32 = arith.constant 0 : i32
    %c0_i32_0 = arith.constant 0 : i32
    %c0_i32_1 = arith.constant 0 : i32
    return %c0_i32, %arg1, %c0_i32_0 : i32, i32, i32
  }
  func.func @transform_3(%arg0: i32, %arg1: i32, %arg2: i32) -> (i32, i32) {
    %c0_i32 = arith.constant 0 : i32
    %c0_i32_0 = arith.constant 0 : i32
    %c0_i32_1 = arith.constant 0 : i32
    return %c0_i32, %c0_i32_0 : i32, i32
  }
  func.func @transform_4(%arg0: i32, %arg1: i32, %arg2: i32) -> (i32, i32) {
    %c0_i32 = arith.constant 0 : i32
    %c0_i32_0 = arith.constant 0 : i32
    %c0_i32_1 = arith.constant 0 : i32
    return %c0_i32, %c0_i32_0 : i32, i32
  }
  func.func @transform_5(%arg0: i32, %arg1: i32, %arg2: i32) -> (i32, i32, i32) {
    %c0_i32 = arith.constant 0 : i32
    %c0_i32_0 = arith.constant 0 : i32
    %c0_i32_1 = arith.constant 0 : i32
    return %arg0, %c0_i32, %c0_i32_0 : i32, i32, i32
  }
}

module attributes {stable_mosaic.version = 11 : i64} {
  func.func @_fusion_kernel(%arg0: i32, %arg1: i32, %arg2: i32, %arg3: memref<1x8x16x8xbf16, #tpu.memory_space<vmem>>, %arg4: memref<1x1x16x8xbf16, #tpu.memory_space<vmem>>, %arg5: memref<1x1x16x8xbf16, #tpu.memory_space<vmem>>, %arg6: memref<3x8x6xbf16, #tpu.memory_space<vmem>>, %arg7: memref<16x36xf32, #tpu.memory_space<vmem>>, %arg8: memref<1x8x36x2xf32, #tpu.memory_space<vmem>>, %arg9: memref<1x2xf32, #tpu.memory_space<vmem>>, %arg10: memref<1x2xf32, #tpu.memory_space<vmem>>, %arg11: memref<1x8x16x2xf32, #tpu.memory_space<vmem>>, %arg12: memref<3x8x16x2xf32, #tpu.memory_space<vmem>>) attributes {dimension_semantics = [#tpu.dimension_semantics<parallel>, #tpu.dimension_semantics<parallel>, #tpu.dimension_semantics<arbitrary>], iteration_bounds = array<i64: 2, 2, 1>, scalar_prefetch = 0 : i64, scratch_operands = 1 : i64, tpu.core_type = #tpu.core_type<tc>, window_params = [{transform_indices = @transform_0, window_bounds = array<i64: 1, 8, 16, 8>}, {transform_indices = @transform_1, window_bounds = array<i64: 1, 1, 16, 8>}, {transform_indices = @transform_2, window_bounds = array<i64: 1, 1, 16, 8>}, {pipeline_mode = #tpu.pipeline_mode<synchronous>, transform_indices = @transform_3, window_bounds = array<i64: 3, 8, 6>}, {pipeline_mode = #tpu.pipeline_mode<synchronous>, transform_indices = @transform_4, window_bounds = array<i64: 16, 36>}, {transform_indices = @transform_5, window_bounds = array<i64: 1, 8, 36, 2>}, {pipeline_mode = #tpu.pipeline_mode<synchronous>, transform_indices = @transform_6, window_bounds = array<i64: 1, 2>}, {pipeline_mode = #tpu.pipeline_mode<synchronous>, transform_indices = @transform_7, window_bounds = array<i64: 1, 2>}, {transform_indices = @transform_8, window_bounds = array<i64: 1, 8, 16, 2>}]} {
    %c0_i32 = arith.constant 0 : i32
    %0 = arith.cmpi eq, %arg2, %c0_i32 : i32
    %1 = arith.extui %0 : i1 to i32
    %c0_i32_0 = arith.constant 0 : i32
    %2 = arith.cmpi ne, %1, %c0_i32_0 : i32
    scf.if %2 {
      %cst_50 = arith.constant 0.000000e+00 : f32
      %62 = vector.broadcast %cst_50 : f32 to vector<3x8x16x2xf32>
      %c0_51 = arith.constant 0 : index
      %c0_52 = arith.constant 0 : index
      %c0_53 = arith.constant 0 : index
      %c0_54 = arith.constant 0 : index
      %63 = vector.load %arg12[%c0_51, %c0_52, %c0_53, %c0_54] : memref<3x8x16x2xf32, #tpu.memory_space<vmem>>, vector<3x8x16x2xf32>
      tpu.vector_store %arg12[%c0_51, %c0_52, %c0_53, %c0_54], %62 {strides = array<i32>} : memref<3x8x16x2xf32, #tpu.memory_space<vmem>>, vector<3x8x16x2xf32>,
    } else {
    }
    %c0 = arith.constant 0 : index
    %c0_1 = arith.constant 0 : index
    %c0_2 = arith.constant 0 : index
    %c0_3 = arith.constant 0 : index
    %3 = vector.load %arg3[%c0, %c0_1, %c0_2, %c0_3] : memref<1x8x16x8xbf16, #tpu.memory_space<vmem>>, vector<1x8x16x8xbf16>
    %4 = vector.shape_cast %3 : vector<1x8x16x8xbf16> to vector<8x16x8xbf16>
    %c0_4 = arith.constant 0 : index
    %c0_5 = arith.constant 0 : index
    %c0_6 = arith.constant 0 : index
    %c0_7 = arith.constant 0 : index
    %5 = vector.load %arg4[%c0_4, %c0_5, %c0_6, %c0_7] : memref<1x1x16x8xbf16, #tpu.memory_space<vmem>>, vector<1x1x16x8xbf16>
    %6 = vector.shape_cast %5 : vector<1x1x16x8xbf16> to vector<16x8xbf16>
    %c0_8 = arith.constant 0 : index
    %c0_9 = arith.constant 0 : index
    %c0_10 = arith.constant 0 : index
    %c0_11 = arith.constant 0 : index
    %7 = vector.load %arg5[%c0_8, %c0_9, %c0_10, %c0_11] : memref<1x1x16x8xbf16, #tpu.memory_space<vmem>>, vector<1x1x16x8xbf16>
    %8 = vector.shape_cast %7 : vector<1x1x16x8xbf16> to vector<16x8xbf16>
    %c0_i32_12 = arith.constant 0 : i32
    %9 = arith.cmpi sgt, %arg1, %c0_i32_12 : i32
    %cst = arith.constant 0.000000e+00 : bf16
    %10 = vector.broadcast %cst : bf16 to vector<16x8xbf16>
    %11 = arith.select %9, %6, %10 : vector<16x8xbf16>
    %c1_i32 = arith.constant 1 : i32
    %12 = arith.cmpi slt, %arg1, %c1_i32 : i32
    %cst_13 = arith.constant 0.000000e+00 : bf16
    %13 = vector.broadcast %cst_13 : bf16 to vector<16x8xbf16>
    %14 = arith.select %12, %8, %13 : vector<16x8xbf16>
    %15 = vector.shape_cast %11 : vector<16x8xbf16> to vector<1x16x8xbf16>
    %16 = vector.shape_cast %14 : vector<16x8xbf16> to vector<1x16x8xbf16>
    %17 = tpu.concatenate %15, %4, %16 in 0 : vector<1x16x8xbf16>, vector<8x16x8xbf16>, vector<1x16x8xbf16> -> vector<10x16x8xbf16>
    %c0_14 = arith.constant 0 : index
    %c0_15 = arith.constant 0 : index
    %c0_16 = arith.constant 0 : index
    %18 = vector.load %arg6[%c0_14, %c0_15, %c0_16] : memref<3x8x6xbf16, #tpu.memory_space<vmem>>, vector<1x8x6xbf16>
    %19 = vector.shape_cast %18 : vector<1x8x6xbf16> to vector<8x6xbf16>
    %20 = vector.extract_strided_slice %17 {offsets = [0, 0, 0], sizes = [8, 16, 8], strides = [1, 1, 1]} : vector<10x16x8xbf16> to vector<8x16x8xbf16>
    %21 = vector.shape_cast %20 : vector<8x16x8xbf16> to vector<128x8xbf16>
    %cst_17 = arith.constant dense<0.000000e+00> : vector<128x6xf32>
    %22 = tpu.matmul %21, %19, %cst_17 {dimension_numbers = #tpu.dot_dimension_numbers<[1], [0], [0], [1], [0, 0, 1, 1], [], []>} : vector<128x8xbf16>, vector<8x6xbf16>, vector<128x6xf32> -> vector<128x6xf32>
    %c1 = arith.constant 1 : index
    %c0_18 = arith.constant 0 : index
    %c0_19 = arith.constant 0 : index
    %23 = vector.load %arg6[%c1, %c0_18, %c0_19] : memref<3x8x6xbf16, #tpu.memory_space<vmem>>, vector<1x8x6xbf16>
    %24 = vector.shape_cast %23 : vector<1x8x6xbf16> to vector<8x6xbf16>
    %25 = vector.extract_strided_slice %17 {offsets = [1, 0, 0], sizes = [8, 16, 8], strides = [1, 1, 1]} : vector<10x16x8xbf16> to vector<8x16x8xbf16>
    %26 = vector.shape_cast %25 : vector<8x16x8xbf16> to vector<128x8xbf16>
    %cst_20 = arith.constant dense<0.000000e+00> : vector<128x6xf32>
    %27 = tpu.matmul %26, %24, %cst_20 {dimension_numbers = #tpu.dot_dimension_numbers<[1], [0], [0], [1], [0, 0, 1, 1], [], []>} : vector<128x8xbf16>, vector<8x6xbf16>, vector<128x6xf32> -> vector<128x6xf32>
    %28 = arith.addf %22, %27 : vector<128x6xf32>
    %c2 = arith.constant 2 : index
    %c0_21 = arith.constant 0 : index
    %c0_22 = arith.constant 0 : index
    %29 = vector.load %arg6[%c2, %c0_21, %c0_22] : memref<3x8x6xbf16, #tpu.memory_space<vmem>>, vector<1x8x6xbf16>
    %30 = vector.shape_cast %29 : vector<1x8x6xbf16> to vector<8x6xbf16>
    %31 = vector.extract_strided_slice %17 {offsets = [2, 0, 0], sizes = [8, 16, 8], strides = [1, 1, 1]} : vector<10x16x8xbf16> to vector<8x16x8xbf16>
    %32 = vector.shape_cast %31 : vector<8x16x8xbf16> to vector<128x8xbf16>
    %cst_23 = arith.constant dense<0.000000e+00> : vector<128x6xf32>
    %33 = tpu.matmul %32, %30, %cst_23 {dimension_numbers = #tpu.dot_dimension_numbers<[1], [0], [0], [1], [0, 0, 1, 1], [], []>} : vector<128x8xbf16>, vector<8x6xbf16>, vector<128x6xf32> -> vector<128x6xf32>
    %34 = arith.addf %28, %33 : vector<128x6xf32>
    %c0_24 = arith.constant 0 : index
    %c0_25 = arith.constant 0 : index
    %c0_26 = arith.constant 0 : index
    %c0_27 = arith.constant 0 : index
    %35 = vector.load %arg12[%c0_24, %c0_25, %c0_26, %c0_27] : memref<3x8x16x2xf32, #tpu.memory_space<vmem>>, vector<1x8x16x2xf32>
    %36 = vector.shape_cast %35 : vector<1x8x16x2xf32> to vector<8x16x2xf32>
    %37 = vector.extract_strided_slice %34 {offsets = [0, 0], sizes = [128, 2], strides = [1, 1]} : vector<128x6xf32> to vector<128x2xf32>
    %38 = vector.shape_cast %37 : vector<128x2xf32> to vector<8x16x2xf32>
    %39 = arith.addf %36, %38 : vector<8x16x2xf32>
    %c0_28 = arith.constant 0 : index
    %c0_29 = arith.constant 0 : index
    %c0_30 = arith.constant 0 : index
    %c0_31 = arith.constant 0 : index
    %40 = vector.load %arg12[%c0_28, %c0_29, %c0_30, %c0_31] : memref<3x8x16x2xf32, #tpu.memory_space<vmem>>, vector<1x8x16x2xf32>
    %41 = vector.shape_cast %40 : vector<1x8x16x2xf32> to vector<8x16x2xf32>
    %42 = vector.shape_cast %39 : vector<8x16x2xf32> to vector<1x8x16x2xf32>
    tpu.vector_store %arg12[%c0_28, %c0_29, %c0_30, %c0_31], %42 {strides = array<i32>} : memref<3x8x16x2xf32, #tpu.memory_space<vmem>>, vector<1x8x16x2xf32>,
    %c1_32 = arith.constant 1 : index
    %c0_33 = arith.constant 0 : index
    %c0_34 = arith.constant 0 : index
    %c0_35 = arith.constant 0 : index
    %43 = vector.load %arg12[%c1_32, %c0_33, %c0_34, %c0_35] : memref<3x8x16x2xf32, #tpu.memory_space<vmem>>, vector<1x8x16x2xf32>
    %44 = vector.shape_cast %43 : vector<1x8x16x2xf32> to vector<8x16x2xf32>
    %45 = vector.extract_strided_slice %34 {offsets = [0, 2], sizes = [128, 2], strides = [1, 1]} : vector<128x6xf32> to vector<128x2xf32>
    %46 = vector.shape_cast %45 : vector<128x2xf32> to vector<8x16x2xf32>
    %47 = arith.addf %44, %46 : vector<8x16x2xf32>
    %c1_36 = arith.constant 1 : index
    %c0_37 = arith.constant 0 : index
    %c0_38 = arith.constant 0 : index
    %c0_39 = arith.constant 0 : index
    %48 = vector.load %arg12[%c1_36, %c0_37, %c0_38, %c0_39] : memref<3x8x16x2xf32, #tpu.memory_space<vmem>>, vector<1x8x16x2xf32>
    %49 = vector.shape_cast %48 : vector<1x8x16x2xf32> to vector<8x16x2xf32>
    %50 = vector.shape_cast %47 : vector<8x16x2xf32> to vector<1x8x16x2xf32>
    tpu.vector_store %arg12[%c1_36, %c0_37, %c0_38, %c0_39], %50 {strides = array<i32>} : memref<3x8x16x2xf32, #tpu.memory_space<vmem>>, vector<1x8x16x2xf32>,
    %c2_40 = arith.constant 2 : index
    %c0_41 = arith.constant 0 : index
    %c0_42 = arith.constant 0 : index
    %c0_43 = arith.constant 0 : index
    %51 = vector.load %arg12[%c2_40, %c0_41, %c0_42, %c0_43] : memref<3x8x16x2xf32, #tpu.memory_space<vmem>>, vector<1x8x16x2xf32>
    %52 = vector.shape_cast %51 : vector<1x8x16x2xf32> to vector<8x16x2xf32>
    %53 = vector.extract_strided_slice %34 {offsets = [0, 4], sizes = [128, 2], strides = [1, 1]} : vector<128x6xf32> to vector<128x2xf32>
    %54 = vector.shape_cast %53 : vector<128x2xf32> to vector<8x16x2xf32>
    %55 = arith.addf %52, %54 : vector<8x16x2xf32>
    %c2_44 = arith.constant 2 : index
    %c0_45 = arith.constant 0 : index
    %c0_46 = arith.constant 0 : index
    %c0_47 = arith.constant 0 : index
    %56 = vector.load %arg12[%c2_44, %c0_45, %c0_46, %c0_47] : memref<3x8x16x2xf32, #tpu.memory_space<vmem>>, vector<1x8x16x2xf32>
    %57 = vector.shape_cast %56 : vector<1x8x16x2xf32> to vector<8x16x2xf32>
    %58 = vector.shape_cast %55 : vector<8x16x2xf32> to vector<1x8x16x2xf32>
    tpu.vector_store %arg12[%c2_44, %c0_45, %c0_46, %c0_47], %58 {strides = array<i32>} : memref<3x8x16x2xf32, #tpu.memory_space<vmem>>, vector<1x8x16x2xf32>,
    %c0_i32_48 = arith.constant 0 : i32
    %59 = arith.cmpi eq, %arg2, %c0_i32_48 : i32
    %60 = arith.extui %59 : i1 to i32
    %c0_i32_49 = arith.constant 0 : i32
    %61 = arith.cmpi ne, %60, %c0_i32_49 : i32
    scf.if %61 {
      %c0_50 = arith.constant 0 : index
      %c0_51 = arith.constant 0 : index
      %c0_52 = arith.constant 0 : index
      %c0_53 = arith.constant 0 : index
      %62 = vector.load %arg12[%c0_50, %c0_51, %c0_52, %c0_53] : memref<3x8x16x2xf32, #tpu.memory_space<vmem>>, vector<1x8x16x2xf32>
      %63 = vector.shape_cast %62 : vector<1x8x16x2xf32> to vector<8x16x2xf32>
      %c1_54 = arith.constant 1 : index
      %c0_55 = arith.constant 0 : index
      %c0_56 = arith.constant 0 : index
      %c0_57 = arith.constant 0 : index
      %64 = vector.load %arg12[%c1_54, %c0_55, %c0_56, %c0_57] : memref<3x8x16x2xf32, #tpu.memory_space<vmem>>, vector<1x8x16x2xf32>
      %65 = vector.shape_cast %64 : vector<1x8x16x2xf32> to vector<8x16x2xf32>
      %c2_58 = arith.constant 2 : index
      %c0_59 = arith.constant 0 : index
      %c0_60 = arith.constant 0 : index
      %c0_61 = arith.constant 0 : index
      %66 = vector.load %arg12[%c2_58, %c0_59, %c0_60, %c0_61] : memref<3x8x16x2xf32, #tpu.memory_space<vmem>>, vector<1x8x16x2xf32>
      %67 = vector.shape_cast %66 : vector<1x8x16x2xf32> to vector<8x16x2xf32>
      %cst_62 = arith.constant 0.000000e+00 : f32
      %68 = vector.broadcast %cst_62 : f32 to vector<8x1x2xf32>
      %69 = vector.extract_strided_slice %63 {offsets = [0, 0, 0], sizes = [8, 15, 2], strides = [1, 1, 1]} : vector<8x16x2xf32> to vector<8x15x2xf32>
      %70 = tpu.concatenate %68, %69 in 1 : vector<8x1x2xf32>, vector<8x15x2xf32> -> vector<8x16x2xf32>
      %71 = arith.addf %65, %70 : vector<8x16x2xf32>
      %72 = vector.extract_strided_slice %67 {offsets = [0, 1, 0], sizes = [8, 15, 2], strides = [1, 1, 1]} : vector<8x16x2xf32> to vector<8x15x2xf32>
      %73 = tpu.concatenate %72, %68 in 1 : vector<8x15x2xf32>, vector<8x1x2xf32> -> vector<8x16x2xf32>
      %74 = arith.addf %71, %73 : vector<8x16x2xf32>
      %c0_63 = arith.constant 0 : index
      %c0_64 = arith.constant 0 : index
      %75 = vector.load %arg7[%c0_63, %c0_64] : memref<16x36xf32, #tpu.memory_space<vmem>>, vector<16x36xf32>
      %c0_65 = arith.constant 0 : index
      %c0_66 = arith.constant 0 : index
      %c0_67 = arith.constant 0 : index
      %c0_68 = arith.constant 0 : index
      %76 = vector.load %arg8[%c0_65, %c0_66, %c0_67, %c0_68] : memref<1x8x36x2xf32, #tpu.memory_space<vmem>>, vector<1x1x36x2xf32>
      %77 = vector.shape_cast %76 : vector<1x1x36x2xf32> to vector<36x2xf32>
      %cst_69 = arith.constant dense<0.000000e+00> : vector<16x2xf32>
      %78 = tpu.matmul %75, %77, %cst_69 {dimension_numbers = #tpu.dot_dimension_numbers<[1], [0], [0], [1], [0, 0, 1, 1], [], []>} : vector<16x36xf32>, vector<36x2xf32>, vector<16x2xf32> -> vector<16x2xf32>
      %79 = vector.shape_cast %78 : vector<16x2xf32> to vector<1x16x2xf32>
      %c0_70 = arith.constant 0 : index
      %c1_71 = arith.constant 1 : index
      %c0_72 = arith.constant 0 : index
      %c0_73 = arith.constant 0 : index
      %80 = vector.load %arg8[%c0_70, %c1_71, %c0_72, %c0_73] : memref<1x8x36x2xf32, #tpu.memory_space<vmem>>, vector<1x1x36x2xf32>
      %81 = vector.shape_cast %80 : vector<1x1x36x2xf32> to vector<36x2xf32>
      %cst_74 = arith.constant dense<0.000000e+00> : vector<16x2xf32>
      %82 = tpu.matmul %75, %81, %cst_74 {dimension_numbers = #tpu.dot_dimension_numbers<[1], [0], [0], [1], [0, 0, 1, 1], [], []>} : vector<16x36xf32>, vector<36x2xf32>, vector<16x2xf32> -> vector<16x2xf32>
      %83 = vector.shape_cast %82 : vector<16x2xf32> to vector<1x16x2xf32>
      %c0_75 = arith.constant 0 : index
      %c2_76 = arith.constant 2 : index
      %c0_77 = arith.constant 0 : index
      %c0_78 = arith.constant 0 : index
      %84 = vector.load %arg8[%c0_75, %c2_76, %c0_77, %c0_78] : memref<1x8x36x2xf32, #tpu.memory_space<vmem>>, vector<1x1x36x2xf32>
      %85 = vector.shape_cast %84 : vector<1x1x36x2xf32> to vector<36x2xf32>
      %cst_79 = arith.constant dense<0.000000e+00> : vector<16x2xf32>
      %86 = tpu.matmul %75, %85, %cst_79 {dimension_numbers = #tpu.dot_dimension_numbers<[1], [0], [0], [1], [0, 0, 1, 1], [], []>} : vector<16x36xf32>, vector<36x2xf32>, vector<16x2xf32> -> vector<16x2xf32>
      %87 = vector.shape_cast %86 : vector<16x2xf32> to vector<1x16x2xf32>
      %c0_80 = arith.constant 0 : index
      %c3 = arith.constant 3 : index
      %c0_81 = arith.constant 0 : index
      %c0_82 = arith.constant 0 : index
      %88 = vector.load %arg8[%c0_80, %c3, %c0_81, %c0_82] : memref<1x8x36x2xf32, #tpu.memory_space<vmem>>, vector<1x1x36x2xf32>
      %89 = vector.shape_cast %88 : vector<1x1x36x2xf32> to vector<36x2xf32>
      %cst_83 = arith.constant dense<0.000000e+00> : vector<16x2xf32>
      %90 = tpu.matmul %75, %89, %cst_83 {dimension_numbers = #tpu.dot_dimension_numbers<[1], [0], [0], [1], [0, 0, 1, 1], [], []>} : vector<16x36xf32>, vector<36x2xf32>, vector<16x2xf32> -> vector<16x2xf32>
      %91 = vector.shape_cast %90 : vector<16x2xf32> to vector<1x16x2xf32>
      %c0_84 = arith.constant 0 : index
      %c4 = arith.constant 4 : index
      %c0_85 = arith.constant 0 : index
      %c0_86 = arith.constant 0 : index
      %92 = vector.load %arg8[%c0_84, %c4, %c0_85, %c0_86] : memref<1x8x36x2xf32, #tpu.memory_space<vmem>>, vector<1x1x36x2xf32>
      %93 = vector.shape_cast %92 : vector<1x1x36x2xf32> to vector<36x2xf32>
      %cst_87 = arith.constant dense<0.000000e+00> : vector<16x2xf32>
      %94 = tpu.matmul %75, %93, %cst_87 {dimension_numbers = #tpu.dot_dimension_numbers<[1], [0], [0], [1], [0, 0, 1, 1], [], []>} : vector<16x36xf32>, vector<36x2xf32>, vector<16x2xf32> -> vector<16x2xf32>
      %95 = vector.shape_cast %94 : vector<16x2xf32> to vector<1x16x2xf32>
      %c0_88 = arith.constant 0 : index
      %c5 = arith.constant 5 : index
      %c0_89 = arith.constant 0 : index
      %c0_90 = arith.constant 0 : index
      %96 = vector.load %arg8[%c0_88, %c5, %c0_89, %c0_90] : memref<1x8x36x2xf32, #tpu.memory_space<vmem>>, vector<1x1x36x2xf32>
      %97 = vector.shape_cast %96 : vector<1x1x36x2xf32> to vector<36x2xf32>
      %cst_91 = arith.constant dense<0.000000e+00> : vector<16x2xf32>
      %98 = tpu.matmul %75, %97, %cst_91 {dimension_numbers = #tpu.dot_dimension_numbers<[1], [0], [0], [1], [0, 0, 1, 1], [], []>} : vector<16x36xf32>, vector<36x2xf32>, vector<16x2xf32> -> vector<16x2xf32>
      %99 = vector.shape_cast %98 : vector<16x2xf32> to vector<1x16x2xf32>
      %c0_92 = arith.constant 0 : index
      %c6 = arith.constant 6 : index
      %c0_93 = arith.constant 0 : index
      %c0_94 = arith.constant 0 : index
      %100 = vector.load %arg8[%c0_92, %c6, %c0_93, %c0_94] : memref<1x8x36x2xf32, #tpu.memory_space<vmem>>, vector<1x1x36x2xf32>
      %101 = vector.shape_cast %100 : vector<1x1x36x2xf32> to vector<36x2xf32>
      %cst_95 = arith.constant dense<0.000000e+00> : vector<16x2xf32>
      %102 = tpu.matmul %75, %101, %cst_95 {dimension_numbers = #tpu.dot_dimension_numbers<[1], [0], [0], [1], [0, 0, 1, 1], [], []>} : vector<16x36xf32>, vector<36x2xf32>, vector<16x2xf32> -> vector<16x2xf32>
      %103 = vector.shape_cast %102 : vector<16x2xf32> to vector<1x16x2xf32>
      %c0_96 = arith.constant 0 : index
      %c7 = arith.constant 7 : index
      %c0_97 = arith.constant 0 : index
      %c0_98 = arith.constant 0 : index
      %104 = vector.load %arg8[%c0_96, %c7, %c0_97, %c0_98] : memref<1x8x36x2xf32, #tpu.memory_space<vmem>>, vector<1x1x36x2xf32>
      %105 = vector.shape_cast %104 : vector<1x1x36x2xf32> to vector<36x2xf32>
      %cst_99 = arith.constant dense<0.000000e+00> : vector<16x2xf32>
      %106 = tpu.matmul %75, %105, %cst_99 {dimension_numbers = #tpu.dot_dimension_numbers<[1], [0], [0], [1], [0, 0, 1, 1], [], []>} : vector<16x36xf32>, vector<36x2xf32>, vector<16x2xf32> -> vector<16x2xf32>
      %107 = vector.shape_cast %106 : vector<16x2xf32> to vector<1x16x2xf32>
      %108 = tpu.concatenate %79, %83, %87, %91, %95, %99, %103, %107 in 0 : vector<1x16x2xf32>, vector<1x16x2xf32>, vector<1x16x2xf32>, vector<1x16x2xf32>, vector<1x16x2xf32>, vector<1x16x2xf32>, vector<1x16x2xf32>, vector<1x16x2xf32> -> vector<8x16x2xf32>
      %109 = arith.addf %74, %108 : vector<8x16x2xf32>
      %c0_100 = arith.constant 0 : index
      %c0_101 = arith.constant 0 : index
      %110 = vector.load %arg9[%c0_100, %c0_101] : memref<1x2xf32, #tpu.memory_space<vmem>>, vector<1x2xf32>
      %111 = vector.shape_cast %110 : vector<1x2xf32> to vector<1x1x2xf32>
      %112 = vector.broadcast %111 : vector<1x1x2xf32> to vector<8x16x2xf32>
      %113 = arith.mulf %109, %112 : vector<8x16x2xf32>
      %c0_102 = arith.constant 0 : index
      %c0_103 = arith.constant 0 : index
      %114 = vector.load %arg10[%c0_102, %c0_103] : memref<1x2xf32, #tpu.memory_space<vmem>>, vector<1x2xf32>
      %115 = vector.shape_cast %114 : vector<1x2xf32> to vector<1x1x2xf32>
      %116 = vector.broadcast %115 : vector<1x1x2xf32> to vector<8x16x2xf32>
      %117 = arith.addf %113, %116 : vector<8x16x2xf32>
      %cst_104 = arith.constant 0.000000e+00 : f32
      %118 = vector.broadcast %cst_104 : f32 to vector<8x16x2xf32>
      %119 = arith.maximumf %117, %118 : vector<8x16x2xf32>
      %c0_105 = arith.constant 0 : index
      %c0_106 = arith.constant 0 : index
      %c0_107 = arith.constant 0 : index
      %c0_108 = arith.constant 0 : index
      %120 = vector.load %arg11[%c0_105, %c0_106, %c0_107, %c0_108] : memref<1x8x16x2xf32, #tpu.memory_space<vmem>>, vector<1x8x16x2xf32>
      %121 = vector.shape_cast %120 : vector<1x8x16x2xf32> to vector<8x16x2xf32>
      %122 = vector.shape_cast %119 : vector<8x16x2xf32> to vector<1x8x16x2xf32>
      tpu.vector_store %arg11[%c0_105, %c0_106, %c0_107, %c0_108], %122 {strides = array<i32>} : memref<1x8x16x2xf32, #tpu.memory_space<vmem>>, vector<1x8x16x2xf32>,
    } else {
    }
    return
  }
  func.func @transform_0(%arg0: i32, %arg1: i32, %arg2: i32) -> (i32, i32, i32, i32) {
    %c0_i32 = arith.constant 0 : i32
    %c0_i32_0 = arith.constant 0 : i32
    return %arg0, %arg1, %c0_i32, %arg2 : i32, i32, i32, i32
  }
  func.func @transform_1(%arg0: i32, %arg1: i32, %arg2: i32) -> (i32, i32, i32, i32) {
    %c8_i32 = arith.constant 8 : i32
    %0 = arith.muli %arg1, %c8_i32 : i32
    %c1_i32 = arith.constant 1 : i32
    %1 = arith.subi %0, %c1_i32 : i32
    %c0_i32 = arith.constant 0 : i32
    %2 = arith.maxsi %1, %c0_i32 : i32
    %c0_i32_0 = arith.constant 0 : i32
    %c0_i32_1 = arith.constant 0 : i32
    return %arg0, %2, %c0_i32_0, %arg2 : i32, i32, i32, i32
  }
  func.func @transform_2(%arg0: i32, %arg1: i32, %arg2: i32) -> (i32, i32, i32, i32) {
    %c8_i32 = arith.constant 8 : i32
    %0 = arith.muli %arg1, %c8_i32 : i32
    %c8_i32_0 = arith.constant 8 : i32
    %1 = arith.addi %0, %c8_i32_0 : i32
    %c15_i32 = arith.constant 15 : i32
    %2 = arith.minsi %1, %c15_i32 : i32
    %c0_i32 = arith.constant 0 : i32
    %c0_i32_1 = arith.constant 0 : i32
    return %arg0, %2, %c0_i32, %arg2 : i32, i32, i32, i32
  }
  func.func @transform_3(%arg0: i32, %arg1: i32, %arg2: i32) -> (i32, i32, i32) {
    %c0_i32 = arith.constant 0 : i32
    %c0_i32_0 = arith.constant 0 : i32
    %c0_i32_1 = arith.constant 0 : i32
    %c0_i32_2 = arith.constant 0 : i32
    return %c0_i32, %c0_i32_0, %c0_i32_1 : i32, i32, i32
  }
  func.func @transform_4(%arg0: i32, %arg1: i32, %arg2: i32) -> (i32, i32) {
    %c0_i32 = arith.constant 0 : i32
    %c0_i32_0 = arith.constant 0 : i32
    %c0_i32_1 = arith.constant 0 : i32
    return %c0_i32, %c0_i32_0 : i32, i32
  }
  func.func @transform_5(%arg0: i32, %arg1: i32, %arg2: i32) -> (i32, i32, i32, i32) {
    %c0_i32 = arith.constant 0 : i32
    %c0_i32_0 = arith.constant 0 : i32
    %c0_i32_1 = arith.constant 0 : i32
    return %arg0, %arg1, %c0_i32, %c0_i32_0 : i32, i32, i32, i32
  }
  func.func @transform_6(%arg0: i32, %arg1: i32, %arg2: i32) -> (i32, i32) {
    %c0_i32 = arith.constant 0 : i32
    %c0_i32_0 = arith.constant 0 : i32
    %c0_i32_1 = arith.constant 0 : i32
    return %c0_i32, %c0_i32_0 : i32, i32
  }
  func.func @transform_7(%arg0: i32, %arg1: i32, %arg2: i32) -> (i32, i32) {
    %c0_i32 = arith.constant 0 : i32
    %c0_i32_0 = arith.constant 0 : i32
    %c0_i32_1 = arith.constant 0 : i32
    return %c0_i32, %c0_i32_0 : i32, i32
  }
  func.func @transform_8(%arg0: i32, %arg1: i32, %arg2: i32) -> (i32, i32, i32, i32) {
    %c0_i32 = arith.constant 0 : i32
    %c0_i32_0 = arith.constant 0 : i32
    %c0_i32_1 = arith.constant 0 : i32
    return %arg0, %arg1, %c0_i32, %c0_i32_0 : i32, i32, i32, i32
  }
}

</mosaic_0001>

<llo_original>
// kernel: psp_head_forward.2
$region0: #{psp_head_forward.2}
  #allocation0 [shape = 'u32[]', space=smem, size = 0x4, offset = 0x4, fixed_abs, tag = 'smem constant byte address 0x4 - core index']
  #allocation1 [shape = 'u32[72,128]{1,0:T(1,128)}', space=vmem, size = 0x9000, scoped, tag = 'internal scratch']
  #allocation2 [shape = 'f32[50,8]{1,0:T(8,128)}', space=vmem, size = 0x7000, scoped, tag = 'scratch operand']
  %s0 = inlined_call_operand.vmem [shape: bf16[2,16,16,8], index: 0, kind: input, shape index: {}]
  %s1 = inlined_call_operand.vmem [shape: bf16[50,256], index: 1, kind: input, shape index: {}]
  %s2 = inlined_call_operand.vmem [shape: bf16[4,8,2], index: 2, kind: input, shape index: {}]
  %s3 = inlined_call_operand.vmem [shape: f32[50,2], index: 3, kind: input, shape index: {}]
  %s4 = inlined_call_operand.vmem [shape: f32[50,2], index: 4, kind: input, shape index: {}]
  %s5 = inlined_call_operand.vmem [shape: f32[2,50,2], index: 5, kind: output, shape index: {}]
  %s6 = sld [smem:[#allocation0]]
  $region110: #{psp_head_forward.2} parent=0
    _
  %s8 = ssub.s32 1, %s6
  %s9 = scalar_select 0, %s8, %s6
  $region1: #{psp_head_forward.2} parent=0
    #allocation3 [shape = 'u8[28672]{0}', space=vmem, size = 0x7000, scoped, tag = 'input window, operand 1']
    loop: start=0, step=1, limit=6
    $region2: #{psp_head_forward.2} parent=1 // loop_pre_header
      _
    $region3: #{psp_head_forward.2} parent=1 // loop_header
      %s11 = sphi 0, %s15
      %p12 = scmp.ge.s32.totalorder %s11, 6
      %s18 = sphi 0, %s37
      %s19 = sphi 0, %s33
      %s20 = sphi 0, %s29
      %s21 = sphi 0, %s18
      %s22 = sphi 0, %s19
      %s23 = sphi 0, %s20
      %s24 = sphi 0, %s21
      %s25 = sphi 0, %s22
      %s26 = sphi 0, %s23
      %s44 = sphi 0, %s46
      %s47 = sphi 0, %s44
      %s48 = sphi 0, %s47
      %s64 = sphi 0, %s48
      %s70 = sphi 0, %s72
      %s73 = sphi 0, %s70
      %s74 = sphi 0, %s73
      %s90 = sphi 0, %s74
      %s96 = sphi 0, %s98
      %s99 = sphi 0, %s96
      %s100 = sphi 0, %s99
      %s116 = sphi 0, %s100
      %s120 = sphi 0, %s120
      %s122 = sphi 0, %s120
      %s123 = sphi 0, %s122
      %s137 = sphi 0, %s123
      %s141 = sphi 0, %s141
      %s143 = sphi 0, %s141
      %s144 = sphi 0, %s143
      %s158 = sphi 0, %s144
      %s164 = sphi 0, %s166
      %s167 = sphi 0, %s164
      %s168 = sphi 0, %s167
      %s184 = sphi 0, %s168
    $region4: #{psp_head_forward.2} parent=1 // loop_header_branch
      %14 = sbr.rel (%p12) target = $region8
    $region5: #{psp_head_forward.2} parent=1 // loop_body
      %s16 = ssub.s32 %s11, 1
      %s17 = ssub.s32 %s11, 2
      %s27 = sadd.s32 1, %s20
      %p28 = scmp.ge.s32.totalorder %s27, 2
      %s29 = scalar_select %p28, 0, %s27
      %s30 = sadd.s32 1, %s19
      %s31 = scalar_select %p28, %s30, %s19
      %p32 = scmp.ge.s32.totalorder %s31, 1
      %s33 = scalar_select %p32, 0, %s31
      %s34 = sadd.s32 1, %s18
      %s35 = scalar_select %p32, %s34, %s18
      %p36 = scmp.ge.s32.totalorder %s35, 2
      %s37 = scalar_select %p36, 0, %s35
      %s38 = ssub.s32 %s18, %s37
      %s39 = ssub.s32 %s20, %s29
      %s40 = sor.u32 %s38, %s39
      %s41 = ssub.s32 %s19, %s33
      %s42 = sor.u32 %s40, %s41
      %p43 = scmp.eq.s32.totalorder %s42, 0
      %s45 = sadd.s32 %s44, 1
      %s46 = scalar_select %p43, %s44, %s45
      %p49 = pneg %p43
      %p50 = scmp.eq.s32.totalorder %s11, 3
      %p51 = por %p49, %p50
      %p52 = scmp.ne.s32.totalorder %s44, %s47
      %p53 = scmp.eq.s32.totalorder %s11, 0
      %p54 = por %p52, %p53
      %p55 = scmp.ne.s32.totalorder %s44, %s47
      %p56 = scmp.eq.s32.totalorder %s16, 3
      %p57 = por %p55, %p56
      %p58 = scmp.ne.s32.totalorder %s47, %s48
      %p59 = scmp.eq.s32.totalorder %s16, 0
      %p60 = por %p58, %p59
      %p61 = scmp.ne.s32.totalorder %s47, %s48
      %p62 = scmp.eq.s32.totalorder %s17, 3
      %p63 = por %p61, %p62
      %p65 = scmp.ne.s32.totalorder %s48, %s64
      %p66 = scmp.eq.s32.totalorder %s17, 0
      %p67 = por %p65, %p66
      %s68 = ssub.s32 %s20, %s29
      %p69 = scmp.eq.s32.totalorder %s68, 0
      %s71 = sadd.s32 %s70, 1
      %s72 = scalar_select %p69, %s70, %s71
      %p75 = pneg %p69
      %p76 = scmp.eq.s32.totalorder %s11, 3
      %p77 = por %p75, %p76
      %p78 = scmp.ne.s32.totalorder %s70, %s73
      %p79 = scmp.eq.s32.totalorder %s11, 0
      %p80 = por %p78, %p79
      %p81 = scmp.ne.s32.totalorder %s70, %s73
      %p82 = scmp.eq.s32.totalorder %s16, 3
      %p83 = por %p81, %p82
      %p84 = scmp.ne.s32.totalorder %s73, %s74
      %p85 = scmp.eq.s32.totalorder %s16, 0
      %p86 = por %p84, %p85
      %p87 = scmp.ne.s32.totalorder %s73, %s74
      %p88 = scmp.eq.s32.totalorder %s17, 3
      %p89 = por %p87, %p88
      %p91 = scmp.ne.s32.totalorder %s74, %s90
      %p92 = scmp.eq.s32.totalorder %s17, 0
      %p93 = por %p91, %p92
      %s94 = ssub.s32 %s19, %s33
      %p95 = scmp.eq.s32.totalorder %s94, 0
      %s97 = sadd.s32 %s96, 1
      %s98 = scalar_select %p95, %s96, %s97
      %p101 = pneg %p95
      %p102 = scmp.eq.s32.totalorder %s11, 3
      %p103 = por %p101, %p102
      %p104 = scmp.ne.s32.totalorder %s96, %s99
      %p105 = scmp.eq.s32.totalorder %s11, 0
      %p106 = por %p104, %p105
      %p107 = scmp.ne.s32.totalorder %s96, %s99
      %p108 = scmp.eq.s32.totalorder %s16, 3
      %p109 = por %p107, %p108
      %p110 = scmp.ne.s32.totalorder %s99, %s100
      %p111 = scmp.eq.s32.totalorder %s16, 0
      %p112 = por %p110, %p111
      %p113 = scmp.ne.s32.totalorder %s99, %s100
      %p114 = scmp.eq.s32.totalorder %s17, 3
      %p115 = por %p113, %p114
      %p117 = scmp.ne.s32.totalorder %s100, %s116
      %p118 = scmp.eq.s32.totalorder %s17, 0
      %p119 = por %p117, %p118
      %s121 = sadd.s32 %s120, 1
      %p124 = scmp.eq.s32.totalorder %s11, 3
      %p125 = scmp.ne.s32.totalorder %s120, %s122
      %p126 = scmp.eq.s32.totalorder %s11, 0
      %p127 = por %p125, %p126
      %p128 = scmp.ne.s32.totalorder %s120, %s122
      %p129 = scmp.eq.s32.totalorder %s16, 3
      %p130 = por %p128, %p129
      %p131 = scmp.ne.s32.totalorder %s122, %s123
      %p132 = scmp.eq.s32.totalorder %s16, 0
      %p133 = por %p131, %p132
      %p134 = scmp.ne.s32.totalorder %s122, %s123
      %p135 = scmp.eq.s32.totalorder %s17, 3
      %p136 = por %p134, %p135
      %p138 = scmp.ne.s32.totalorder %s123, %s137
      %p139 = scmp.eq.s32.totalorder %s17, 0
      %p140 = por %p138, %p139
      %s142 = sadd.s32 %s141, 1
      %p145 = scmp.eq.s32.totalorder %s11, 3
      %p146 = scmp.ne.s32.totalorder %s141, %s143
      %p147 = scmp.eq.s32.totalorder %s11, 0
      %p148 = por %p146, %p147
      %p149 = scmp.ne.s32.totalorder %s141, %s143
      %p150 = scmp.eq.s32.totalorder %s16, 3
      %p151 = por %p149, %p150
      %p152 = scmp.ne.s32.totalorder %s143, %s144
      %p153 = scmp.eq.s32.totalorder %s16, 0
      %p154 = por %p152, %p153
      %p155 = scmp.ne.s32.totalorder %s143, %s144
      %p156 = scmp.eq.s32.totalorder %s17, 3
      %p157 = por %p155, %p156
      %p159 = scmp.ne.s32.totalorder %s144, %s158
      %p160 = scmp.eq.s32.totalorder %s17, 0
      %p161 = por %p159, %p160
      %s162 = ssub.s32 %s18, %s37
      %p163 = scmp.eq.s32.totalorder %s162, 0
      %s165 = sadd.s32 %s164, 1
      %s166 = scalar_select %p163, %s164, %s165
      %p169 = pneg %p163
      %p170 = scmp.eq.s32.totalorder %s11, 3
      %p171 = por %p169, %p170
      %p172 = scmp.ne.s32.totalorder %s164, %s167
      %p173 = scmp.eq.s32.totalorder %s11, 0
      %p174 = por %p172, %p173
      %p175 = scmp.ne.s32.totalorder %s164, %s167
      %p176 = scmp.eq.s32.totalorder %s16, 3
      %p177 = por %p175, %p176
      %p178 = scmp.ne.s32.totalorder %s167, %s168
      %p179 = scmp.eq.s32.totalorder %s16, 0
      %p180 = por %p178, %p179
      %p181 = scmp.ne.s32.totalorder %s167, %s168
      %p182 = scmp.eq.s32.totalorder %s17, 3
      %p183 = por %p181, %p182
      %p185 = scmp.ne.s32.totalorder %s168, %s184
      %p186 = scmp.eq.s32.totalorder %s17, 0
      %p187 = por %p185, %p186
      %p188 = scmp.le.s32.totalorder 1, %s11
      %p189 = scmp.lt.s32.totalorder %s11, 5
      %p190 = pnand %p188, %p189
      %p191 = pneg %p190
      // Predicated region
      $region9: #{psp_head_forward.2} parent=5 // pred_check
        _
      $region10: #{psp_head_forward.2} parent=5 // pred_check_branch
        %193 = sbr.rel (%p190) target = $region12
      $region11: #{psp_head_forward.2} parent=5 // pred_region
        %s194 = ssub.s32 %s11, 1
        // Predicated region
        $region13: #{psp_head_forward.2} parent=11 // pred_check
          %p195 = pneg %p112
        $region14: #{psp_head_forward.2} parent=11 // pred_check_branch
          %197 = sbr.rel (%p195) target = $region16
        $region15: #{psp_head_forward.2} parent=11 // pred_region
          %p198 = scmp.lt.s32.totalorder %s22, 0
          %s199 = scalar_select %p198, %s22, 0
          %s200 = smul.addr %s199, 4
          %s201 = scalar_lea.vmem %s2, %s200
        $region16: #{psp_head_forward.2} parent=11 // pred_fallthru
          _
        // Predicated region
        $region17: #{psp_head_forward.2} parent=11 // pred_check
          %p202 = pneg %p133
        $region18: #{psp_head_forward.2} parent=11 // pred_check_branch
          %204 = sbr.rel (%p202) target = $region20
        $region19: #{psp_head_forward.2} parent=11 // pred_region
          _
        $region20: #{psp_head_forward.2} parent=11 // pred_fallthru
          _
        // Predicated region
        $region21: #{psp_head_forward.2} parent=11 // pred_check
          %p205 = pneg %p154
        $region22: #{psp_head_forward.2} parent=11 // pred_check_branch
          %207 = sbr.rel (%p205) target = $region24
        $region23: #{psp_head_forward.2} parent=11 // pred_region
          _
        $region24: #{psp_head_forward.2} parent=11 // pred_fallthru
          _
      $region12: #{psp_head_forward.2} parent=5 // pred_fallthru
        _
      %p208 = scmp.lt.s32.totalorder %s11, 4
      // Predicated region
      $region25: #{psp_head_forward.2} parent=5 // pred_check
        %p209 = pneg %p208
      $region26: #{psp_head_forward.2} parent=5 // pred_check_branch
        %211 = sbr.rel (%p209) target = $region28
      $region27: #{psp_head_forward.2} parent=5 // pred_region
        // Predicated region
        $region29: #{psp_head_forward.2} parent=27 // pred_check
          %p212 = pneg %p54
        $region30: #{psp_head_forward.2} parent=27 // pred_check_branch
          %214 = sbr.rel (%p212) target = $region32
        $region31: #{psp_head_forward.2} parent=27 // pred_region
          %s215 = smul.u32 8, %s20
          %p216 = scmp.lt.s32.totalorder %s18, 1
          %s217 = scalar_select %p216, %s18, 1
          %p218 = scmp.lt.s32.totalorder %s215, 15
          %s219 = scalar_select %p218, %s215, 15
          %p220 = scmp.lt.s32.totalorder %s19, 0
          %s221 = scalar_select %p220, %s19, 0
          %s222 = smul.addr %s219, 2
          %s223 = sadd.s32 %s221, %s222
          %s224 = smul.addr %s217, 32
          %s225 = sadd.s32 %s223, %s224
          %s226 = smul.addr %s225, 4
          %s227 = scalar_lea.vmem %s0, %s226
          %s228 = smul.u32 8, %s20
        $region32: #{psp_head_forward.2} parent=27 // pred_fallthru
          _
        // Predicated region
        $region33: #{psp_head_forward.2} parent=27 // pred_check
          %p229 = pneg %p80
        $region34: #{psp_head_forward.2} parent=27 // pred_check_branch
          %231 = sbr.rel (%p229) target = $region36
        $region35: #{psp_head_forward.2} parent=27 // pred_region
          %s232 = sand.u32 %s70, 1
          %s233 = sand.u32 %s70, 1
          %s234 = smul.addr %s233, 28
          %s235 = scalar_lea.vmem [#allocation3], %s234
          %s236 = smul.addr %s20, 4
          %s237 = scalar_lea.vmem %s1, %s236
          // Predicated region
          $region37: #{psp_head_forward.2} parent=35 // pred_check
            _
          $region38: #{psp_head_forward.2} parent=35 // pred_check_branch
            %239 = sbr.rel (0) target = $region40
          $region39: #{psp_head_forward.2} parent=35 // pred_region
            // Predicated region
            $region41: #{psp_head_forward.2} parent=39 // pred_check
              _
            $region42: #{psp_head_forward.2} parent=39 // pred_check_branch
              %241 = sbr.rel target = $region44
            $region43: #{psp_head_forward.2} parent=39 // pred_region
              // Predicated region
              $region56: #{psp_head_forward.2} parent=43 // pred_check
                _
              $region57: #{psp_head_forward.2} parent=43 // pred_check_branch
                %269 = sbr.rel (0) target = $region59
              $region58: #{psp_head_forward.2} parent=43 // pred_region
                loop: start=0, step=1, limit=1
                $region60: #{psp_head_forward.2} parent=58 // loop_pre_header
                  _
                $region61: #{psp_head_forward.2} parent=58 // loop_header
                  %s271 = sphi 0, %s275
                  %p272 = scmp.ge.s32.totalorder %s271, 1
                  %s276 = sphi %s237, %s237
                  %s277 = sphi %s235, %s235
                $region62: #{psp_head_forward.2} parent=58 // loop_header_branch
                  %274 = sbr.rel (%p272) target = $region66
                $region63: #{psp_head_forward.2} parent=58 // loop_body
                  _
                $region64: #{psp_head_forward.2} parent=58 // loop_footer
                  %s275 = sadd.s32 1, %s271
                $region65: #{psp_head_forward.2} parent=58 // loop_footer_branch
                  %270 = sbr.rel target = $region61
                $region66: #{psp_head_forward.2} parent=58 // loop_exit
                  _
                %s279 = ssub.s32 16, 1
                loop: start=0, step=1, limit=1
                $region67: #{psp_head_forward.2} parent=58 // loop_pre_header
                  _
                $region68: #{psp_head_forward.2} parent=58 // loop_header
                  %s281 = sphi 0, %s285
                  %p282 = scmp.ge.s32.totalorder %s281, 1
                  %s286 = sphi %s237, %s237
                  %s287 = sphi %s235, %s235
                $region69: #{psp_head_forward.2} parent=58 // loop_header_branch
                  %284 = sbr.rel (%p282) target = $region73
                $region70: #{psp_head_forward.2} parent=58 // loop_body
                  %v288 = vld [vmem:[%s286] sm:%s279]
                  %289 = vst [vmem:[%s287] sm:%s279] %v288
                  %v290 = vld [vmem:[%s286 + $0x8] sm:%s279]
                  %291 = vst [vmem:[%s287 + $0x4] sm:%s279] %v290
                  %v292 = vld [vmem:[%s286 + $0x10] sm:%s279]
                  %293 = vst [vmem:[%s287 + $0x8] sm:%s279] %v292
                  %v294 = vld [vmem:[%s286 + $0x18] sm:%s279]
                  %295 = vst [vmem:[%s287 + $0xc] sm:%s279] %v294
                  %v296 = vld [vmem:[%s286 + $0x20] sm:%s279]
                  %297 = vst [vmem:[%s287 + $0x10] sm:%s279] %v296
                  %v298 = vld [vmem:[%s286 + $0x28] sm:%s279]
                  %299 = vst [vmem:[%s287 + $0x14] sm:%s279] %v298
                  %v300 = vld [vmem:[%s286 + $0x30] sm:%s279]
                  %301 = vst [vmem:[%s287 + $0x18] sm:%s279] %v300
                $region71: #{psp_head_forward.2} parent=58 // loop_footer
                  %s285 = sadd.s32 1, %s281
                $region72: #{psp_head_forward.2} parent=58 // loop_footer_branch
                  %280 = sbr.rel target = $region68
                $region73: #{psp_head_forward.2} parent=58 // loop_exit
                  _
              $region59: #{psp_head_forward.2} parent=43 // pred_fallthru
                _
            $region44: #{psp_head_forward.2} parent=39 // pred_fallthru
              _
            // Predicated region
            $region45: #{psp_head_forward.2} parent=39 // pred_check
              _
            $region46: #{psp_head_forward.2} parent=39 // pred_check_branch
              %243 = sbr.rel (0) target = $region48
            $region47: #{psp_head_forward.2} parent=39 // pred_region
              %s245 = ssub.s32 16, 1
              loop: start=0, step=1, limit=1
              $region49: #{psp_head_forward.2} parent=47 // loop_pre_header
                _
              $region50: #{psp_head_forward.2} parent=47 // loop_header
                %s247 = sphi 0, %s251
                %p248 = scmp.ge.s32.totalorder %s247, 1
                %s252 = sphi %s237, %s237
                %s253 = sphi %s235, %s235
              $region51: #{psp_head_forward.2} parent=47 // loop_header_branch
                %250 = sbr.rel (%p248) target = $region55
              $region52: #{psp_head_forward.2} parent=47 // loop_body
                %v254 = vld [vmem:[%s252] sm:%s245]
                %255 = vst [vmem:[%s253] sm:%s245] %v254
                %v256 = vld [vmem:[%s252 + $0x8] sm:%s245]
                %257 = vst [vmem:[%s253 + $0x4] sm:%s245] %v256
                %v258 = vld [vmem:[%s252 + $0x10] sm:%s245]
                %259 = vst [vmem:[%s253 + $0x8] sm:%s245] %v258
                %v260 = vld [vmem:[%s252 + $0x18] sm:%s245]
                %261 = vst [vmem:[%s253 + $0xc] sm:%s245] %v260
                %v262 = vld [vmem:[%s252 + $0x20] sm:%s245]
                %263 = vst [vmem:[%s253 + $0x10] sm:%s245] %v262
                %v264 = vld [vmem:[%s252 + $0x28] sm:%s245]
                %265 = vst [vmem:[%s253 + $0x14] sm:%s245] %v264
                %v266 = vld [vmem:[%s252 + $0x30] sm:%s245]
                %267 = vst [vmem:[%s253 + $0x18] sm:%s245] %v266
              $region53: #{psp_head_forward.2} parent=47 // loop_footer
                %s251 = sadd.s32 1, %s247
              $region54: #{psp_head_forward.2} parent=47 // loop_footer_branch
                %246 = sbr.rel target = $region50
              $region55: #{psp_head_forward.2} parent=47 // loop_exit
                _
            $region48: #{psp_head_forward.2} parent=39 // pred_fallthru
              _
          $region40: #{psp_head_forward.2} parent=35 // pred_fallthru
            _
          %302 = vnop
        $region36: #{psp_head_forward.2} parent=27 // pred_fallthru
          _
      $region28: #{psp_head_forward.2} parent=5 // pred_fallthru
        _
      %p303 = scmp.le.s32.totalorder 1, %s11
      %p304 = scmp.lt.s32.totalorder %s11, 5
      %p305 = pnand %p303, %p304
      %p306 = pneg %p305
      // Predicated region
      $region74: #{psp_head_forward.2} parent=5 // pred_check
        _
      $region75: #{psp_head_forward.2} parent=5 // pred_check_branch
        %308 = sbr.rel (%p305) target = $region77
      $region76: #{psp_head_forward.2} parent=5 // pred_region
        %s309 = ssub.s32 %s11, 1
        %s310 = sand.u32 %s73, 1
        %s311 = sand.u32 %s73, 1
        %s312 = smul.addr %s311, 28
        %s313 = scalar_lea.vmem [#allocation3], %s312
        // Predicated region
        $region78: #{psp_head_forward.2} parent=76 // pred_check
          %p314 = pneg %p86
        $region79: #{psp_head_forward.2} parent=76 // pred_check_branch
          %316 = sbr.rel (%p314) target = $region81
        $region80: #{psp_head_forward.2} parent=76 // pred_region
          _
        $region81: #{psp_head_forward.2} parent=76 // pred_fallthru
          _
        %s317 = smul.u32 8, %s23
        %p318 = scmp.lt.s32.totalorder %s21, 1
        %s319 = scalar_select %p318, %s21, 1
        %p320 = scmp.lt.s32.totalorder %s317, 15
        %s321 = scalar_select %p320, %s317, 15
        %p322 = scmp.lt.s32.totalorder %s22, 0
        %s323 = scalar_select %p322, %s22, 0
        %s324 = smul.addr %s321, 2
        %s325 = sadd.s32 %s323, %s324
        %s326 = smul.addr %s319, 32
        %s327 = sadd.s32 %s325, %s326
        %s328 = smul.addr %s327, 4
        %s329 = scalar_lea.vmem %s0, %s328
        %p330 = pneg %p60
        %p331 = pneg %p57
        %s332 = sand.u32 %s73, 1
        %s333 = sand.u32 %s73, 1
        %s334 = smul.addr %s333, 28
        %s335 = scalar_lea.vmem [#allocation3], %s334
        %p336 = pneg %p86
        %p337 = pneg %p83
        %p338 = scmp.lt.s32.totalorder %s22, 0
        %s339 = scalar_select %p338, %s22, 0
        %s340 = smul.addr %s339, 4
        %s341 = scalar_lea.vmem %s2, %s340
        %p342 = pneg %p112
        %p343 = pneg %p109
        %p344 = pneg %p133
        %p345 = pneg %p130
        %p346 = pneg %p154
        %p347 = pneg %p151
        %p348 = pneg %p180
        %p349 = pneg %p177
        %p350 = scmp.lt.s32.totalorder %s21, 1
        %s351 = scalar_select %p350, %s21, 1
        %s352 = smul.addr %s351, 7
        %s353 = smul.addr %s352, 8
        %s354 = scalar_lea.vmem %s5, %s353
        %s355 = smul.u32 8, %s23
        %p356 = scmp.lt.s32.totalorder %s21, 1
        %s357 = scalar_select %p356, %s21, 1
        %p358 = scmp.lt.s32.totalorder %s355, 15
        %s359 = scalar_select %p358, %s355, 15
        %p360 = scmp.lt.s32.totalorder %s22, 0
        %s361 = scalar_select %p360, %s22, 0
        %s362 = smul.addr %s359, 2
        %s363 = sadd.s32 %s361, %s362
        %s364 = smul.addr %s357, 32
        %s365 = sadd.s32 %s363, %s364
        %s366 = smul.addr %s365, 4
        %s367 = scalar_lea.vmem %s0, %s366
        %s368 = smul.u32 8, %s23
        %p369 = scmp.lt.s32.totalorder %s22, 0
        %s370 = scalar_select %p369, %s22, 0
        %s371 = smul.addr %s370, 4
        %s372 = scalar_lea.vmem %s2, %s371
        %p373 = scmp.lt.s32.totalorder %s21, 1
        %s374 = scalar_select %p373, %s21, 1
        %s375 = smul.addr %s374, 7
        %s376 = smul.addr %s375, 8
        %s377 = scalar_lea.vmem %s5, %s376
        %p379 = scmp.eq.s32.totalorder %s22, 0
        %p380 = scmp.eq.s32.totalorder %s23, 0
        %p381 = pnand %p379, %p380
        %p382 = pneg %p381
        // Predicated region
        $region82: #{psp_head_forward.2} parent=76 // pred_check
          _
        $region83: #{psp_head_forward.2} parent=76 // pred_check_branch
          %384 = sbr.rel (%p381) target = $region85
        $region84: #{psp_head_forward.2} parent=76 // pred_region
          %vm385 = vcmask 15360
          %386 = vst.msk [vmem:[%s377] sm:$0xff] %vm385, 0.0
          %387 = vst.msk [vmem:[%s377 + $0x8] sm:$0xff] %vm385, 0.0
          %388 = vst.msk [vmem:[%s377 + $0x10] sm:$0xff] %vm385, 0.0
          %389 = vst.msk [vmem:[%s377 + $0x18] sm:$0xff] %vm385, 0.0
          %390 = vst.msk [vmem:[%s377 + $0x20] sm:$0xff] %vm385, 0.0
          %391 = vst.msk [vmem:[%s377 + $0x28] sm:$0xff] %vm385, 0.0
          %vm392 = vcmask 9216
          %393 = vst.msk [vmem:[%s377 + $0x30] sm:$0x3] %vm392, 0.0
        $region85: #{psp_head_forward.2} parent=76 // pred_fallthru
          _
        // Predicated region
        $region86: #{psp_head_forward.2} parent=76 // pred_check
          %p394 = pneg %p380
        $region87: #{psp_head_forward.2} parent=76 // pred_check_branch
          %396 = sbr.rel (%p394) target = $region89
        $region88: #{psp_head_forward.2} parent=76 // pred_region
          %vm397 = vcmask 64512
          %398 = vst.msk [vmem:[#allocation2] sm:$0xff] %vm397, 0.0
          %399 = vst.msk [vmem:[#allocation2 + $0x8] sm:$0xff] %vm397, 0.0
          %400 = vst.msk [vmem:[#allocation2 + $0x10] sm:$0xff] %vm397, 0.0
          %401 = vst.msk [vmem:[#allocation2 + $0x18] sm:$0xff] %vm397, 0.0
          %402 = vst.msk [vmem:[#allocation2 + $0x20] sm:$0xff] %vm397, 0.0
          %403 = vst.msk [vmem:[#allocation2 + $0x28] sm:$0xff] %vm397, 0.0
          %vm404 = vcmask 58368
          %405 = vst.msk [vmem:[#allocation2 + $0x30] sm:$0x3] %vm404, 0.0
        $region89: #{psp_head_forward.2} parent=76 // pred_fallthru
          _
        %v406 = vld [vmem:[%s367] sm:$0xf]
        %v407 = vld [vmem:[%s367 + $0x4] sm:$0xf]
        %v408 = vld [vmem:[%s367 + $0x8] sm:$0xf]
        %v409 = vld [vmem:[%s367 + $0xc] sm:$0xf]
        %v410 = vld [vmem:[%s367 + $0x10] sm:$0xf]
        %v411 = vld [vmem:[%s367 + $0x14] sm:$0xf]
        %v412 = vld [vmem:[%s367 + $0x18] sm:$0xf]
        %v413 = vld [vmem:[%s367 + $0x1c] sm:$0xf]
        %v414 = vld [vmem:[%s367 + $0x20] sm:$0xf]
        %v415 = vld [vmem:[%s367 + $0x24] sm:$0xf]
        %v416 = vld [vmem:[%s367 + $0x28] sm:$0xf]
        %v417 = vld [vmem:[%s367 + $0x2c] sm:$0xf]
        %v418 = vld [vmem:[%s367 + $0x30] sm:$0xf]
        %v419 = vld [vmem:[%s367 + $0x34] sm:$0xf]
        %v420 = vld [vmem:[%s367 + $0x38] sm:$0xf]
        %v421 = vld [vmem:[%s367 + $0x3c] sm:$0xf]
        %v422 = vld [vmem:[#allocation2] sm:$0xff]
        %v423 = vld [vmem:[#allocation2 + $0x8] sm:$0xff]
        %v424 = vld [vmem:[#allocation2 + $0x10] sm:$0xff]
        %v425 = vld [vmem:[#allocation2 + $0x18] sm:$0xff]
        %v426 = vld [vmem:[#allocation2 + $0x20] sm:$0xff]
        %v427 = vld [vmem:[#allocation2 + $0x28] sm:$0xff]
        %v428 = vld [vmem:[#allocation2 + $0x30] sm:$0x3]
        %v429 = vld [vmem:[%s313] sm:$0xf]
        %v430 = vld [vmem:[%s313 + $0x4] sm:$0xf]
        %v431 = vld [vmem:[%s313 + $0x8] sm:$0xf]
        %v432 = vld [vmem:[%s313 + $0xc] sm:$0xf]
        %v433 = vld [vmem:[%s313 + $0x10] sm:$0xf]
        %v434 = vld [vmem:[%s313 + $0x14] sm:$0xf]
        %v435 = vld [vmem:[%s313 + $0x18] sm:$0x1]
        %v443 = vunpack.c.l.b16 %v429
        %v444 = vunpack.c.l.b16 %v430
        %v445 = vunpack.c.l.b16 %v431
        %v446 = vunpack.c.l.b16 %v432
        %v447 = vunpack.c.l.b16 %v433
        %v448 = vunpack.c.l.b16 %v434
        %v449 = vunpack.c.l.b16 %v435
        %v450 = vpack.c.b16 %v444, %v443
        %v451 = vpack.c.b16 %v446, %v445
        %v452 = vpack.c.b16 %v448, %v447
        %v453 = vpack.c.b16 %v449, %v449
        %v474 = vunpack.c.l.b16 %v406
        %v475 = vunpack.c.l.b16 %v407
        %v476 = vunpack.c.l.b16 %v408
        %v477 = vunpack.c.l.b16 %v409
        %v478 = vunpack.c.l.b16 %v410
        %v479 = vunpack.c.l.b16 %v411
        %v480 = vunpack.c.l.b16 %v412
        %v481 = vunpack.c.l.b16 %v413
        %v482 = vunpack.c.l.b16 %v414
        %v483 = vunpack.c.l.b16 %v415
        %v484 = vunpack.c.l.b16 %v416
        %v485 = vunpack.c.l.b16 %v417
        %v486 = vunpack.c.l.b16 %v418
        %v487 = vunpack.c.l.b16 %v419
        %v488 = vunpack.c.l.b16 %v420
        %v489 = vunpack.c.l.b16 %v421
        %v490 = vpack.c.b16 %v475, %v474
        %v491 = vpack.c.b16 %v477, %v476
        %v492 = vpack.c.b16 %v479, %v478
        %v493 = vpack.c.b16 %v481, %v480
        %v494 = vpack.c.b16 %v483, %v482
        %v495 = vpack.c.b16 %v485, %v484
        %v496 = vpack.c.b16 %v487, %v486
        %v497 = vpack.c.b16 %v489, %v488
        %506 = vmatpush.bf16.msra.mxu0 %v497
        %507 = vmatpush.bf16.msra.mxu0 %v496
        %508 = vmatpush.bf16.msra.mxu0 %v495
        %509 = vmatpush.bf16.msra.mxu0 %v494
        %510 = vmatpush.bf16.msra.mxu0 %v493
        %511 = vmatpush.bf16.msra.mxu0 %v492
        %512 = vmatpush.bf16.msra.mxu0 %v491
        %513 = vmatpush.bf16.msra.mxu0 %v490
        %514 = vmatmul.bf16.gmra.mxu0 %v450
        %v515 = vpop.f32.mrf.mxu0
        %v516 = vadd.f32 0.0, %v515
        %v517 = vpop.f32.mrf.mxu0
        %v518 = vadd.f32 0.0, %v517
        %519 = vmatmul.bf16.gmra.mxu0 %v451
        %v520 = vpop.f32.mrf.mxu0
        %v521 = vadd.f32 0.0, %v520
        %v522 = vpop.f32.mrf.mxu0
        %v523 = vadd.f32 0.0, %v522
        %524 = vmatmul.bf16.gmra.mxu0 %v452
        %v525 = vpop.f32.mrf.mxu0
        %v526 = vadd.f32 0.0, %v525
        %v527 = vpop.f32.mrf.mxu0
        %v528 = vadd.f32 0.0, %v527
        %529 = vmatmul.bf16.gmra.mxu0 %v453
        %v530 = vpop.f32.mrf.mxu0
        %v531 = vadd.f32 0.0, %v530
        %v532 = vpop.f32.mrf.mxu0
        %533 = vdwg.mxu0
        %v534 = vadd.f32 %v422, %v516
        %v535 = vadd.f32 %v423, %v518
        %v536 = vadd.f32 %v424, %v521
        %v537 = vadd.f32 %v425, %v523
        %v538 = vadd.f32 %v426, %v526
        %v539 = vadd.f32 %v427, %v528
        %v540 = vadd.f32 %v428, %v531
        %vm541 = vcmask 64512
        %542 = vst.msk [vmem:[#allocation2] sm:$0xff] %vm541, %v534
        %543 = vst.msk [vmem:[#allocation2 + $0x8] sm:$0xff] %vm541, %v535
        %544 = vst.msk [vmem:[#allocation2 + $0x10] sm:$0xff] %vm541, %v536
        %545 = vst.msk [vmem:[#allocation2 + $0x18] sm:$0xff] %vm541, %v537
        %546 = vst.msk [vmem:[#allocation2 + $0x20] sm:$0xff] %vm541, %v538
        %547 = vst.msk [vmem:[#allocation2 + $0x28] sm:$0xff] %vm541, %v539
        %vm548 = vcmask 58368
        %549 = vst.msk [vmem:[#allocation2 + $0x30] sm:$0x3] %vm548, %v540
        %p550 = scmp.eq.s32.totalorder %s23, 1
        // Predicated region
        $region90: #{psp_head_forward.2} parent=76 // pred_check
          %p551 = pneg %p550
        $region91: #{psp_head_forward.2} parent=76 // pred_check_branch
          %553 = sbr.rel (%p551) target = $region93
        $region92: #{psp_head_forward.2} parent=76 // pred_region
          %v554 = vld [vmem:[#allocation2] sm:$0xff]
          %v555 = vld [vmem:[#allocation2 + $0x8] sm:$0xff]
          %v556 = vld [vmem:[#allocation2 + $0x10] sm:$0xff]
          %v557 = vld [vmem:[#allocation2 + $0x18] sm:$0xff]
          %v558 = vld [vmem:[#allocation2 + $0x20] sm:$0xff]
          %v559 = vld [vmem:[#allocation2 + $0x28] sm:$0xff]
          %v560 = vld [vmem:[#allocation2 + $0x30] sm:$0x3]
          %v561 = vpack.c.bf16 %v554, %v554
          %v562 = vpack.c.bf16 %v555, %v555
          %v563 = vpack.c.bf16 %v556, %v556
          %v564 = vpack.c.bf16 %v557, %v557
          %v565 = vpack.c.bf16 %v558, %v558
          %v566 = vpack.c.bf16 %v559, %v559
          %v567 = vpack.c.bf16 %v560, %v560
          %v568 = vld [vmem:[%s372] sm:$0xf]
          %v570 = vsel %vm541, %v561, 0
          %vm572 = vcmask 1043456
          %v574 = vsel %vm572, %v568, 0
          %576 = vmatpush.bf16.msra.mxu0 0
          %577 = vmatpush.bf16.msra.mxu0 0
          %578 = vmatpush.bf16.msra.mxu0 0
          %579 = vmatpush.bf16.msra.mxu0 0
          %580 = vmatpush.bf16.msra.mxu0 0
          %581 = vmatpush.bf16.msra.mxu0 0
          %582 = vmatpush.bf16.msra.mxu0 0
          %583 = vmatpush.bf16.msra.mxu0 %v574
          %584 = vmatmul.bf16.gmra.mxu0 %v570
          %v585 = vpop.f32.mrf.mxu0
          %v586 = vadd.f32 0.0, %v585
          %v587 = vpop.f32.mrf.mxu0
          %588 = vdwg.mxu0
          %s589 = scalar_lea.vmem %s372, 4
          %v590 = vld [vmem:[%s589] sm:$0xf]
          %v592 = vunpack.c.l.b16 %v561
          %v593 = vpack.c.b16 %v592, %v592
          %v595 = vshrl.u32 %v593, 16
          %v597 = vshll.u32 %v593, 16
          %v599 = vrot.slane %v597, 1
          %v600 = vor.u32 %v595, %v599
          %v602 = vsel %vm541, %v600, 0
          %v605 = vsel %vm572, %v590, 0
          %607 = vmatpush.bf16.msra.mxu0 0
          %608 = vmatpush.bf16.msra.mxu0 0
          %609 = vmatpush.bf16.msra.mxu0 0
          %610 = vmatpush.bf16.msra.mxu0 0
          %611 = vmatpush.bf16.msra.mxu0 0
          %612 = vmatpush.bf16.msra.mxu0 0
          %613 = vmatpush.bf16.msra.mxu0 0
          %614 = vmatpush.bf16.msra.mxu0 %v605
          %615 = vmatmul.bf16.gmra.mxu0 %v602
          %v616 = vpop.f32.mrf.mxu0
          %v617 = vadd.f32 0.0, %v616
          %v618 = vpop.f32.mrf.mxu0
          %619 = vdwg.mxu0
          %s620 = scalar_lea.vmem %s372, 8
          %v621 = vld [vmem:[%s620] sm:$0xf]
          %v623 = vunpack.c.l.b16 %v562
          %v624 = vpack.c.b16 %v623, %v592
          %v626 = vshrl.u32 %v624, 16
          %v628 = vrot.slane %v626, 2
          %v629 = vshll.u32 %v624, 16
          %v631 = vrot.slane %v629, 3
          %v632 = vor.u32 %v628, %v631
          %v634 = vsel %vm541, %v632, 0
          %v637 = vsel %vm572, %v621, 0
          %639 = vmatpush.bf16.msra.mxu0 0
          %640 = vmatpush.bf16.msra.mxu0 0
          %641 = vmatpush.bf16.msra.mxu0 0
          %642 = vmatpush.bf16.msra.mxu0 0
          %643 = vmatpush.bf16.msra.mxu0 0
          %644 = vmatpush.bf16.msra.mxu0 0
          %645 = vmatpush.bf16.msra.mxu0 0
          %646 = vmatpush.bf16.msra.mxu0 %v637
          %647 = vmatmul.bf16.gmra.mxu0 %v634
          %v648 = vpop.f32.mrf.mxu0
          %v649 = vadd.f32 0.0, %v648
          %v650 = vpop.f32.mrf.mxu0
          %v651 = vadd.f32 0.0, %v650
          %652 = vdwg.mxu0
          %s653 = scalar_lea.vmem %s372, 12
          %v654 = vld [vmem:[%s653] sm:$0xf]
          %v660 = vunpack.c.l.b16 %v563
          %v661 = vunpack.c.l.b16 %v564
          %v662 = vunpack.c.l.b16 %v565
          %v663 = vunpack.c.l.b16 %v566
          %v664 = vunpack.c.l.b16 %v567
          %v665 = vpack.c.b16 %v660, %v623
          %v666 = vpack.c.b16 %v662, %v661
          %v667 = vpack.c.b16 %v664, %v663
          %vm668 = vcmask 1044480
          %v669 = vrot.slane %v665, 3
          %v670 = vrot.slane %v666, 3
          %v671 = vsel %vm668, %v669, %v670
          %v672 = vrot.slane %v667, 3
          %v673 = vsel %vm668, %v670, %v672
          %v675 = vsel %vm541, %v671, 0
          %v678 = vsel %vm541, %v673, 0
          %v681 = vsel %vm541, %v672, 0
          %v684 = vsel %vm572, %v654, 0
          %686 = vmatpush.bf16.msra.mxu0 0
          %687 = vmatpush.bf16.msra.mxu0 0
          %688 = vmatpush.bf16.msra.mxu0 0
          %689 = vmatpush.bf16.msra.mxu0 0
          %690 = vmatpush.bf16.msra.mxu0 0
          %691 = vmatpush.bf16.msra.mxu0 0
          %692 = vmatpush.bf16.msra.mxu0 0
          %693 = vmatpush.bf16.msra.mxu0 %v684
          %694 = vmatmul.bf16.gmra.mxu0 %v675
          %v695 = vpop.f32.mrf.mxu0
          %v696 = vadd.f32 0.0, %v695
          %v697 = vpop.f32.mrf.mxu0
          %v698 = vadd.f32 0.0, %v697
          %699 = vmatmul.bf16.gmra.mxu0 %v678
          %v700 = vpop.f32.mrf.mxu0
          %v701 = vadd.f32 0.0, %v700
          %v702 = vpop.f32.mrf.mxu0
          %v703 = vadd.f32 0.0, %v702
          %704 = vmatmul.bf16.gmra.mxu0 %v681
          %v705 = vpop.f32.mrf.mxu0
          %v706 = vadd.f32 0.0, %v705
          %v707 = vpop.f32.mrf.mxu0
          %708 = vdwg.mxu0
          %v709 = vld [vmem:[%s377] sm:$0xff]
          %v710 = vld [vmem:[%s377 + $0x8] sm:$0xff]
          %v711 = vld [vmem:[%s377 + $0x10] sm:$0xff]
          %v712 = vld [vmem:[%s377 + $0x18] sm:$0xff]
          %v713 = vld [vmem:[%s377 + $0x20] sm:$0xff]
          %v714 = vld [vmem:[%s377 + $0x28] sm:$0xff]
          %v715 = vld [vmem:[%s377 + $0x30] sm:$0x3]
          %v717 = vrot.slane %v617, 7
          %vm721 = vcmask 1044480
          %v722 = vrot.slane %v649, 3
          %v723 = vrot.slane %v651, 3
          %v724 = vsel %vm721, %v722, %v723
          %vm732 = vcmask 1045504
          %v733 = vrot.slane %v696, 2
          %v734 = vrot.slane %v698, 2
          %v735 = vsel %vm732, %v733, %v734
          %v736 = vrot.slane %v701, 2
          %v737 = vsel %vm732, %v734, %v736
          %v738 = vrot.slane %v703, 2
          %v739 = vsel %vm732, %v736, %v738
          %v740 = vrot.slane %v706, 2
          %v741 = vsel %vm732, %v738, %v740
          %vm748 = vcmask 1040384
          %v749 = vsel %vm748, %v586, %v717
          %v750 = vsel %vm721, %v749, %v722
          %v751 = vsel %vm732, %v724, %v733
          %v752 = vadd.f32 %v709, %v750
          %v753 = vadd.f32 %v710, %v751
          %v754 = vadd.f32 %v711, %v735
          %v755 = vadd.f32 %v712, %v737
          %v756 = vadd.f32 %v713, %v739
          %v757 = vadd.f32 %v714, %v741
          %v758 = vadd.f32 %v715, %v740
          %vm759 = vcmask 15360
          %760 = vst.msk [vmem:[%s377] sm:$0xff] %vm759, %v752
          %761 = vst.msk [vmem:[%s377 + $0x8] sm:$0xff] %vm759, %v753
          %762 = vst.msk [vmem:[%s377 + $0x10] sm:$0xff] %vm759, %v754
          %763 = vst.msk [vmem:[%s377 + $0x18] sm:$0xff] %vm759, %v755
          %764 = vst.msk [vmem:[%s377 + $0x20] sm:$0xff] %vm759, %v756
          %765 = vst.msk [vmem:[%s377 + $0x28] sm:$0xff] %vm759, %v757
          %vm766 = vcmask 9216
          %767 = vst.msk [vmem:[%s377 + $0x30] sm:$0x3] %vm766, %v758
        $region93: #{psp_head_forward.2} parent=76 // pred_fallthru
          _
        %p768 = pnand %p379, %p550
        %p769 = pneg %p768
        // Predicated region
        $region94: #{psp_head_forward.2} parent=76 // pred_check
          _
        $region95: #{psp_head_forward.2} parent=76 // pred_check_branch
          %771 = sbr.rel (%p768) target = $region97
        $region96: #{psp_head_forward.2} parent=76 // pred_region
          %v772 = vld [vmem:[%s377] sm:$0xff]
          %v773 = vld [vmem:[%s377 + $0x8] sm:$0xff]
          %v774 = vld [vmem:[%s377 + $0x10] sm:$0xff]
          %v775 = vld [vmem:[%s377 + $0x18] sm:$0xff]
          %v776 = vld [vmem:[%s377 + $0x20] sm:$0xff]
          %v777 = vld [vmem:[%s377 + $0x28] sm:$0xff]
          %v778 = vld [vmem:[%s377 + $0x30] sm:$0x3]
          %v779 = vld [vmem:[%s3] sm:$0xff]
          %v780 = vld [vmem:[%s3 + $0x8] sm:$0xff]
          %v781 = vld [vmem:[%s3 + $0x10] sm:$0xff]
          %v782 = vld [vmem:[%s3 + $0x18] sm:$0xff]
          %v783 = vld [vmem:[%s3 + $0x20] sm:$0xff]
          %v784 = vld [vmem:[%s3 + $0x28] sm:$0xff]
          %v785 = vld [vmem:[%s3 + $0x30] sm:$0x3]
          %v786 = vmul.f32 %v772, %v779
          %v787 = vmul.f32 %v773, %v780
          %v788 = vmul.f32 %v774, %v781
          %v789 = vmul.f32 %v775, %v782
          %v790 = vmul.f32 %v776, %v783
          %v791 = vmul.f32 %v777, %v784
          %v792 = vmul.f32 %v778, %v785
          %v793 = vld [vmem:[%s4] sm:$0xff]
          %v794 = vld [vmem:[%s4 + $0x8] sm:$0xff]
          %v795 = vld [vmem:[%s4 + $0x10] sm:$0xff]
          %v796 = vld [vmem:[%s4 + $0x18] sm:$0xff]
          %v797 = vld [vmem:[%s4 + $0x20] sm:$0xff]
          %v798 = vld [vmem:[%s4 + $0x28] sm:$0xff]
          %v799 = vld [vmem:[%s4 + $0x30] sm:$0x3]
          %v800 = vadd.f32 %v786, %v793
          %v801 = vadd.f32 %v787, %v794
          %v802 = vadd.f32 %v788, %v795
          %v803 = vadd.f32 %v789, %v796
          %v804 = vadd.f32 %v790, %v797
          %v805 = vadd.f32 %v791, %v798
          %v806 = vadd.f32 %v792, %v799
          %v807 = vmax.f32 %v800, 0.0
          %v808 = vmax.f32 %v801, 0.0
          %v809 = vmax.f32 %v802, 0.0
          %v810 = vmax.f32 %v803, 0.0
          %v811 = vmax.f32 %v804, 0.0
          %v812 = vmax.f32 %v805, 0.0
          %v813 = vmax.f32 %v806, 0.0
          %vm814 = vcmask 15360
          %815 = vst.msk [vmem:[%s377] sm:$0xff] %vm814, %v807
          %816 = vst.msk [vmem:[%s377 + $0x8] sm:$0xff] %vm814, %v808
          %817 = vst.msk [vmem:[%s377 + $0x10] sm:$0xff] %vm814, %v809
          %818 = vst.msk [vmem:[%s377 + $0x18] sm:$0xff] %vm814, %v810
          %819 = vst.msk [vmem:[%s377 + $0x20] sm:$0xff] %vm814, %v811
          %820 = vst.msk [vmem:[%s377 + $0x28] sm:$0xff] %vm814, %v812
          %vm821 = vcmask 9216
          %822 = vst.msk [vmem:[%s377 + $0x30] sm:$0x3] %vm821, %v813
        $region97: #{psp_head_forward.2} parent=76 // pred_fallthru
          _
        %p823 = scmp.lt.s32.totalorder %s21, 1
        %s824 = scalar_select %p823, %s21, 1
        %s825 = smul.addr %s824, 7
        %s826 = smul.addr %s825, 8
        %s827 = scalar_lea.vmem %s5, %s826
        // Predicated region
        $region98: #{psp_head_forward.2} parent=76 // pred_check
          %p828 = pneg %p177
        $region99: #{psp_head_forward.2} parent=76 // pred_check_branch
          %830 = sbr.rel (%p828) target = $region101
        $region100: #{psp_head_forward.2} parent=76 // pred_region
          _
        $region101: #{psp_head_forward.2} parent=76 // pred_fallthru
          _
      $region77: #{psp_head_forward.2} parent=5 // pred_fallthru
        _
      %p831 = scmp.le.s32.totalorder 2, %s11
      // Predicated region
      $region102: #{psp_head_forward.2} parent=5 // pred_check
        %p832 = pneg %p831
      $region103: #{psp_head_forward.2} parent=5 // pred_check_branch
        %834 = sbr.rel (%p832) target = $region105
      $region104: #{psp_head_forward.2} parent=5 // pred_region
        %s835 = ssub.s32 %s11, 2
        // Predicated region
        $region106: #{psp_head_forward.2} parent=104 // pred_check
          %p836 = pneg %p183
        $region107: #{psp_head_forward.2} parent=104 // pred_check_branch
          %838 = sbr.rel (%p836) target = $region109
        $region108: #{psp_head_forward.2} parent=104 // pred_region
          %p839 = scmp.lt.s32.totalorder %s24, 1
          %s840 = scalar_select %p839, %s24, 1
          %s841 = smul.addr %s840, 7
          %s842 = smul.addr %s841, 8
          %s843 = scalar_lea.vmem %s5, %s842
        $region109: #{psp_head_forward.2} parent=104 // pred_fallthru
          _
      $region105: #{psp_head_forward.2} parent=5 // pred_fallthru
        _
    $region6: #{psp_head_forward.2} parent=1 // loop_footer
      %s15 = sadd.s32 1, %s11
    $region7: #{psp_head_forward.2} parent=1 // loop_footer_branch
      %10 = sbr.rel target = $region3
    $region8: #{psp_head_forward.2} parent=1 // loop_exit
      _

// kernel: psp_head_forward.3
$region0: #{psp_head_forward.3}
  #allocation0 [shape = 'u32[]', space=smem, size = 0x4, offset = 0x4, fixed_abs, tag = 'smem constant byte address 0x4 - core index']
  #allocation1 [shape = 'u32[72,128]{1,0:T(1,128)}', space=vmem, size = 0x9000, scoped, tag = 'internal scratch']
  #allocation2 [shape = 'f32[3,8,16,2]{3,2,1,0:T(8,128)}', space=vmem, size = 0x30000, scoped, tag = 'scratch operand']
  %s0 = inlined_call_operand.vmem [shape: bf16[2,16,16,8], index: 0, kind: input, shape index: {}, may-alias: {0,1,2}]
  %s1 = inlined_call_operand.vmem [shape: bf16[2,16,16,8], index: 1, kind: input, shape index: {}, may-alias: {0,1,2}]
  %s2 = inlined_call_operand.vmem [shape: bf16[2,16,16,8], index: 2, kind: input, shape index: {}, may-alias: {0,1,2}]
  %s3 = inlined_call_operand.vmem [shape: bf16[3,8,6], index: 3, kind: input, shape index: {}]
  %s4 = inlined_call_operand.vmem [shape: f32[16,36], index: 4, kind: input, shape index: {}]
  %s5 = inlined_call_operand.vmem [shape: f32[2,16,36,2], index: 5, kind: input, shape index: {}]
  %s6 = inlined_call_operand.vmem [shape: f32[1,2], index: 6, kind: input, shape index: {}]
  %s7 = inlined_call_operand.vmem [shape: f32[1,2], index: 7, kind: input, shape index: {}]
  %s8 = inlined_call_operand.vmem [shape: f32[2,16,16,2], index: 8, kind: output, shape index: {}]
  %s9 = sld [smem:[#allocation0]]
  $region73: #{psp_head_forward.3} parent=0
    _
  %s11 = ssub.s32 1, %s9
  %s12 = scalar_select 0, %s11, %s9
  loop: start=0, step=1, limit=6
  $region2: #{psp_head_forward.3} parent=0 // loop_pre_header
    _
  $region3: #{psp_head_forward.3} parent=0 // loop_header
    %s14 = sphi 0, %s18
    %p15 = scmp.ge.s32.totalorder %s14, 6
    %s21 = sphi 0, %s40
    %s22 = sphi 0, %s36
    %s23 = sphi 0, %s32
    %s24 = sphi 0, %s21
    %s25 = sphi 0, %s22
    %s26 = sphi 0, %s23
    %s27 = sphi 0, %s24
    %s28 = sphi 0, %s25
    %s29 = sphi 0, %s26
    %s47 = sphi 0, %s49
    %s50 = sphi 0, %s47
    %s51 = sphi 0, %s50
    %s67 = sphi 0, %s51
    %s85 = sphi 0, %s87
    %s88 = sphi 0, %s85
    %s89 = sphi 0, %s88
    %s105 = sphi 0, %s89
    %s123 = sphi 0, %s125
    %s126 = sphi 0, %s123
    %s127 = sphi 0, %s126
    %s143 = sphi 0, %s127
    %s147 = sphi 0, %s147
    %s149 = sphi 0, %s147
    %s150 = sphi 0, %s149
    %s164 = sphi 0, %s150
    %s168 = sphi 0, %s168
    %s170 = sphi 0, %s168
    %s171 = sphi 0, %s170
    %s185 = sphi 0, %s171
    %s193 = sphi 0, %s195
    %s196 = sphi 0, %s193
    %s197 = sphi 0, %s196
    %s213 = sphi 0, %s197
    %s217 = sphi 0, %s217
    %s219 = sphi 0, %s217
    %s220 = sphi 0, %s219
    %s234 = sphi 0, %s220
    %s238 = sphi 0, %s238
    %s240 = sphi 0, %s238
    %s241 = sphi 0, %s240
    %s255 = sphi 0, %s241
    %s263 = sphi 0, %s265
    %s266 = sphi 0, %s263
    %s267 = sphi 0, %s266
    %s283 = sphi 0, %s267
  $region4: #{psp_head_forward.3} parent=0 // loop_header_branch
    %17 = sbr.rel (%p15) target = $region8
  $region5: #{psp_head_forward.3} parent=0 // loop_body
    %s19 = ssub.s32 %s14, 1
    %s20 = ssub.s32 %s14, 2
    %s30 = sadd.s32 1, %s23
    %p31 = scmp.ge.s32.totalorder %s30, 1
    %s32 = scalar_select %p31, 0, %s30
    %s33 = sadd.s32 1, %s22
    %s34 = scalar_select %p31, %s33, %s22
    %p35 = scmp.ge.s32.totalorder %s34, 2
    %s36 = scalar_select %p35, 0, %s34
    %s37 = sadd.s32 1, %s21
    %s38 = scalar_select %p35, %s37, %s21
    %p39 = scmp.ge.s32.totalorder %s38, 2
    %s40 = scalar_select %p39, 0, %s38
    %s41 = ssub.s32 %s21, %s40
    %s42 = ssub.s32 %s22, %s36
    %s43 = sor.u32 %s41, %s42
    %s44 = ssub.s32 %s23, %s32
    %s45 = sor.u32 %s43, %s44
    %p46 = scmp.eq.s32.totalorder %s45, 0
    %s48 = sadd.s32 %s47, 1
    %s49 = scalar_select %p46, %s47, %s48
    %p52 = pneg %p46
    %p53 = scmp.eq.s32.totalorder %s14, 3
    %p54 = por %p52, %p53
    %p55 = scmp.ne.s32.totalorder %s47, %s50
    %p56 = scmp.eq.s32.totalorder %s14, 0
    %p57 = por %p55, %p56
    %p58 = scmp.ne.s32.totalorder %s47, %s50
    %p59 = scmp.eq.s32.totalorder %s19, 3
    %p60 = por %p58, %p59
    %p61 = scmp.ne.s32.totalorder %s50, %s51
    %p62 = scmp.eq.s32.totalorder %s19, 0
    %p63 = por %p61, %p62
    %p64 = scmp.ne.s32.totalorder %s50, %s51
    %p65 = scmp.eq.s32.totalorder %s20, 3
    %p66 = por %p64, %p65
    %p68 = scmp.ne.s32.totalorder %s51, %s67
    %p69 = scmp.eq.s32.totalorder %s20, 0
    %p70 = por %p68, %p69
    %s71 = smul.u32 %s22, 8
    %s72 = ssub.s32 %s71, 1
    %p73 = scmp.gt.s32.totalorder %s72, 0
    %s74 = scalar_select %p73, %s72, 0
    %s75 = smul.u32 %s36, 8
    %s76 = ssub.s32 %s75, 1
    %p77 = scmp.gt.s32.totalorder %s76, 0
    %s78 = scalar_select %p77, %s76, 0
    %s79 = ssub.s32 %s21, %s40
    %s80 = ssub.s32 %s74, %s78
    %s81 = sor.u32 %s79, %s80
    %s82 = ssub.s32 %s23, %s32
    %s83 = sor.u32 %s81, %s82
    %p84 = scmp.eq.s32.totalorder %s83, 0
    %s86 = sadd.s32 %s85, 1
    %s87 = scalar_select %p84, %s85, %s86
    %p90 = pneg %p84
    %p91 = scmp.eq.s32.totalorder %s14, 3
    %p92 = por %p90, %p91
    %p93 = scmp.ne.s32.totalorder %s85, %s88
    %p94 = scmp.eq.s32.totalorder %s14, 0
    %p95 = por %p93, %p94
    %p96 = scmp.ne.s32.totalorder %s85, %s88
    %p97 = scmp.eq.s32.totalorder %s19, 3
    %p98 = por %p96, %p97
    %p99 = scmp.ne.s32.totalorder %s88, %s89
    %p100 = scmp.eq.s32.totalorder %s19, 0
    %p101 = por %p99, %p100
    %p102 = scmp.ne.s32.totalorder %s88, %s89
    %p103 = scmp.eq.s32.totalorder %s20, 3
    %p104 = por %p102, %p103
    %p106 = scmp.ne.s32.totalorder %s89, %s105
    %p107 = scmp.eq.s32.totalorder %s20, 0
    %p108 = por %p106, %p107
    %s109 = smul.u32 %s22, 8
    %s110 = sadd.s32 %s109, 8
    %p111 = scmp.lt.s32.totalorder %s110, 15
    %s112 = scalar_select %p111, %s110, 15
    %s113 = smul.u32 %s36, 8
    %s114 = sadd.s32 %s113, 8
    %p115 = scmp.lt.s32.totalorder %s114, 15
    %s116 = scalar_select %p115, %s114, 15
    %s117 = ssub.s32 %s21, %s40
    %s118 = ssub.s32 %s112, %s116
    %s119 = sor.u32 %s117, %s118
    %s120 = ssub.s32 %s23, %s32
    %s121 = sor.u32 %s119, %s120
    %p122 = scmp.eq.s32.totalorder %s121, 0
    %s124 = sadd.s32 %s123, 1
    %s125 = scalar_select %p122, %s123, %s124
    %p128 = pneg %p122
    %p129 = scmp.eq.s32.totalorder %s14, 3
    %p130 = por %p128, %p129
    %p131 = scmp.ne.s32.totalorder %s123, %s126
    %p132 = scmp.eq.s32.totalorder %s14, 0
    %p133 = por %p131, %p132
    %p134 = scmp.ne.s32.totalorder %s123, %s126
    %p135 = scmp.eq.s32.totalorder %s19, 3
    %p136 = por %p134, %p135
    %p137 = scmp.ne.s32.totalorder %s126, %s127
    %p138 = scmp.eq.s32.totalorder %s19, 0
    %p139 = por %p137, %p138
    %p140 = scmp.ne.s32.totalorder %s126, %s127
    %p141 = scmp.eq.s32.totalorder %s20, 3
    %p142 = por %p140, %p141
    %p144 = scmp.ne.s32.totalorder %s127, %s143
    %p145 = scmp.eq.s32.totalorder %s20, 0
    %p146 = por %p144, %p145
    %s148 = sadd.s32 %s147, 1
    %p151 = scmp.eq.s32.totalorder %s14, 3
    %p152 = scmp.ne.s32.totalorder %s147, %s149
    %p153 = scmp.eq.s32.totalorder %s14, 0
    %p154 = por %p152, %p153
    %p155 = scmp.ne.s32.totalorder %s147, %s149
    %p156 = scmp.eq.s32.totalorder %s19, 3
    %p157 = por %p155, %p156
    %p158 = scmp.ne.s32.totalorder %s149, %s150
    %p159 = scmp.eq.s32.totalorder %s19, 0
    %p160 = por %p158, %p159
    %p161 = scmp.ne.s32.totalorder %s149, %s150
    %p162 = scmp.eq.s32.totalorder %s20, 3
    %p163 = por %p161, %p162
    %p165 = scmp.ne.s32.totalorder %s150, %s164
    %p166 = scmp.eq.s32.totalorder %s20, 0
    %p167 = por %p165, %p166
    %s169 = sadd.s32 %s168, 1
    %p172 = scmp.eq.s32.totalorder %s14, 3
    %p173 = scmp.ne.s32.totalorder %s168, %s170
    %p174 = scmp.eq.s32.totalorder %s14, 0
    %p175 = por %p173, %p174
    %p176 = scmp.ne.s32.totalorder %s168, %s170
    %p177 = scmp.eq.s32.totalorder %s19, 3
    %p178 = por %p176, %p177
    %p179 = scmp.ne.s32.totalorder %s170, %s171
    %p180 = scmp.eq.s32.totalorder %s19, 0
    %p181 = por %p179, %p180
    %p182 = scmp.ne.s32.totalorder %s170, %s171
    %p183 = scmp.eq.s32.totalorder %s20, 3
    %p184 = por %p182, %p183
    %p186 = scmp.ne.s32.totalorder %s171, %s185
    %p187 = scmp.eq.s32.totalorder %s20, 0
    %p188 = por %p186, %p187
    %s189 = ssub.s32 %s21, %s40
    %s190 = ssub.s32 %s22, %s36
    %s191 = sor.u32 %s189, %s190
    %p192 = scmp.eq.s32.totalorder %s191, 0
    %s194 = sadd.s32 %s193, 1
    %s195 = scalar_select %p192, %s193, %s194
    %p198 = pneg %p192
    %p199 = scmp.eq.s32.totalorder %s14, 3
    %p200 = por %p198, %p199
    %p201 = scmp.ne.s32.totalorder %s193, %s196
    %p202 = scmp.eq.s32.totalorder %s14, 0
    %p203 = por %p201, %p202
    %p204 = scmp.ne.s32.totalorder %s193, %s196
    %p205 = scmp.eq.s32.totalorder %s19, 3
    %p206 = por %p204, %p205
    %p207 = scmp.ne.s32.totalorder %s196, %s197
    %p208 = scmp.eq.s32.totalorder %s19, 0
    %p209 = por %p207, %p208
    %p210 = scmp.ne.s32.totalorder %s196, %s197
    %p211 = scmp.eq.s32.totalorder %s20, 3
    %p212 = por %p210, %p211
    %p214 = scmp.ne.s32.totalorder %s197, %s213
    %p215 = scmp.eq.s32.totalorder %s20, 0
    %p216 = por %p214, %p215
    %s218 = sadd.s32 %s217, 1
    %p221 = scmp.eq.s32.totalorder %s14, 3
    %p222 = scmp.ne.s32.totalorder %s217, %s219
    %p223 = scmp.eq.s32.totalorder %s14, 0
    %p224 = por %p222, %p223
    %p225 = scmp.ne.s32.totalorder %s217, %s219
    %p226 = scmp.eq.s32.totalorder %s19, 3
    %p227 = por %p225, %p226
    %p228 = scmp.ne.s32.totalorder %s219, %s220
    %p229 = scmp.eq.s32.totalorder %s19, 0
    %p230 = por %p228, %p229
    %p231 = scmp.ne.s32.totalorder %s219, %s220
    %p232 = scmp.eq.s32.totalorder %s20, 3
    %p233 = por %p231, %p232
    %p235 = scmp.ne.s32.totalorder %s220, %s234
    %p236 = scmp.eq.s32.totalorder %s20, 0
    %p237 = por %p235, %p236
    %s239 = sadd.s32 %s238, 1
    %p242 = scmp.eq.s32.totalorder %s14, 3
    %p243 = scmp.ne.s32.totalorder %s238, %s240
    %p244 = scmp.eq.s32.totalorder %s14, 0
    %p245 = por %p243, %p244
    %p246 = scmp.ne.s32.totalorder %s238, %s240
    %p247 = scmp.eq.s32.totalorder %s19, 3
    %p248 = por %p246, %p247
    %p249 = scmp.ne.s32.totalorder %s240, %s241
    %p250 = scmp.eq.s32.totalorder %s19, 0
    %p251 = por %p249, %p250
    %p252 = scmp.ne.s32.totalorder %s240, %s241
    %p253 = scmp.eq.s32.totalorder %s20, 3
    %p254 = por %p252, %p253
    %p256 = scmp.ne.s32.totalorder %s241, %s255
    %p257 = scmp.eq.s32.totalorder %s20, 0
    %p258 = por %p256, %p257
    %s259 = ssub.s32 %s21, %s40
    %s260 = ssub.s32 %s22, %s36
    %s261 = sor.u32 %s259, %s260
    %p262 = scmp.eq.s32.totalorder %s261, 0
    %s264 = sadd.s32 %s263, 1
    %s265 = scalar_select %p262, %s263, %s264
    %p268 = pneg %p262
    %p269 = scmp.eq.s32.totalorder %s14, 3
    %p270 = por %p268, %p269
    %p271 = scmp.ne.s32.totalorder %s263, %s266
    %p272 = scmp.eq.s32.totalorder %s14, 0
    %p273 = por %p271, %p272
    %p274 = scmp.ne.s32.totalorder %s263, %s266
    %p275 = scmp.eq.s32.totalorder %s19, 3
    %p276 = por %p274, %p275
    %p277 = scmp.ne.s32.totalorder %s266, %s267
    %p278 = scmp.eq.s32.totalorder %s19, 0
    %p279 = por %p277, %p278
    %p280 = scmp.ne.s32.totalorder %s266, %s267
    %p281 = scmp.eq.s32.totalorder %s20, 3
    %p282 = por %p280, %p281
    %p284 = scmp.ne.s32.totalorder %s267, %s283
    %p285 = scmp.eq.s32.totalorder %s20, 0
    %p286 = por %p284, %p285
    %p287 = scmp.le.s32.totalorder 1, %s14
    %p288 = scmp.lt.s32.totalorder %s14, 5
    %p289 = pnand %p287, %p288
    %p290 = pneg %p289
    // Predicated region
    $region9: #{psp_head_forward.3} parent=5 // pred_check
      _
    $region10: #{psp_head_forward.3} parent=5 // pred_check_branch
      %292 = sbr.rel (%p289) target = $region12
    $region11: #{psp_head_forward.3} parent=5 // pred_region
      %s293 = ssub.s32 %s14, 1
      // Predicated region
      $region13: #{psp_head_forward.3} parent=11 // pred_check
        %p294 = pneg %p160
      $region14: #{psp_head_forward.3} parent=11 // pred_check_branch
        %296 = sbr.rel (%p294) target = $region16
      $region15: #{psp_head_forward.3} parent=11 // pred_region
        _
      $region16: #{psp_head_forward.3} parent=11 // pred_fallthru
        _
      // Predicated region
      $region17: #{psp_head_forward.3} parent=11 // pred_check
        %p297 = pneg %p181
      $region18: #{psp_head_forward.3} parent=11 // pred_check_branch
        %299 = sbr.rel (%p297) target = $region20
      $region19: #{psp_head_forward.3} parent=11 // pred_region
        _
      $region20: #{psp_head_forward.3} parent=11 // pred_fallthru
        _
      // Predicated region
      $region21: #{psp_head_forward.3} parent=11 // pred_check
        %p300 = pneg %p230
      $region22: #{psp_head_forward.3} parent=11 // pred_check_branch
        %302 = sbr.rel (%p300) target = $region24
      $region23: #{psp_head_forward.3} parent=11 // pred_region
        _
      $region24: #{psp_head_forward.3} parent=11 // pred_fallthru
        _
      // Predicated region
      $region25: #{psp_head_forward.3} parent=11 // pred_check
        %p303 = pneg %p251
      $region26: #{psp_head_forward.3} parent=11 // pred_check_branch
        %305 = sbr.rel (%p303) target = $region28
      $region27: #{psp_head_forward.3} parent=11 // pred_region
        _
      $region28: #{psp_head_forward.3} parent=11 // pred_fallthru
        _
    $region12: #{psp_head_forward.3} parent=5 // pred_fallthru
      _
    %p306 = scmp.lt.s32.totalorder %s14, 4
    // Predicated region
    $region29: #{psp_head_forward.3} parent=5 // pred_check
      %p307 = pneg %p306
    $region30: #{psp_head_forward.3} parent=5 // pred_check_branch
      %309 = sbr.rel (%p307) target = $region32
    $region31: #{psp_head_forward.3} parent=5 // pred_region
      // Predicated region
      $region33: #{psp_head_forward.3} parent=31 // pred_check
        %p310 = pneg %p57
      $region34: #{psp_head_forward.3} parent=31 // pred_check_branch
        %312 = sbr.rel (%p310) target = $region36
      $region35: #{psp_head_forward.3} parent=31 // pred_region
        %s313 = smul.u32 8, %s22
        %p314 = scmp.lt.s32.totalorder %s21, 1
        %s315 = scalar_select %p314, %s21, 1
        %p316 = scmp.lt.s32.totalorder %s313, 15
        %s317 = scalar_select %p316, %s313, 15
        %p318 = scmp.lt.s32.totalorder %s23, 0
        %s319 = scalar_select %p318, %s23, 0
        %s320 = smul.addr %s317, 2
        %s321 = sadd.s32 %s319, %s320
        %s322 = smul.addr %s315, 32
        %s323 = sadd.s32 %s321, %s322
        %s324 = smul.addr %s323, 4
        %s325 = scalar_lea.vmem %s0, %s324
        %s326 = smul.u32 8, %s22
      $region36: #{psp_head_forward.3} parent=31 // pred_fallthru
        _
      // Predicated region
      $region37: #{psp_head_forward.3} parent=31 // pred_check
        %p327 = pneg %p95
      $region38: #{psp_head_forward.3} parent=31 // pred_check_branch
        %329 = sbr.rel (%p327) target = $region40
      $region39: #{psp_head_forward.3} parent=31 // pred_region
        %s330 = smul.u32 %s22, 8
        %s331 = ssub.s32 %s330, 1
        %p332 = scmp.gt.s32.totalorder %s331, 0
        %s333 = scalar_select %p332, %s331, 0
        %p334 = scmp.lt.s32.totalorder %s21, 1
        %s335 = scalar_select %p334, %s21, 1
        %p336 = scmp.lt.s32.totalorder %s333, 15
        %s337 = scalar_select %p336, %s333, 15
        %p338 = scmp.lt.s32.totalorder %s23, 0
        %s339 = scalar_select %p338, %s23, 0
        %s340 = smul.addr %s337, 2
        %s341 = sadd.s32 %s339, %s340
        %s342 = smul.addr %s335, 32
        %s343 = sadd.s32 %s341, %s342
        %s344 = smul.addr %s343, 4
        %s345 = scalar_lea.vmem %s1, %s344
        %s346 = smul.u32 %s22, 8
        %s347 = ssub.s32 %s346, 1
        %p348 = scmp.gt.s32.totalorder %s347, 0
        %s349 = scalar_select %p348, %s347, 0
      $region40: #{psp_head_forward.3} parent=31 // pred_fallthru
        _
      // Predicated region
      $region41: #{psp_head_forward.3} parent=31 // pred_check
        %p350 = pneg %p133
      $region42: #{psp_head_forward.3} parent=31 // pred_check_branch
        %352 = sbr.rel (%p350) target = $region44
      $region43: #{psp_head_forward.3} parent=31 // pred_region
        %s353 = smul.u32 %s22, 8
        %s354 = sadd.s32 %s353, 8
        %p355 = scmp.lt.s32.totalorder %s354, 15
        %s356 = scalar_select %p355, %s354, 15
        %p357 = scmp.lt.s32.totalorder %s21, 1
        %s358 = scalar_select %p357, %s21, 1
        %p359 = scmp.lt.s32.totalorder %s356, 15
        %s360 = scalar_select %p359, %s356, 15
        %p361 = scmp.lt.s32.totalorder %s23, 0
        %s362 = scalar_select %p361, %s23, 0
        %s363 = smul.addr %s360, 2
        %s364 = sadd.s32 %s362, %s363
        %s365 = smul.addr %s358, 32
        %s366 = sadd.s32 %s364, %s365
        %s367 = smul.addr %s366, 4
        %s368 = scalar_lea.vmem %s2, %s367
        %s369 = smul.u32 %s22, 8
        %s370 = sadd.s32 %s369, 8
        %p371 = scmp.lt.s32.totalorder %s370, 15
        %s372 = scalar_select %p371, %s370, 15
      $region44: #{psp_head_forward.3} parent=31 // pred_fallthru
        _
      // Predicated region
      $region45: #{psp_head_forward.3} parent=31 // pred_check
        %p373 = pneg %p203
      $region46: #{psp_head_forward.3} parent=31 // pred_check_branch
        %375 = sbr.rel (%p373) target = $region48
      $region47: #{psp_head_forward.3} parent=31 // pred_region
        %s376 = smul.u32 8, %s22
        %p377 = scmp.lt.s32.totalorder %s21, 1
        %s378 = scalar_select %p377, %s21, 1
        %p379 = scmp.lt.s32.totalorder %s376, 15
        %s380 = scalar_select %p379, %s376, 15
        %s381 = smul.addr %s380, 5
        %s382 = smul.addr %s378, 80
        %s383 = sadd.s32 %s381, %s382
        %s384 = smul.addr %s383, 8
        %s385 = scalar_lea.vmem %s5, %s384
        %s386 = smul.u32 8, %s22
      $region48: #{psp_head_forward.3} parent=31 // pred_fallthru
        _
    $region32: #{psp_head_forward.3} parent=5 // pred_fallthru
      _
    %p387 = scmp.le.s32.totalorder 1, %s14
    %p388 = scmp.lt.s32.totalorder %s14, 5
    %p389 = pnand %p387, %p388
    %p390 = pneg %p389
    // Predicated region
    $region49: #{psp_head_forward.3} parent=5 // pred_check
      _
    $region50: #{psp_head_forward.3} parent=5 // pred_check_branch
      %392 = sbr.rel (%p389) target = $region52
    $region51: #{psp_head_forward.3} parent=5 // pred_region
      %s393 = ssub.s32 %s14, 1
      %s394 = smul.u32 8, %s25
      %p395 = scmp.lt.s32.totalorder %s24, 1
      %s396 = scalar_select %p395, %s24, 1
      %p397 = scmp.lt.s32.totalorder %s394, 15
      %s398 = scalar_select %p397, %s394, 15
      %p399 = scmp.lt.s32.totalorder %s26, 0
      %s400 = scalar_select %p399, %s26, 0
      %s401 = smul.addr %s398, 2
      %s402 = sadd.s32 %s400, %s401
      %s403 = smul.addr %s396, 32
      %s404 = sadd.s32 %s402, %s403
      %s405 = smul.addr %s404, 4
      %s406 = scalar_lea.vmem %s0, %s405
      %p407 = pneg %p63
      %p408 = pneg %p60
      %s409 = smul.u32 %s25, 8
      %s410 = ssub.s32 %s409, 1
      %p411 = scmp.gt.s32.totalorder %s410, 0
      %s412 = scalar_select %p411, %s410, 0
      %p413 = scmp.lt.s32.totalorder %s24, 1
      %s414 = scalar_select %p413, %s24, 1
      %p415 = scmp.lt.s32.totalorder %s412, 15
      %s416 = scalar_select %p415, %s412, 15
      %p417 = scmp.lt.s32.totalorder %s26, 0
      %s418 = scalar_select %p417, %s26, 0
      %s419 = smul.addr %s416, 2
      %s420 = sadd.s32 %s418, %s419
      %s421 = smul.addr %s414, 32
      %s422 = sadd.s32 %s420, %s421
      %s423 = smul.addr %s422, 4
      %s424 = scalar_lea.vmem %s1, %s423
      %p425 = pneg %p101
      %p426 = pneg %p98
      %s427 = smul.u32 %s25, 8
      %s428 = sadd.s32 %s427, 8
      %p429 = scmp.lt.s32.totalorder %s428, 15
      %s430 = scalar_select %p429, %s428, 15
      %p431 = scmp.lt.s32.totalorder %s24, 1
      %s432 = scalar_select %p431, %s24, 1
      %p433 = scmp.lt.s32.totalorder %s430, 15
      %s434 = scalar_select %p433, %s430, 15
      %p435 = scmp.lt.s32.totalorder %s26, 0
      %s436 = scalar_select %p435, %s26, 0
      %s437 = smul.addr %s434, 2
      %s438 = sadd.s32 %s436, %s437
      %s439 = smul.addr %s432, 32
      %s440 = sadd.s32 %s438, %s439
      %s441 = smul.addr %s440, 4
      %s442 = scalar_lea.vmem %s2, %s441
      %p443 = pneg %p139
      %p444 = pneg %p136
      %p445 = pneg %p160
      %p446 = pneg %p157
      %p447 = pneg %p181
      %p448 = pneg %p178
      %s449 = smul.u32 8, %s25
      %p450 = scmp.lt.s32.totalorder %s24, 1
      %s451 = scalar_select %p450, %s24, 1
      %p452 = scmp.lt.s32.totalorder %s449, 15
      %s453 = scalar_select %p452, %s449, 15
      %s454 = smul.addr %s453, 5
      %s455 = smul.addr %s451, 80
      %s456 = sadd.s32 %s454, %s455
      %s457 = smul.addr %s456, 8
      %s458 = scalar_lea.vmem %s5, %s457
      %p459 = pneg %p209
      %p460 = pneg %p206
      %p461 = pneg %p230
      %p462 = pneg %p227
      %p463 = pneg %p251
      %p464 = pneg %p248
      %p465 = pneg %p279
      %p466 = pneg %p276
      %s467 = smul.u32 8, %s25
      %p468 = scmp.lt.s32.totalorder %s24, 1
      %s469 = scalar_select %p468, %s24, 1
      %p470 = scmp.lt.s32.totalorder %s467, 15
      %s471 = scalar_select %p470, %s467, 15
      %s472 = smul.addr %s471, 2
      %s473 = smul.addr %s469, 32
      %s474 = sadd.s32 %s472, %s473
      %s475 = smul.addr %s474, 8
      %s476 = scalar_lea.vmem %s8, %s475
      %s477 = smul.u32 8, %s25
      %p478 = scmp.lt.s32.totalorder %s24, 1
      %s479 = scalar_select %p478, %s24, 1
      %p480 = scmp.lt.s32.totalorder %s477, 15
      %s481 = scalar_select %p480, %s477, 15
      %p482 = scmp.lt.s32.totalorder %s26, 0
      %s483 = scalar_select %p482, %s26, 0
      %s484 = smul.addr %s481, 2
      %s485 = sadd.s32 %s483, %s484
      %s486 = smul.addr %s479, 32
      %s487 = sadd.s32 %s485, %s486
      %s488 = smul.addr %s487, 4
      %s489 = scalar_lea.vmem %s0, %s488
      %s490 = smul.u32 8, %s25
      %s491 = smul.u32 %s25, 8
      %s492 = ssub.s32 %s491, 1
      %p493 = scmp.gt.s32.totalorder %s492, 0
      %s494 = scalar_select %p493, %s492, 0
      %p495 = scmp.lt.s32.totalorder %s24, 1
      %s496 = scalar_select %p495, %s24, 1
      %p497 = scmp.lt.s32.totalorder %s494, 15
      %s498 = scalar_select %p497, %s494, 15
      %p499 = scmp.lt.s32.totalorder %s26, 0
      %s500 = scalar_select %p499, %s26, 0
      %s501 = smul.addr %s498, 2
      %s502 = sadd.s32 %s500, %s501
      %s503 = smul.addr %s496, 32
      %s504 = sadd.s32 %s502, %s503
      %s505 = smul.addr %s504, 4
      %s506 = scalar_lea.vmem %s1, %s505
      %s507 = smul.u32 %s25, 8
      %s508 = ssub.s32 %s507, 1
      %p509 = scmp.gt.s32.totalorder %s508, 0
      %s510 = scalar_select %p509, %s508, 0
      %s511 = smul.u32 %s25, 8
      %s512 = sadd.s32 %s511, 8
      %p513 = scmp.lt.s32.totalorder %s512, 15
      %s514 = scalar_select %p513, %s512, 15
      %p515 = scmp.lt.s32.totalorder %s24, 1
      %s516 = scalar_select %p515, %s24, 1
      %p517 = scmp.lt.s32.totalorder %s514, 15
      %s518 = scalar_select %p517, %s514, 15
      %p519 = scmp.lt.s32.totalorder %s26, 0
      %s520 = scalar_select %p519, %s26, 0
      %s521 = smul.addr %s518, 2
      %s522 = sadd.s32 %s520, %s521
      %s523 = smul.addr %s516, 32
      %s524 = sadd.s32 %s522, %s523
      %s525 = smul.addr %s524, 4
      %s526 = scalar_lea.vmem %s2, %s525
      %s527 = smul.u32 %s25, 8
      %s528 = sadd.s32 %s527, 8
      %p529 = scmp.lt.s32.totalorder %s528, 15
      %s530 = scalar_select %p529, %s528, 15
      %s531 = smul.u32 8, %s25
      %p532 = scmp.lt.s32.totalorder %s24, 1
      %s533 = scalar_select %p532, %s24, 1
      %p534 = scmp.lt.s32.totalorder %s531, 15
      %s535 = scalar_select %p534, %s531, 15
      %s536 = smul.addr %s535, 5
      %s537 = smul.addr %s533, 80
      %s538 = sadd.s32 %s536, %s537
      %s539 = smul.addr %s538, 8
      %s540 = scalar_lea.vmem %s5, %s539
      %s541 = smul.u32 8, %s25
      %s542 = smul.u32 8, %s25
      %p543 = scmp.lt.s32.totalorder %s24, 1
      %s544 = scalar_select %p543, %s24, 1
      %p545 = scmp.lt.s32.totalorder %s542, 15
      %s546 = scalar_select %p545, %s542, 15
      %s547 = smul.addr %s546, 2
      %s548 = smul.addr %s544, 32
      %s549 = sadd.s32 %s547, %s548
      %s550 = smul.addr %s549, 8
      %s551 = scalar_lea.vmem %s8, %s550
      %s552 = smul.u32 8, %s25
      %p554 = scmp.eq.s32.totalorder %s26, 0
      // Predicated region
      $region53: #{psp_head_forward.3} parent=51 // pred_check
        %p555 = pneg %p554
      $region54: #{psp_head_forward.3} parent=51 // pred_check_branch
        %557 = sbr.rel (%p555) target = $region56
      $region55: #{psp_head_forward.3} parent=51 // pred_region
        %vm558 = vcmask 15360
        %559 = vst.msk [vmem:[#allocation2] sm:$0xff] %vm558, 0.0
        %560 = vst.msk [vmem:[#allocation2 + $0x8] sm:$0xff] %vm558, 0.0
        %561 = vst.msk [vmem:[#allocation2 + $0x10] sm:$0xff] %vm558, 0.0
        %562 = vst.msk [vmem:[#allocation2 + $0x18] sm:$0xff] %vm558, 0.0
        %563 = vst.msk [vmem:[#allocation2 + $0x20] sm:$0xff] %vm558, 0.0
        %564 = vst.msk [vmem:[#allocation2 + $0x28] sm:$0xff] %vm558, 0.0
        %565 = vst.msk [vmem:[#allocation2 + $0x30] sm:$0xff] %vm558, 0.0
        %566 = vst.msk [vmem:[#allocation2 + $0x38] sm:$0xff] %vm558, 0.0
        %567 = vst.msk [vmem:[#allocation2 + $0x40] sm:$0xff] %vm558, 0.0
        %568 = vst.msk [vmem:[#allocation2 + $0x48] sm:$0xff] %vm558, 0.0
        %569 = vst.msk [vmem:[#allocation2 + $0x50] sm:$0xff] %vm558, 0.0
        %570 = vst.msk [vmem:[#allocation2 + $0x58] sm:$0xff] %vm558, 0.0
        %571 = vst.msk [vmem:[#allocation2 + $0x60] sm:$0xff] %vm558, 0.0
        %572 = vst.msk [vmem:[#allocation2 + $0x68] sm:$0xff] %vm558, 0.0
        %573 = vst.msk [vmem:[#allocation2 + $0x70] sm:$0xff] %vm558, 0.0
        %574 = vst.msk [vmem:[#allocation2 + $0x78] sm:$0xff] %vm558, 0.0
        %575 = vst.msk [vmem:[#allocation2 + $0x80] sm:$0xff] %vm558, 0.0
        %576 = vst.msk [vmem:[#allocation2 + $0x88] sm:$0xff] %vm558, 0.0
        %577 = vst.msk [vmem:[#allocation2 + $0x90] sm:$0xff] %vm558, 0.0
        %578 = vst.msk [vmem:[#allocation2 + $0x98] sm:$0xff] %vm558, 0.0
        %579 = vst.msk [vmem:[#allocation2 + $0xa0] sm:$0xff] %vm558, 0.0
        %580 = vst.msk [vmem:[#allocation2 + $0xa8] sm:$0xff] %vm558, 0.0
        %581 = vst.msk [vmem:[#allocation2 + $0xb0] sm:$0xff] %vm558, 0.0
        %582 = vst.msk [vmem:[#allocation2 + $0xb8] sm:$0xff] %vm558, 0.0
        %583 = vst.msk [vmem:[#allocation2 + $0xc0] sm:$0xff] %vm558, 0.0
        %584 = vst.msk [vmem:[#allocation2 + $0xc8] sm:$0xff] %vm558, 0.0
        %585 = vst.msk [vmem:[#allocation2 + $0xd0] sm:$0xff] %vm558, 0.0
        %586 = vst.msk [vmem:[#allocation2 + $0xd8] sm:$0xff] %vm558, 0.0
        %587 = vst.msk [vmem:[#allocation2 + $0xe0] sm:$0xff] %vm558, 0.0
        %588 = vst.msk [vmem:[#allocation2 + $0xe8] sm:$0xff] %vm558, 0.0
        %589 = vst.msk [vmem:[#allocation2 + $0xf0] sm:$0xff] %vm558, 0.0
        %590 = vst.msk [vmem:[#allocation2 + $0xf8] sm:$0xff] %vm558, 0.0
        %591 = vst.msk [vmem:[#allocation2 + $0x100] sm:$0xff] %vm558, 0.0
        %592 = vst.msk [vmem:[#allocation2 + $0x108] sm:$0xff] %vm558, 0.0
        %593 = vst.msk [vmem:[#allocation2 + $0x110] sm:$0xff] %vm558, 0.0
        %594 = vst.msk [vmem:[#allocation2 + $0x118] sm:$0xff] %vm558, 0.0
        %595 = vst.msk [vmem:[#allocation2 + $0x120] sm:$0xff] %vm558, 0.0
        %596 = vst.msk [vmem:[#allocation2 + $0x128] sm:$0xff] %vm558, 0.0
        %597 = vst.msk [vmem:[#allocation2 + $0x130] sm:$0xff] %vm558, 0.0
        %598 = vst.msk [vmem:[#allocation2 + $0x138] sm:$0xff] %vm558, 0.0
        %599 = vst.msk [vmem:[#allocation2 + $0x140] sm:$0xff] %vm558, 0.0
        %600 = vst.msk [vmem:[#allocation2 + $0x148] sm:$0xff] %vm558, 0.0
        %601 = vst.msk [vmem:[#allocation2 + $0x150] sm:$0xff] %vm558, 0.0
        %602 = vst.msk [vmem:[#allocation2 + $0x158] sm:$0xff] %vm558, 0.0
        %603 = vst.msk [vmem:[#allocation2 + $0x160] sm:$0xff] %vm558, 0.0
        %604 = vst.msk [vmem:[#allocation2 + $0x168] sm:$0xff] %vm558, 0.0
        %605 = vst.msk [vmem:[#allocation2 + $0x170] sm:$0xff] %vm558, 0.0
        %606 = vst.msk [vmem:[#allocation2 + $0x178] sm:$0xff] %vm558, 0.0
      $region56: #{psp_head_forward.3} parent=51 // pred_fallthru
        _
      %v607 = vld [vmem:[%s489] sm:$0xf]
      %v608 = vld [vmem:[%s489 + $0x4] sm:$0xf]
      %v609 = vld [vmem:[%s489 + $0x8] sm:$0xf]
      %v610 = vld [vmem:[%s489 + $0xc] sm:$0xf]
      %v611 = vld [vmem:[%s489 + $0x10] sm:$0xf]
      %v612 = vld [vmem:[%s489 + $0x14] sm:$0xf]
      %v613 = vld [vmem:[%s489 + $0x18] sm:$0xf]
      %v614 = vld [vmem:[%s489 + $0x1c] sm:$0xf]
      %v615 = vld [vmem:[%s489 + $0x20] sm:$0xf]
      %v616 = vld [vmem:[%s489 + $0x24] sm:$0xf]
      %v617 = vld [vmem:[%s489 + $0x28] sm:$0xf]
      %v618 = vld [vmem:[%s489 + $0x2c] sm:$0xf]
      %v619 = vld [vmem:[%s489 + $0x30] sm:$0xf]
      %v620 = vld [vmem:[%s489 + $0x34] sm:$0xf]
      %v621 = vld [vmem:[%s489 + $0x38] sm:$0xf]
      %v622 = vld [vmem:[%s489 + $0x3c] sm:$0xf]
      %v623 = vld [vmem:[%s506] sm:$0xf]
      %v624 = vld [vmem:[%s506 + $0x4] sm:$0xf]
      %v625 = vld [vmem:[%s526] sm:$0xf]
      %v626 = vld [vmem:[%s526 + $0x4] sm:$0xf]
      %p627 = scmp.gt.s32.totalorder %s25, 0
      %s628 = scalar_select %p627, 1, 0
      %v629 = vstv %s628
      %vm630 = vcmp.eq.s32.totalorder %v629, 1
      %v631 = vsel %vm630, %v623, 0
      %v632 = vsel %vm630, %v624, 0
      %p633 = scmp.lt.s32.totalorder %s25, 1
      %s634 = scalar_select %p633, 1, 0
      %v635 = vstv %s634
      %vm636 = vcmp.eq.s32.totalorder %v635, 1
      %v637 = vsel %vm636, %v625, 0
      %v638 = vsel %vm636, %v626, 0
      %v639 = vld [vmem:[%s3] sm:$0xf]
      %s640 = scalar_lea.vmem %s3, 4
      %v641 = vld [vmem:[%s640] sm:$0xf]
      %v658 = vunpack.c.l.b16 %v607
      %v659 = vunpack.c.l.b16 %v608
      %v660 = vunpack.c.l.b16 %v609
      %v661 = vunpack.c.l.b16 %v610
      %v662 = vunpack.c.l.b16 %v611
      %v663 = vunpack.c.l.b16 %v612
      %v664 = vunpack.c.l.b16 %v613
      %v665 = vunpack.c.l.b16 %v614
      %v666 = vunpack.c.l.b16 %v615
      %v667 = vunpack.c.l.b16 %v616
      %v668 = vunpack.c.l.b16 %v617
      %v669 = vunpack.c.l.b16 %v618
      %v670 = vunpack.c.l.b16 %v619
      %v671 = vunpack.c.l.b16 %v620
      %v672 = vunpack.c.l.b16 %v621
      %v673 = vunpack.c.l.b16 %v622
      %v674 = vpack.c.b16 %v659, %v658
      %v675 = vpack.c.b16 %v661, %v660
      %v676 = vpack.c.b16 %v663, %v662
      %v677 = vpack.c.b16 %v665, %v664
      %v678 = vpack.c.b16 %v667, %v666
      %v679 = vpack.c.b16 %v669, %v668
      %v680 = vpack.c.b16 %v671, %v670
      %v681 = vpack.c.b16 %v673, %v672
      %vm682 = vcmask 64512
      %v684 = vsel %vm682, %v674, 0
      %v687 = vsel %vm682, %v675, 0
      %v690 = vsel %vm682, %v676, 0
      %v693 = vsel %vm682, %v677, 0
      %v696 = vsel %vm682, %v678, 0
      %v699 = vsel %vm682, %v679, 0
      %v702 = vsel %vm682, %v680, 0
      %v705 = vsel %vm682, %v681, 0
      %vm707 = vcmask 1043456
      %v709 = vsel %vm707, %v641, 0
      %711 = vmatpush.bf16.msra.mxu0 0
      %712 = vmatpush.bf16.msra.mxu0 0
      %713 = vmatpush.bf16.msra.mxu0 0
      %714 = vmatpush.bf16.msra.mxu0 0
      %715 = vmatpush.bf16.msra.mxu0 0
      %716 = vmatpush.bf16.msra.mxu0 0
      %717 = vmatpush.bf16.msra.mxu0 0
      %718 = vmatpush.bf16.msra.mxu0 %v709
      %719 = vmatmul.bf16.gmra.mxu0 %v684
      %v720 = vpop.f32.mrf.mxu0
      %v721 = vadd.f32 0.0, %v720
      %v722 = vpop.f32.mrf.mxu0
      %v723 = vadd.f32 0.0, %v722
      %724 = vmatmul.bf16.gmra.mxu0 %v687
      %v725 = vpop.f32.mrf.mxu0
      %v726 = vadd.f32 0.0, %v725
      %v727 = vpop.f32.mrf.mxu0
      %v728 = vadd.f32 0.0, %v727
      %729 = vmatmul.bf16.gmra.mxu0 %v690
      %v730 = vpop.f32.mrf.mxu0
      %v731 = vadd.f32 0.0, %v730
      %v732 = vpop.f32.mrf.mxu0
      %v733 = vadd.f32 0.0, %v732
      %734 = vmatmul.bf16.gmra.mxu0 %v693
      %v735 = vpop.f32.mrf.mxu0
      %v736 = vadd.f32 0.0, %v735
      %v737 = vpop.f32.mrf.mxu0
      %v738 = vadd.f32 0.0, %v737
      %739 = vmatmul.bf16.gmra.mxu0 %v696
      %v740 = vpop.f32.mrf.mxu0
      %v741 = vadd.f32 0.0, %v740
      %v742 = vpop.f32.mrf.mxu0
      %v743 = vadd.f32 0.0, %v742
      %744 = vmatmul.bf16.gmra.mxu0 %v699
      %v745 = vpop.f32.mrf.mxu0
      %v746 = vadd.f32 0.0, %v745
      %v747 = vpop.f32.mrf.mxu0
      %v748 = vadd.f32 0.0, %v747
      %749 = vmatmul.bf16.gmra.mxu0 %v702
      %v750 = vpop.f32.mrf.mxu0
      %v751 = vadd.f32 0.0, %v750
      %v752 = vpop.f32.mrf.mxu0
      %v753 = vadd.f32 0.0, %v752
      %754 = vmatmul.bf16.gmra.mxu0 %v705
      %v755 = vpop.f32.mrf.mxu0
      %v756 = vadd.f32 0.0, %v755
      %v757 = vpop.f32.mrf.mxu0
      %v758 = vadd.f32 0.0, %v757
      %759 = vdwg.mxu0
      %v762 = vunpack.c.l.b16 %v631
      %v763 = vunpack.c.l.b16 %v632
      %v764 = vpack.c.b16 %v763, %v762
      %v766 = vsel %vm682, %v764, 0
      %v769 = vsel %vm707, %v639, 0
      %771 = vmatpush.bf16.msra.mxu0 0
      %772 = vmatpush.bf16.msra.mxu0 0
      %773 = vmatpush.bf16.msra.mxu0 0
      %774 = vmatpush.bf16.msra.mxu0 0
      %775 = vmatpush.bf16.msra.mxu0 0
      %776 = vmatpush.bf16.msra.mxu0 0
      %777 = vmatpush.bf16.msra.mxu0 0
      %778 = vmatpush.bf16.msra.mxu0 %v769
      %779 = vmatmul.bf16.gmra.mxu0 %v766
      %v780 = vpop.f32.mrf.mxu0
      %v781 = vadd.f32 %v721, %v780
      %v782 = vpop.f32.mrf.mxu0
      %v783 = vadd.f32 %v723, %v782
      %784 = vmatmul.bf16.gmra.mxu0 %v684
      %v785 = vpop.f32.mrf.mxu0
      %v786 = vadd.f32 %v726, %v785
      %v787 = vpop.f32.mrf.mxu0
      %v788 = vadd.f32 %v728, %v787
      %789 = vmatmul.bf16.gmra.mxu0 %v687
      %v790 = vpop.f32.mrf.mxu0
      %v791 = vadd.f32 %v731, %v790
      %v792 = vpop.f32.mrf.mxu0
      %v793 = vadd.f32 %v733, %v792
      %794 = vmatmul.bf16.gmra.mxu0 %v690
      %v795 = vpop.f32.mrf.mxu0
      %v796 = vadd.f32 %v736, %v795
      %v797 = vpop.f32.mrf.mxu0
      %v798 = vadd.f32 %v738, %v797
      %799 = vmatmul.bf16.gmra.mxu0 %v693
      %v800 = vpop.f32.mrf.mxu0
      %v801 = vadd.f32 %v741, %v800
      %v802 = vpop.f32.mrf.mxu0
      %v803 = vadd.f32 %v743, %v802
      %804 = vmatmul.bf16.gmra.mxu0 %v696
      %v805 = vpop.f32.mrf.mxu0
      %v806 = vadd.f32 %v746, %v805
      %v807 = vpop.f32.mrf.mxu0
      %v808 = vadd.f32 %v748, %v807
      %809 = vmatmul.bf16.gmra.mxu0 %v699
      %v810 = vpop.f32.mrf.mxu0
      %v811 = vadd.f32 %v751, %v810
      %v812 = vpop.f32.mrf.mxu0
      %v813 = vadd.f32 %v753, %v812
      %814 = vmatmul.bf16.gmra.mxu0 %v702
      %v815 = vpop.f32.mrf.mxu0
      %v816 = vadd.f32 %v756, %v815
      %v817 = vpop.f32.mrf.mxu0
      %v818 = vadd.f32 %v758, %v817
      %819 = vdwg.mxu0
      %s820 = scalar_lea.vmem %s3, 8
      %v821 = vld [vmem:[%s820] sm:$0xf]
      %v824 = vunpack.c.l.b16 %v637
      %v825 = vunpack.c.l.b16 %v638
      %v826 = vpack.c.b16 %v825, %v824
      %v828 = vsel %vm682, %v826, 0
      %v831 = vsel %vm707, %v821, 0
      %833 = vmatpush.bf16.msra.mxu0 0
      %834 = vmatpush.bf16.msra.mxu0 0
      %835 = vmatpush.bf16.msra.mxu0 0
      %836 = vmatpush.bf16.msra.mxu0 0
      %837 = vmatpush.bf16.msra.mxu0 0
      %838 = vmatpush.bf16.msra.mxu0 0
      %839 = vmatpush.bf16.msra.mxu0 0
      %840 = vmatpush.bf16.msra.mxu0 %v831
      %841 = vmatmul.bf16.gmra.mxu0 %v687
      %v842 = vpop.f32.mrf.mxu0
      %v843 = vadd.f32 0.0, %v842
      %v844 = vpop.f32.mrf.mxu0
      %v845 = vadd.f32 0.0, %v844
      %846 = vmatmul.bf16.gmra.mxu0 %v690
      %v847 = vpop.f32.mrf.mxu0
      %v848 = vadd.f32 0.0, %v847
      %v849 = vpop.f32.mrf.mxu0
      %v850 = vadd.f32 0.0, %v849
      %851 = vmatmul.bf16.gmra.mxu0 %v693
      %v852 = vpop.f32.mrf.mxu0
      %v853 = vadd.f32 0.0, %v852
      %v854 = vpop.f32.mrf.mxu0
      %v855 = vadd.f32 0.0, %v854
      %856 = vmatmul.bf16.gmra.mxu0 %v696
      %v857 = vpop.f32.mrf.mxu0
      %v858 = vadd.f32 0.0, %v857
      %v859 = vpop.f32.mrf.mxu0
      %v860 = vadd.f32 0.0, %v859
      %861 = vmatmul.bf16.gmra.mxu0 %v699
      %v862 = vpop.f32.mrf.mxu0
      %v863 = vadd.f32 0.0, %v862
      %v864 = vpop.f32.mrf.mxu0
      %v865 = vadd.f32 0.0, %v864
      %866 = vmatmul.bf16.gmra.mxu0 %v702
      %v867 = vpop.f32.mrf.mxu0
      %v868 = vadd.f32 0.0, %v867
      %v869 = vpop.f32.mrf.mxu0
      %v870 = vadd.f32 0.0, %v869
      %871 = vmatmul.bf16.gmra.mxu0 %v705
      %v872 = vpop.f32.mrf.mxu0
      %v873 = vadd.f32 0.0, %v872
      %v874 = vpop.f32.mrf.mxu0
      %v875 = vadd.f32 0.0, %v874
      %876 = vmatmul.bf16.gmra.mxu0 %v828
      %v877 = vpop.f32.mrf.mxu0
      %v878 = vadd.f32 0.0, %v877
      %v879 = vpop.f32.mrf.mxu0
      %v880 = vadd.f32 0.0, %v879
      %881 = vdwg.mxu0
      %v882 = vadd.f32 %v781, %v843
      %v883 = vadd.f32 %v783, %v845
      %v884 = vadd.f32 %v786, %v848
      %v885 = vadd.f32 %v788, %v850
      %v886 = vadd.f32 %v791, %v853
      %v887 = vadd.f32 %v793, %v855
      %v888 = vadd.f32 %v796, %v858
      %v889 = vadd.f32 %v798, %v860
      %v890 = vadd.f32 %v801, %v863
      %v891 = vadd.f32 %v803, %v865
      %v892 = vadd.f32 %v806, %v868
      %v893 = vadd.f32 %v808, %v870
      %v894 = vadd.f32 %v811, %v873
      %v895 = vadd.f32 %v813, %v875
      %v896 = vadd.f32 %v816, %v878
      %v897 = vadd.f32 %v818, %v880
      %v898 = vld [vmem:[#allocation2] sm:$0xff]
      %v899 = vld [vmem:[#allocation2 + $0x8] sm:$0xff]
      %v900 = vld [vmem:[#allocation2 + $0x10] sm:$0xff]
      %v901 = vld [vmem:[#allocation2 + $0x18] sm:$0xff]
      %v902 = vld [vmem:[#allocation2 + $0x20] sm:$0xff]
      %v903 = vld [vmem:[#allocation2 + $0x28] sm:$0xff]
      %v904 = vld [vmem:[#allocation2 + $0x30] sm:$0xff]
      %v905 = vld [vmem:[#allocation2 + $0x38] sm:$0xff]
      %v906 = vld [vmem:[#allocation2 + $0x40] sm:$0xff]
      %v907 = vld [vmem:[#allocation2 + $0x48] sm:$0xff]
      %v908 = vld [vmem:[#allocation2 + $0x50] sm:$0xff]
      %v909 = vld [vmem:[#allocation2 + $0x58] sm:$0xff]
      %v910 = vld [vmem:[#allocation2 + $0x60] sm:$0xff]
      %v911 = vld [vmem:[#allocation2 + $0x68] sm:$0xff]
      %v912 = vld [vmem:[#allocation2 + $0x70] sm:$0xff]
      %v913 = vld [vmem:[#allocation2 + $0x78] sm:$0xff]
      %v914 = vadd.f32 %v898, %v882
      %v915 = vadd.f32 %v899, %v883
      %v916 = vadd.f32 %v900, %v884
      %v917 = vadd.f32 %v901, %v885
      %v918 = vadd.f32 %v902, %v886
      %v919 = vadd.f32 %v903, %v887
      %v920 = vadd.f32 %v904, %v888
      %v921 = vadd.f32 %v905, %v889
      %v922 = vadd.f32 %v906, %v890
      %v923 = vadd.f32 %v907, %v891
      %v924 = vadd.f32 %v908, %v892
      %v925 = vadd.f32 %v909, %v893
      %v926 = vadd.f32 %v910, %v894
      %v927 = vadd.f32 %v911, %v895
      %v928 = vadd.f32 %v912, %v896
      %v929 = vadd.f32 %v913, %v897
      %vm930 = vcmask 15360
      %931 = vst.msk [vmem:[#allocation2] sm:$0xff] %vm930, %v914
      %932 = vst.msk [vmem:[#allocation2 + $0x8] sm:$0xff] %vm930, %v915
      %933 = vst.msk [vmem:[#allocation2 + $0x10] sm:$0xff] %vm930, %v916
      %934 = vst.msk [vmem:[#allocation2 + $0x18] sm:$0xff] %vm930, %v917
      %935 = vst.msk [vmem:[#allocation2 + $0x20] sm:$0xff] %vm930, %v918
      %936 = vst.msk [vmem:[#allocation2 + $0x28] sm:$0xff] %vm930, %v919
      %937 = vst.msk [vmem:[#allocation2 + $0x30] sm:$0xff] %vm930, %v920
      %938 = vst.msk [vmem:[#allocation2 + $0x38] sm:$0xff] %vm930, %v921
      %939 = vst.msk [vmem:[#allocation2 + $0x40] sm:$0xff] %vm930, %v922
      %940 = vst.msk [vmem:[#allocation2 + $0x48] sm:$0xff] %vm930, %v923
      %941 = vst.msk [vmem:[#allocation2 + $0x50] sm:$0xff] %vm930, %v924
      %942 = vst.msk [vmem:[#allocation2 + $0x58] sm:$0xff] %vm930, %v925
      %943 = vst.msk [vmem:[#allocation2 + $0x60] sm:$0xff] %vm930, %v926
      %944 = vst.msk [vmem:[#allocation2 + $0x68] sm:$0xff] %vm930, %v927
      %945 = vst.msk [vmem:[#allocation2 + $0x70] sm:$0xff] %vm930, %v928
      %946 = vst.msk [vmem:[#allocation2 + $0x78] sm:$0xff] %vm930, %v929
      %s947 = scalar_lea.vmem [#allocation2], 128
      %v948 = vld [vmem:[%s947] sm:$0xff]
      %v949 = vld [vmem:[%s947 + $0x8] sm:$0xff]
      %v950 = vld [vmem:[%s947 + $0x10] sm:$0xff]
      %v951 = vld [vmem:[%s947 + $0x18] sm:$0xff]
      %v952 = vld [vmem:[%s947 + $0x20] sm:$0xff]
      %v953 = vld [vmem:[%s947 + $0x28] sm:$0xff]
      %v954 = vld [vmem:[%s947 + $0x30] sm:$0xff]
      %v955 = vld [vmem:[%s947 + $0x38] sm:$0xff]
      %v956 = vld [vmem:[%s947 + $0x40] sm:$0xff]
      %v957 = vld [vmem:[%s947 + $0x48] sm:$0xff]
      %v958 = vld [vmem:[%s947 + $0x50] sm:$0xff]
      %v959 = vld [vmem:[%s947 + $0x58] sm:$0xff]
      %v960 = vld [vmem:[%s947 + $0x60] sm:$0xff]
      %v961 = vld [vmem:[%s947 + $0x68] sm:$0xff]
      %v962 = vld [vmem:[%s947 + $0x70] sm:$0xff]
      %v963 = vld [vmem:[%s947 + $0x78] sm:$0xff]
      %980 = vrot.lane.b32.xlu0 %v882, 126
      %v981 = vpop.permute.xlu0 %980
      %982 = vrot.lane.b32.xlu0 %v883, 126
      %v983 = vpop.permute.xlu0 %982
      %984 = vrot.lane.b32.xlu0 %v884, 126
      %v985 = vpop.permute.xlu0 %984
      %986 = vrot.lane.b32.xlu0 %v885, 126
      %v987 = vpop.permute.xlu0 %986
      %988 = vrot.lane.b32.xlu0 %v886, 126
      %v989 = vpop.permute.xlu0 %988
      %990 = vrot.lane.b32.xlu0 %v887, 126
      %v991 = vpop.permute.xlu0 %990
      %992 = vrot.lane.b32.xlu0 %v888, 126
      %v993 = vpop.permute.xlu0 %992
      %994 = vrot.lane.b32.xlu0 %v889, 126
      %v995 = vpop.permute.xlu0 %994
      %996 = vrot.lane.b32.xlu0 %v890, 126
      %v997 = vpop.permute.xlu0 %996
      %998 = vrot.lane.b32.xlu0 %v891, 126
      %v999 = vpop.permute.xlu0 %998
      %1000 = vrot.lane.b32.xlu0 %v892, 126
      %v1001 = vpop.permute.xlu0 %1000
      %1002 = vrot.lane.b32.xlu0 %v893, 126
      %v1003 = vpop.permute.xlu0 %1002
      %1004 = vrot.lane.b32.xlu0 %v894, 126
      %v1005 = vpop.permute.xlu0 %1004
      %1006 = vrot.lane.b32.xlu0 %v895, 126
      %v1007 = vpop.permute.xlu0 %1006
      %1008 = vrot.lane.b32.xlu0 %v896, 126
      %v1009 = vpop.permute.xlu0 %1008
      %1010 = vrot.lane.b32.xlu0 %v897, 126
      %v1011 = vpop.permute.xlu0 %1010
      %v1028 = vadd.f32 %v948, %v981
      %v1029 = vadd.f32 %v949, %v983
      %v1030 = vadd.f32 %v950, %v985
      %v1031 = vadd.f32 %v951, %v987
      %v1032 = vadd.f32 %v952, %v989
      %v1033 = vadd.f32 %v953, %v991
      %v1034 = vadd.f32 %v954, %v993
      %v1035 = vadd.f32 %v955, %v995
      %v1036 = vadd.f32 %v956, %v997
      %v1037 = vadd.f32 %v957, %v999
      %v1038 = vadd.f32 %v958, %v1001
      %v1039 = vadd.f32 %v959, %v1003
      %v1040 = vadd.f32 %v960, %v1005
      %v1041 = vadd.f32 %v961, %v1007
      %v1042 = vadd.f32 %v962, %v1009
      %v1043 = vadd.f32 %v963, %v1011
      %1044 = vst.msk [vmem:[%s947] sm:$0xff] %vm930, %v1028
      %1045 = vst.msk [vmem:[%s947 + $0x8] sm:$0xff] %vm930, %v1029
      %1046 = vst.msk [vmem:[%s947 + $0x10] sm:$0xff] %vm930, %v1030
      %1047 = vst.msk [vmem:[%s947 + $0x18] sm:$0xff] %vm930, %v1031
      %1048 = vst.msk [vmem:[%s947 + $0x20] sm:$0xff] %vm930, %v1032
      %1049 = vst.msk [vmem:[%s947 + $0x28] sm:$0xff] %vm930, %v1033
      %1050 = vst.msk [vmem:[%s947 + $0x30] sm:$0xff] %vm930, %v1034
      %1051 = vst.msk [vmem:[%s947 + $0x38] sm:$0xff] %vm930, %v1035
      %1052 = vst.msk [vmem:[%s947 + $0x40] sm:$0xff] %vm930, %v1036
      %1053 = vst.msk [vmem:[%s947 + $0x48] sm:$0xff] %vm930, %v1037
      %1054 = vst.msk [vmem:[%s947 + $0x50] sm:$0xff] %vm930, %v1038
      %1055 = vst.msk [vmem:[%s947 + $0x58] sm:$0xff] %vm930, %v1039
      %1056 = vst.msk [vmem:[%s947 + $0x60] sm:$0xff] %vm930, %v1040
      %1057 = vst.msk [vmem:[%s947 + $0x68] sm:$0xff] %vm930, %v1041
      %1058 = vst.msk [vmem:[%s947 + $0x70] sm:$0xff] %vm930, %v1042
      %1059 = vst.msk [vmem:[%s947 + $0x78] sm:$0xff] %vm930, %v1043
      %s1060 = scalar_lea.vmem [#allocation2], 256
      %v1061 = vld [vmem:[%s1060] sm:$0xff]
      %v1062 = vld [vmem:[%s1060 + $0x8] sm:$0xff]
      %v1063 = vld [vmem:[%s1060 + $0x10] sm:$0xff]
      %v1064 = vld [vmem:[%s1060 + $0x18] sm:$0xff]
      %v1065 = vld [vmem:[%s1060 + $0x20] sm:$0xff]
      %v1066 = vld [vmem:[%s1060 + $0x28] sm:$0xff]
      %v1067 = vld [vmem:[%s1060 + $0x30] sm:$0xff]
      %v1068 = vld [vmem:[%s1060 + $0x38] sm:$0xff]
      %v1069 = vld [vmem:[%s1060 + $0x40] sm:$0xff]
      %v1070 = vld [vmem:[%s1060 + $0x48] sm:$0xff]
      %v1071 = vld [vmem:[%s1060 + $0x50] sm:$0xff]
      %v1072 = vld [vmem:[%s1060 + $0x58] sm:$0xff]
      %v1073 = vld [vmem:[%s1060 + $0x60] sm:$0xff]
      %v1074 = vld [vmem:[%s1060 + $0x68] sm:$0xff]
      %v1075 = vld [vmem:[%s1060 + $0x70] sm:$0xff]
      %v1076 = vld [vmem:[%s1060 + $0x78] sm:$0xff]
      %1077 = vrot.lane.b32.xlu0 %v882, 124
      %v1078 = vpop.permute.xlu0 %1077
      %1079 = vrot.lane.b32.xlu0 %v883, 124
      %v1080 = vpop.permute.xlu0 %1079
      %1081 = vrot.lane.b32.xlu0 %v884, 124
      %v1082 = vpop.permute.xlu0 %1081
      %1083 = vrot.lane.b32.xlu0 %v885, 124
      %v1084 = vpop.permute.xlu0 %1083
      %1085 = vrot.lane.b32.xlu0 %v886, 124
      %v1086 = vpop.permute.xlu0 %1085
      %1087 = vrot.lane.b32.xlu0 %v887, 124
      %v1088 = vpop.permute.xlu0 %1087
      %1089 = vrot.lane.b32.xlu0 %v888, 124
      %v1090 = vpop.permute.xlu0 %1089
      %1091 = vrot.lane.b32.xlu0 %v889, 124
      %v1092 = vpop.permute.xlu0 %1091
      %1093 = vrot.lane.b32.xlu0 %v890, 124
      %v1094 = vpop.permute.xlu0 %1093
      %1095 = vrot.lane.b32.xlu0 %v891, 124
      %v1096 = vpop.permute.xlu0 %1095
      %1097 = vrot.lane.b32.xlu0 %v892, 124
      %v1098 = vpop.permute.xlu0 %1097
      %1099 = vrot.lane.b32.xlu0 %v893, 124
      %v1100 = vpop.permute.xlu0 %1099
      %1101 = vrot.lane.b32.xlu0 %v894, 124
      %v1102 = vpop.permute.xlu0 %1101
      %1103 = vrot.lane.b32.xlu0 %v895, 124
      %v1104 = vpop.permute.xlu0 %1103
      %1105 = vrot.lane.b32.xlu0 %v896, 124
      %v1106 = vpop.permute.xlu0 %1105
      %1107 = vrot.lane.b32.xlu0 %v897, 124
      %v1108 = vpop.permute.xlu0 %1107
      %v1125 = vadd.f32 %v1061, %v1078
      %v1126 = vadd.f32 %v1062, %v1080
      %v1127 = vadd.f32 %v1063, %v1082
      %v1128 = vadd.f32 %v1064, %v1084
      %v1129 = vadd.f32 %v1065, %v1086
      %v1130 = vadd.f32 %v1066, %v1088
      %v1131 = vadd.f32 %v1067, %v1090
      %v1132 = vadd.f32 %v1068, %v1092
      %v1133 = vadd.f32 %v1069, %v1094
      %v1134 = vadd.f32 %v1070, %v1096
      %v1135 = vadd.f32 %v1071, %v1098
      %v1136 = vadd.f32 %v1072, %v1100
      %v1137 = vadd.f32 %v1073, %v1102
      %v1138 = vadd.f32 %v1074, %v1104
      %v1139 = vadd.f32 %v1075, %v1106
      %v1140 = vadd.f32 %v1076, %v1108
      %1141 = vst.msk [vmem:[%s1060] sm:$0xff] %vm930, %v1125
      %1142 = vst.msk [vmem:[%s1060 + $0x8] sm:$0xff] %vm930, %v1126
      %1143 = vst.msk [vmem:[%s1060 + $0x10] sm:$0xff] %vm930, %v1127
      %1144 = vst.msk [vmem:[%s1060 + $0x18] sm:$0xff] %vm930, %v1128
      %1145 = vst.msk [vmem:[%s1060 + $0x20] sm:$0xff] %vm930, %v1129
      %1146 = vst.msk [vmem:[%s1060 + $0x28] sm:$0xff] %vm930, %v1130
      %1147 = vst.msk [vmem:[%s1060 + $0x30] sm:$0xff] %vm930, %v1131
      %1148 = vst.msk [vmem:[%s1060 + $0x38] sm:$0xff] %vm930, %v1132
      %1149 = vst.msk [vmem:[%s1060 + $0x40] sm:$0xff] %vm930, %v1133
      %1150 = vst.msk [vmem:[%s1060 + $0x48] sm:$0xff] %vm930, %v1134
      %1151 = vst.msk [vmem:[%s1060 + $0x50] sm:$0xff] %vm930, %v1135
      %1152 = vst.msk [vmem:[%s1060 + $0x58] sm:$0xff] %vm930, %v1136
      %1153 = vst.msk [vmem:[%s1060 + $0x60] sm:$0xff] %vm930, %v1137
      %1154 = vst.msk [vmem:[%s1060 + $0x68] sm:$0xff] %vm930, %v1138
      %1155 = vst.msk [vmem:[%s1060 + $0x70] sm:$0xff] %vm930, %v1139
      %1156 = vst.msk [vmem:[%s1060 + $0x78] sm:$0xff] %vm930, %v1140
      // Predicated region
      $region57: #{psp_head_forward.3} parent=51 // pred_check
        %p1157 = pneg %p554
      $region58: #{psp_head_forward.3} parent=51 // pred_check_branch
        %1159 = sbr.rel (%p1157) target = $region60
      $region59: #{psp_head_forward.3} parent=51 // pred_region
        %v1160 = vld [vmem:[#allocation2] sm:$0xff]
        %v1161 = vld [vmem:[#allocation2 + $0x8] sm:$0xff]
        %v1162 = vld [vmem:[#allocation2 + $0x10] sm:$0xff]
        %v1163 = vld [vmem:[#allocation2 + $0x18] sm:$0xff]
        %v1164 = vld [vmem:[#allocation2 + $0x20] sm:$0xff]
        %v1165 = vld [vmem:[#allocation2 + $0x28] sm:$0xff]
        %v1166 = vld [vmem:[#allocation2 + $0x30] sm:$0xff]
        %v1167 = vld [vmem:[#allocation2 + $0x38] sm:$0xff]
        %v1168 = vld [vmem:[#allocation2 + $0x40] sm:$0xff]
        %v1169 = vld [vmem:[#allocation2 + $0x48] sm:$0xff]
        %v1170 = vld [vmem:[#allocation2 + $0x50] sm:$0xff]
        %v1171 = vld [vmem:[#allocation2 + $0x58] sm:$0xff]
        %v1172 = vld [vmem:[#allocation2 + $0x60] sm:$0xff]
        %v1173 = vld [vmem:[#allocation2 + $0x68] sm:$0xff]
        %v1174 = vld [vmem:[#allocation2 + $0x70] sm:$0xff]
        %v1175 = vld [vmem:[#allocation2 + $0x78] sm:$0xff]
        %v1176 = vld [vmem:[%s947] sm:$0xff]
        %v1177 = vld [vmem:[%s947 + $0x8] sm:$0xff]
        %v1178 = vld [vmem:[%s947 + $0x10] sm:$0xff]
        %v1179 = vld [vmem:[%s947 + $0x18] sm:$0xff]
        %v1180 = vld [vmem:[%s947 + $0x20] sm:$0xff]
        %v1181 = vld [vmem:[%s947 + $0x28] sm:$0xff]
        %v1182 = vld [vmem:[%s947 + $0x30] sm:$0xff]
        %v1183 = vld [vmem:[%s947 + $0x38] sm:$0xff]
        %v1184 = vld [vmem:[%s947 + $0x40] sm:$0xff]
        %v1185 = vld [vmem:[%s947 + $0x48] sm:$0xff]
        %v1186 = vld [vmem:[%s947 + $0x50] sm:$0xff]
        %v1187 = vld [vmem:[%s947 + $0x58] sm:$0xff]
        %v1188 = vld [vmem:[%s947 + $0x60] sm:$0xff]
        %v1189 = vld [vmem:[%s947 + $0x68] sm:$0xff]
        %v1190 = vld [vmem:[%s947 + $0x70] sm:$0xff]
        %v1191 = vld [vmem:[%s947 + $0x78] sm:$0xff]
        %v1192 = vld [vmem:[%s1060] sm:$0xff]
        %v1193 = vld [vmem:[%s1060 + $0x8] sm:$0xff]
        %v1194 = vld [vmem:[%s1060 + $0x10] sm:$0xff]
        %v1195 = vld [vmem:[%s1060 + $0x18] sm:$0xff]
        %v1196 = vld [vmem:[%s1060 + $0x20] sm:$0xff]
        %v1197 = vld [vmem:[%s1060 + $0x28] sm:$0xff]
        %v1198 = vld [vmem:[%s1060 + $0x30] sm:$0xff]
        %v1199 = vld [vmem:[%s1060 + $0x38] sm:$0xff]
        %v1200 = vld [vmem:[%s1060 + $0x40] sm:$0xff]
        %v1201 = vld [vmem:[%s1060 + $0x48] sm:$0xff]
        %v1202 = vld [vmem:[%s1060 + $0x50] sm:$0xff]
        %v1203 = vld [vmem:[%s1060 + $0x58] sm:$0xff]
        %v1204 = vld [vmem:[%s1060 + $0x60] sm:$0xff]
        %v1205 = vld [vmem:[%s1060 + $0x68] sm:$0xff]
        %v1206 = vld [vmem:[%s1060 + $0x70] sm:$0xff]
        %v1207 = vld [vmem:[%s1060 + $0x78] sm:$0xff]
        %vm1224 = vcmask 1040384
        %v1225 = vrot.slane %v1160, 7
        %v1226 = vrot.slane %v1161, 7
        %v1227 = vsel %vm1224, %v1225, %v1226
        %v1228 = vrot.slane %v1162, 7
        %v1229 = vrot.slane %v1163, 7
        %v1230 = vsel %vm1224, %v1228, %v1229
        %v1231 = vrot.slane %v1164, 7
        %v1232 = vrot.slane %v1165, 7
        %v1233 = vsel %vm1224, %v1231, %v1232
        %v1234 = vrot.slane %v1166, 7
        %v1235 = vrot.slane %v1167, 7
        %v1236 = vsel %vm1224, %v1234, %v1235
        %v1237 = vrot.slane %v1168, 7
        %v1238 = vrot.slane %v1169, 7
        %v1239 = vsel %vm1224, %v1237, %v1238
        %v1240 = vrot.slane %v1170, 7
        %v1241 = vrot.slane %v1171, 7
        %v1242 = vsel %vm1224, %v1240, %v1241
        %v1243 = vrot.slane %v1172, 7
        %v1244 = vrot.slane %v1173, 7
        %v1245 = vsel %vm1224, %v1243, %v1244
        %v1246 = vrot.slane %v1174, 7
        %v1247 = vrot.slane %v1175, 7
        %v1248 = vsel %vm1224, %v1246, %v1247
        %v1265 = vsel %vm1224, 0.0, %v1225
        %v1266 = vsel %vm1224, 0.0, %v1228
        %v1267 = vsel %vm1224, 0.0, %v1231
        %v1268 = vsel %vm1224, 0.0, %v1234
        %v1269 = vsel %vm1224, 0.0, %v1237
        %v1270 = vsel %vm1224, 0.0, %v1240
        %v1271 = vsel %vm1224, 0.0, %v1243
        %v1272 = vsel %vm1224, 0.0, %v1246
        %v1273 = vadd.f32 %v1176, %v1265
        %v1274 = vadd.f32 %v1177, %v1227
        %v1275 = vadd.f32 %v1178, %v1266
        %v1276 = vadd.f32 %v1179, %v1230
        %v1277 = vadd.f32 %v1180, %v1267
        %v1278 = vadd.f32 %v1181, %v1233
        %v1279 = vadd.f32 %v1182, %v1268
        %v1280 = vadd.f32 %v1183, %v1236
        %v1281 = vadd.f32 %v1184, %v1269
        %v1282 = vadd.f32 %v1185, %v1239
        %v1283 = vadd.f32 %v1186, %v1270
        %v1284 = vadd.f32 %v1187, %v1242
        %v1285 = vadd.f32 %v1188, %v1271
        %v1286 = vadd.f32 %v1189, %v1245
        %v1287 = vadd.f32 %v1190, %v1272
        %v1288 = vadd.f32 %v1191, %v1248
        %vm1305 = vcmask 1046528
        %v1306 = vrot.slane %v1192, 1
        %v1307 = vrot.slane %v1193, 1
        %v1308 = vsel %vm1305, %v1306, %v1307
        %v1309 = vrot.slane %v1194, 1
        %v1310 = vrot.slane %v1195, 1
        %v1311 = vsel %vm1305, %v1309, %v1310
        %v1312 = vrot.slane %v1196, 1
        %v1313 = vrot.slane %v1197, 1
        %v1314 = vsel %vm1305, %v1312, %v1313
        %v1315 = vrot.slane %v1198, 1
        %v1316 = vrot.slane %v1199, 1
        %v1317 = vsel %vm1305, %v1315, %v1316
        %v1318 = vrot.slane %v1200, 1
        %v1319 = vrot.slane %v1201, 1
        %v1320 = vsel %vm1305, %v1318, %v1319
        %v1321 = vrot.slane %v1202, 1
        %v1322 = vrot.slane %v1203, 1
        %v1323 = vsel %vm1305, %v1321, %v1322
        %v1324 = vrot.slane %v1204, 1
        %v1325 = vrot.slane %v1205, 1
        %v1326 = vsel %vm1305, %v1324, %v1325
        %v1327 = vrot.slane %v1206, 1
        %v1328 = vrot.slane %v1207, 1
        %v1329 = vsel %vm1305, %v1327, %v1328
        %v1346 = vsel %vm1305, %v1307, 0.0
        %v1347 = vsel %vm1305, %v1310, 0.0
        %v1348 = vsel %vm1305, %v1313, 0.0
        %v1349 = vsel %vm1305, %v1316, 0.0
        %v1350 = vsel %vm1305, %v1319, 0.0
        %v1351 = vsel %vm1305, %v1322, 0.0
        %v1352 = vsel %vm1305, %v1325, 0.0
        %v1353 = vsel %vm1305, %v1328, 0.0
        %v1354 = vadd.f32 %v1273, %v1308
        %v1355 = vadd.f32 %v1274, %v1346
        %v1356 = vadd.f32 %v1275, %v1311
        %v1357 = vadd.f32 %v1276, %v1347
        %v1358 = vadd.f32 %v1277, %v1314
        %v1359 = vadd.f32 %v1278, %v1348
        %v1360 = vadd.f32 %v1279, %v1317
        %v1361 = vadd.f32 %v1280, %v1349
        %v1362 = vadd.f32 %v1281, %v1320
        %v1363 = vadd.f32 %v1282, %v1350
        %v1364 = vadd.f32 %v1283, %v1323
        %v1365 = vadd.f32 %v1284, %v1351
        %v1366 = vadd.f32 %v1285, %v1326
        %v1367 = vadd.f32 %v1286, %v1352
        %v1368 = vadd.f32 %v1287, %v1329
        %v1369 = vadd.f32 %v1288, %v1353
        %v1370 = vld [vmem:[%s4] sm:$0xff]
        %v1371 = vld [vmem:[%s4 + $0x8] sm:$0xff]
        %v1372 = vld [vmem:[%s540] sm:$0xff]
        %v1373 = vld [vmem:[%s540 + $0x8] sm:$0xff]
        %v1374 = vld [vmem:[%s540 + $0x10] sm:$0xff]
        %v1375 = vld [vmem:[%s540 + $0x18] sm:$0xff]
        %v1376 = vld [vmem:[%s540 + $0x20] sm:$0xf]
        %vm1377 = vcmask 293888
        %v1379 = vsel %vm1377, %v1370, 0
        %v1382 = vsel %vm1377, %v1371, 0
        %v1385 = vsel %vm707, %v1376, 0
        %1387 = vmatpush.msra.mxu0 0.0
        %1388 = vmatpush.msra.mxu0 0.0
        %1389 = vmatpush.msra.mxu0 0.0
        %1390 = vmatpush.msra.mxu0 0.0
        %1391 = vmatpush.msra.mxu0 0.0
        %1392 = vmatpush.msra.mxu0 0.0
        %1393 = vmatpush.msra.mxu0 0.0
        %1394 = vmatpush.msra.mxu0 0.0
        %1395 = vmatpush.msra.mxu0 0.0
        %1396 = vmatpush.msra.mxu0 0.0
        %1397 = vmatpush.msra.mxu0 0.0
        %1398 = vmatpush.msra.mxu0 %v1385
        %1399 = vmatpush.msra.mxu0 %v1375
        %1400 = vmatpush.msra.mxu0 %v1374
        %1401 = vmatpush.msra.mxu0 %v1373
        %1402 = vmatpush.msra.mxu0 %v1372
        %1403 = vmatmul.f32.gmra.mxu0 %v1379
        %v1404 = vpop.f32.mrf.mxu0
        %v1405 = vadd.f32 0.0, %v1404
        %1406 = vmatmul.f32.gmra.mxu0 %v1382
        %v1407 = vpop.f32.mrf.mxu0
        %v1408 = vadd.f32 0.0, %v1407
        %1409 = vdwg.mxu0
        %s1410 = scalar_lea.vmem %s540, 40
        %v1411 = vld [vmem:[%s1410] sm:$0xff]
        %v1412 = vld [vmem:[%s1410 + $0x8] sm:$0xff]
        %v1413 = vld [vmem:[%s1410 + $0x10] sm:$0xff]
        %v1414 = vld [vmem:[%s1410 + $0x18] sm:$0xff]
        %v1415 = vld [vmem:[%s1410 + $0x20] sm:$0xf]
        %v1417 = vsel %vm707, %v1415, 0
        %1419 = vmatpush.msra.mxu0 0.0
        %1420 = vmatpush.msra.mxu0 0.0
        %1421 = vmatpush.msra.mxu0 0.0
        %1422 = vmatpush.msra.mxu0 0.0
        %1423 = vmatpush.msra.mxu0 0.0
        %1424 = vmatpush.msra.mxu0 0.0
        %1425 = vmatpush.msra.mxu0 0.0
        %1426 = vmatpush.msra.mxu0 0.0
        %1427 = vmatpush.msra.mxu0 0.0
        %1428 = vmatpush.msra.mxu0 0.0
        %1429 = vmatpush.msra.mxu0 0.0
        %1430 = vmatpush.msra.mxu0 %v1417
        %1431 = vmatpush.msra.mxu0 %v1414
        %1432 = vmatpush.msra.mxu0 %v1413
        %1433 = vmatpush.msra.mxu0 %v1412
        %1434 = vmatpush.msra.mxu0 %v1411
        %1435 = vmatmul.f32.gmra.mxu0 %v1379
        %v1436 = vpop.f32.mrf.mxu0
        %v1437 = vadd.f32 0.0, %v1436
        %1438 = vmatmul.f32.gmra.mxu0 %v1382
        %v1439 = vpop.f32.mrf.mxu0
        %v1440 = vadd.f32 0.0, %v1439
        %1441 = vdwg.mxu0
        %s1442 = scalar_lea.vmem %s540, 80
        %v1443 = vld [vmem:[%s1442] sm:$0xff]
        %v1444 = vld [vmem:[%s1442 + $0x8] sm:$0xff]
        %v1445 = vld [vmem:[%s1442 + $0x10] sm:$0xff]
        %v1446 = vld [vmem:[%s1442 + $0x18] sm:$0xff]
        %v1447 = vld [vmem:[%s1442 + $0x20] sm:$0xf]
        %v1449 = vsel %vm707, %v1447, 0
        %1451 = vmatpush.msra.mxu0 0.0
        %1452 = vmatpush.msra.mxu0 0.0
        %1453 = vmatpush.msra.mxu0 0.0
        %1454 = vmatpush.msra.mxu0 0.0
        %1455 = vmatpush.msra.mxu0 0.0
        %1456 = vmatpush.msra.mxu0 0.0
        %1457 = vmatpush.msra.mxu0 0.0
        %1458 = vmatpush.msra.mxu0 0.0
        %1459 = vmatpush.msra.mxu0 0.0
        %1460 = vmatpush.msra.mxu0 0.0
        %1461 = vmatpush.msra.mxu0 0.0
        %1462 = vmatpush.msra.mxu0 %v1449
        %1463 = vmatpush.msra.mxu0 %v1446
        %1464 = vmatpush.msra.mxu0 %v1445
        %1465 = vmatpush.msra.mxu0 %v1444
        %1466 = vmatpush.msra.mxu0 %v1443
        %1467 = vmatmul.f32.gmra.mxu0 %v1379
        %v1468 = vpop.f32.mrf.mxu0
        %v1469 = vadd.f32 0.0, %v1468
        %1470 = vmatmul.f32.gmra.mxu0 %v1382
        %v1471 = vpop.f32.mrf.mxu0
        %v1472 = vadd.f32 0.0, %v1471
        %1473 = vdwg.mxu0
        %s1474 = scalar_lea.vmem %s540, 120
        %v1475 = vld [vmem:[%s1474] sm:$0xff]
        %v1476 = vld [vmem:[%s1474 + $0x8] sm:$0xff]
        %v1477 = vld [vmem:[%s1474 + $0x10] sm:$0xff]
        %v1478 = vld [vmem:[%s1474 + $0x18] sm:$0xff]
        %v1479 = vld [vmem:[%s1474 + $0x20] sm:$0xf]
        %v1481 = vsel %vm707, %v1479, 0
        %1483 = vmatpush.msra.mxu0 0.0
        %1484 = vmatpush.msra.mxu0 0.0
        %1485 = vmatpush.msra.mxu0 0.0
        %1486 = vmatpush.msra.mxu0 0.0
        %1487 = vmatpush.msra.mxu0 0.0
        %1488 = vmatpush.msra.mxu0 0.0
        %1489 = vmatpush.msra.mxu0 0.0
        %1490 = vmatpush.msra.mxu0 0.0
        %1491 = vmatpush.msra.mxu0 0.0
        %1492 = vmatpush.msra.mxu0 0.0
        %1493 = vmatpush.msra.mxu0 0.0
        %1494 = vmatpush.msra.mxu0 %v1481
        %1495 = vmatpush.msra.mxu0 %v1478
        %1496 = vmatpush.msra.mxu0 %v1477
        %1497 = vmatpush.msra.mxu0 %v1476
        %1498 = vmatpush.msra.mxu0 %v1475
        %1499 = vmatmul.f32.gmra.mxu0 %v1379
        %v1500 = vpop.f32.mrf.mxu0
        %v1501 = vadd.f32 0.0, %v1500
        %1502 = vmatmul.f32.gmra.mxu0 %v1382
        %v1503 = vpop.f32.mrf.mxu0
        %v1504 = vadd.f32 0.0, %v1503
        %1505 = vdwg.mxu0
        %s1506 = scalar_lea.vmem %s540, 160
        %v1507 = vld [vmem:[%s1506] sm:$0xff]
        %v1508 = vld [vmem:[%s1506 + $0x8] sm:$0xff]
        %v1509 = vld [vmem:[%s1506 + $0x10] sm:$0xff]
        %v1510 = vld [vmem:[%s1506 + $0x18] sm:$0xff]
        %v1511 = vld [vmem:[%s1506 + $0x20] sm:$0xf]
        %v1513 = vsel %vm707, %v1511, 0
        %1515 = vmatpush.msra.mxu0 0.0
        %1516 = vmatpush.msra.mxu0 0.0
        %1517 = vmatpush.msra.mxu0 0.0
        %1518 = vmatpush.msra.mxu0 0.0
        %1519 = vmatpush.msra.mxu0 0.0
        %1520 = vmatpush.msra.mxu0 0.0
        %1521 = vmatpush.msra.mxu0 0.0
        %1522 = vmatpush.msra.mxu0 0.0
        %1523 = vmatpush.msra.mxu0 0.0
        %1524 = vmatpush.msra.mxu0 0.0
        %1525 = vmatpush.msra.mxu0 0.0
        %1526 = vmatpush.msra.mxu0 %v1513
        %1527 = vmatpush.msra.mxu0 %v1510
        %1528 = vmatpush.msra.mxu0 %v1509
        %1529 = vmatpush.msra.mxu0 %v1508
        %1530 = vmatpush.msra.mxu0 %v1507
        %1531 = vmatmul.f32.gmra.mxu0 %v1379
        %v1532 = vpop.f32.mrf.mxu0
        %v1533 = vadd.f32 0.0, %v1532
        %1534 = vmatmul.f32.gmra.mxu0 %v1382
        %v1535 = vpop.f32.mrf.mxu0
        %v1536 = vadd.f32 0.0, %v1535
        %1537 = vdwg.mxu0
        %s1538 = scalar_lea.vmem %s540, 200
        %v1539 = vld [vmem:[%s1538] sm:$0xff]
        %v1540 = vld [vmem:[%s1538 + $0x8] sm:$0xff]
        %v1541 = vld [vmem:[%s1538 + $0x10] sm:$0xff]
        %v1542 = vld [vmem:[%s1538 + $0x18] sm:$0xff]
        %v1543 = vld [vmem:[%s1538 + $0x20] sm:$0xf]
        %v1545 = vsel %vm707, %v1543, 0
        %1547 = vmatpush.msra.mxu0 0.0
        %1548 = vmatpush.msra.mxu0 0.0
        %1549 = vmatpush.msra.mxu0 0.0
        %1550 = vmatpush.msra.mxu0 0.0
        %1551 = vmatpush.msra.mxu0 0.0
        %1552 = vmatpush.msra.mxu0 0.0
        %1553 = vmatpush.msra.mxu0 0.0
        %1554 = vmatpush.msra.mxu0 0.0
        %1555 = vmatpush.msra.mxu0 0.0
        %1556 = vmatpush.msra.mxu0 0.0
        %1557 = vmatpush.msra.mxu0 0.0
        %1558 = vmatpush.msra.mxu0 %v1545
        %1559 = vmatpush.msra.mxu0 %v1542
        %1560 = vmatpush.msra.mxu0 %v1541
        %1561 = vmatpush.msra.mxu0 %v1540
        %1562 = vmatpush.msra.mxu0 %v1539
        %1563 = vmatmul.f32.gmra.mxu0 %v1379
        %v1564 = vpop.f32.mrf.mxu0
        %v1565 = vadd.f32 0.0, %v1564
        %1566 = vmatmul.f32.gmra.mxu0 %v1382
        %v1567 = vpop.f32.mrf.mxu0
        %v1568 = vadd.f32 0.0, %v1567
        %1569 = vdwg.mxu0
        %s1570 = scalar_lea.vmem %s540, 240
        %v1571 = vld [vmem:[%s1570] sm:$0xff]
        %v1572 = vld [vmem:[%s1570 + $0x8] sm:$0xff]
        %v1573 = vld [vmem:[%s1570 + $0x10] sm:$0xff]
        %v1574 = vld [vmem:[%s1570 + $0x18] sm:$0xff]
        %v1575 = vld [vmem:[%s1570 + $0x20] sm:$0xf]
        %v1577 = vsel %vm707, %v1575, 0
        %1579 = vmatpush.msra.mxu0 0.0
        %1580 = vmatpush.msra.mxu0 0.0
        %1581 = vmatpush.msra.mxu0 0.0
        %1582 = vmatpush.msra.mxu0 0.0
        %1583 = vmatpush.msra.mxu0 0.0
        %1584 = vmatpush.msra.mxu0 0.0
        %1585 = vmatpush.msra.mxu0 0.0
        %1586 = vmatpush.msra.mxu0 0.0
        %1587 = vmatpush.msra.mxu0 0.0
        %1588 = vmatpush.msra.mxu0 0.0
        %1589 = vmatpush.msra.mxu0 0.0
        %1590 = vmatpush.msra.mxu0 %v1577
        %1591 = vmatpush.msra.mxu0 %v1574
        %1592 = vmatpush.msra.mxu0 %v1573
        %1593 = vmatpush.msra.mxu0 %v1572
        %1594 = vmatpush.msra.mxu0 %v1571
        %1595 = vmatmul.f32.gmra.mxu0 %v1379
        %v1596 = vpop.f32.mrf.mxu0
        %v1597 = vadd.f32 0.0, %v1596
        %1598 = vmatmul.f32.gmra.mxu0 %v1382
        %v1599 = vpop.f32.mrf.mxu0
        %v1600 = vadd.f32 0.0, %v1599
        %1601 = vdwg.mxu0
        %s1602 = scalar_lea.vmem %s540, 280
        %v1603 = vld [vmem:[%s1602] sm:$0xff]
        %v1604 = vld [vmem:[%s1602 + $0x8] sm:$0xff]
        %v1605 = vld [vmem:[%s1602 + $0x10] sm:$0xff]
        %v1606 = vld [vmem:[%s1602 + $0x18] sm:$0xff]
        %v1607 = vld [vmem:[%s1602 + $0x20] sm:$0xf]
        %v1609 = vsel %vm707, %v1607, 0
        %1611 = vmatpush.msra.mxu0 0.0
        %1612 = vmatpush.msra.mxu0 0.0
        %1613 = vmatpush.msra.mxu0 0.0
        %1614 = vmatpush.msra.mxu0 0.0
        %1615 = vmatpush.msra.mxu0 0.0
        %1616 = vmatpush.msra.mxu0 0.0
        %1617 = vmatpush.msra.mxu0 0.0
        %1618 = vmatpush.msra.mxu0 0.0
        %1619 = vmatpush.msra.mxu0 0.0
        %1620 = vmatpush.msra.mxu0 0.0
        %1621 = vmatpush.msra.mxu0 0.0
        %1622 = vmatpush.msra.mxu0 %v1609
        %1623 = vmatpush.msra.mxu0 %v1606
        %1624 = vmatpush.msra.mxu0 %v1605
        %1625 = vmatpush.msra.mxu0 %v1604
        %1626 = vmatpush.msra.mxu0 %v1603
        %1627 = vmatmul.f32.gmra.mxu0 %v1379
        %v1628 = vpop.f32.mrf.mxu0
        %v1629 = vadd.f32 0.0, %v1628
        %1630 = vmatmul.f32.gmra.mxu0 %v1382
        %v1631 = vpop.f32.mrf.mxu0
        %v1632 = vadd.f32 0.0, %v1631
        %1633 = vdwg.mxu0
        %v1634 = vadd.f32 %v1354, %v1405
        %v1635 = vadd.f32 %v1355, %v1408
        %v1636 = vadd.f32 %v1356, %v1437
        %v1637 = vadd.f32 %v1357, %v1440
        %v1638 = vadd.f32 %v1358, %v1469
        %v1639 = vadd.f32 %v1359, %v1472
        %v1640 = vadd.f32 %v1360, %v1501
        %v1641 = vadd.f32 %v1361, %v1504
        %v1642 = vadd.f32 %v1362, %v1533
        %v1643 = vadd.f32 %v1363, %v1536
        %v1644 = vadd.f32 %v1364, %v1565
        %v1645 = vadd.f32 %v1365, %v1568
        %v1646 = vadd.f32 %v1366, %v1597
        %v1647 = vadd.f32 %v1367, %v1600
        %v1648 = vadd.f32 %v1368, %v1629
        %v1649 = vadd.f32 %v1369, %v1632
        %v1650 = vld [vmem:[%s6] sm:$0x1]
        %v1652 = vperm.slane %v1650, 0
        %v1654 = vmul.f32 %v1634, %v1652
        %v1655 = vmul.f32 %v1635, %v1652
        %v1656 = vmul.f32 %v1636, %v1652
        %v1657 = vmul.f32 %v1637, %v1652
        %v1658 = vmul.f32 %v1638, %v1652
        %v1659 = vmul.f32 %v1639, %v1652
        %v1660 = vmul.f32 %v1640, %v1652
        %v1661 = vmul.f32 %v1641, %v1652
        %v1662 = vmul.f32 %v1642, %v1652
        %v1663 = vmul.f32 %v1643, %v1652
        %v1664 = vmul.f32 %v1644, %v1652
        %v1665 = vmul.f32 %v1645, %v1652
        %v1666 = vmul.f32 %v1646, %v1652
        %v1667 = vmul.f32 %v1647, %v1652
        %v1668 = vmul.f32 %v1648, %v1652
        %v1669 = vmul.f32 %v1649, %v1652
        %v1670 = vld [vmem:[%s7] sm:$0x1]
        %v1672 = vperm.slane %v1670, 0
        %v1674 = vadd.f32 %v1654, %v1672
        %v1675 = vadd.f32 %v1655, %v1672
        %v1676 = vadd.f32 %v1656, %v1672
        %v1677 = vadd.f32 %v1657, %v1672
        %v1678 = vadd.f32 %v1658, %v1672
        %v1679 = vadd.f32 %v1659, %v1672
        %v1680 = vadd.f32 %v1660, %v1672
        %v1681 = vadd.f32 %v1661, %v1672
        %v1682 = vadd.f32 %v1662, %v1672
        %v1683 = vadd.f32 %v1663, %v1672
        %v1684 = vadd.f32 %v1664, %v1672
        %v1685 = vadd.f32 %v1665, %v1672
        %v1686 = vadd.f32 %v1666, %v1672
        %v1687 = vadd.f32 %v1667, %v1672
        %v1688 = vadd.f32 %v1668, %v1672
        %v1689 = vadd.f32 %v1669, %v1672
        %v1690 = vmax.f32 %v1674, 0.0
        %v1691 = vmax.f32 %v1675, 0.0
        %v1692 = vmax.f32 %v1676, 0.0
        %v1693 = vmax.f32 %v1677, 0.0
        %v1694 = vmax.f32 %v1678, 0.0
        %v1695 = vmax.f32 %v1679, 0.0
        %v1696 = vmax.f32 %v1680, 0.0
        %v1697 = vmax.f32 %v1681, 0.0
        %v1698 = vmax.f32 %v1682, 0.0
        %v1699 = vmax.f32 %v1683, 0.0
        %v1700 = vmax.f32 %v1684, 0.0
        %v1701 = vmax.f32 %v1685, 0.0
        %v1702 = vmax.f32 %v1686, 0.0
        %v1703 = vmax.f32 %v1687, 0.0
        %v1704 = vmax.f32 %v1688, 0.0
        %v1705 = vmax.f32 %v1689, 0.0
        %1706 = vst.msk [vmem:[%s551] sm:$0xff] %vm930, %v1690
        %1707 = vst.msk [vmem:[%s551 + $0x8] sm:$0xff] %vm930, %v1691
        %1708 = vst.msk [vmem:[%s551 + $0x10] sm:$0xff] %vm930, %v1692
        %1709 = vst.msk [vmem:[%s551 + $0x18] sm:$0xff] %vm930, %v1693
        %1710 = vst.msk [vmem:[%s551 + $0x20] sm:$0xff] %vm930, %v1694
        %1711 = vst.msk [vmem:[%s551 + $0x28] sm:$0xff] %vm930, %v1695
        %1712 = vst.msk [vmem:[%s551 + $0x30] sm:$0xff] %vm930, %v1696
        %1713 = vst.msk [vmem:[%s551 + $0x38] sm:$0xff] %vm930, %v1697
        %1714 = vst.msk [vmem:[%s551 + $0x40] sm:$0xff] %vm930, %v1698
        %1715 = vst.msk [vmem:[%s551 + $0x48] sm:$0xff] %vm930, %v1699
        %1716 = vst.msk [vmem:[%s551 + $0x50] sm:$0xff] %vm930, %v1700
        %1717 = vst.msk [vmem:[%s551 + $0x58] sm:$0xff] %vm930, %v1701
        %1718 = vst.msk [vmem:[%s551 + $0x60] sm:$0xff] %vm930, %v1702
        %1719 = vst.msk [vmem:[%s551 + $0x68] sm:$0xff] %vm930, %v1703
        %1720 = vst.msk [vmem:[%s551 + $0x70] sm:$0xff] %vm930, %v1704
        %1721 = vst.msk [vmem:[%s551 + $0x78] sm:$0xff] %vm930, %v1705
      $region60: #{psp_head_forward.3} parent=51 // pred_fallthru
        _
      %s1722 = smul.u32 8, %s25
      %p1723 = scmp.lt.s32.totalorder %s24, 1
      %s1724 = scalar_select %p1723, %s24, 1
      %p1725 = scmp.lt.s32.totalorder %s1722, 15
      %s1726 = scalar_select %p1725, %s1722, 15
      %s1727 = smul.addr %s1726, 2
      %s1728 = smul.addr %s1724, 32
      %s1729 = sadd.s32 %s1727, %s1728
      %s1730 = smul.addr %s1729, 8
      %s1731 = scalar_lea.vmem %s8, %s1730
      // Predicated region
      $region61: #{psp_head_forward.3} parent=51 // pred_check
        %p1732 = pneg %p276
      $region62: #{psp_head_forward.3} parent=51 // pred_check_branch
        %1734 = sbr.rel (%p1732) target = $region64
      $region63: #{psp_head_forward.3} parent=51 // pred_region
        %s1735 = smul.u32 8, %s25
      $region64: #{psp_head_forward.3} parent=51 // pred_fallthru
        _
    $region52: #{psp_head_forward.3} parent=5 // pred_fallthru
      _
    %p1736 = scmp.le.s32.totalorder 2, %s14
    // Predicated region
    $region65: #{psp_head_forward.3} parent=5 // pred_check
      %p1737 = pneg %p1736
    $region66: #{psp_head_forward.3} parent=5 // pred_check_branch
      %1739 = sbr.rel (%p1737) target = $region68
    $region67: #{psp_head_forward.3} parent=5 // pred_region
      %s1740 = ssub.s32 %s14, 2
      // Predicated region
      $region69: #{psp_head_forward.3} parent=67 // pred_check
        %p1741 = pneg %p282
      $region70: #{psp_head_forward.3} parent=67 // pred_check_branch
        %1743 = sbr.rel (%p1741) target = $region72
      $region71: #{psp_head_forward.3} parent=67 // pred_region
        %s1744 = smul.u32 8, %s28
        %p1745 = scmp.lt.s32.totalorder %s27, 1
        %s1746 = scalar_select %p1745, %s27, 1
        %p1747 = scmp.lt.s32.totalorder %s1744, 15
        %s1748 = scalar_select %p1747, %s1744, 15
        %s1749 = smul.addr %s1748, 2
        %s1750 = smul.addr %s1746, 32
        %s1751 = sadd.s32 %s1749, %s1750
        %s1752 = smul.addr %s1751, 8
        %s1753 = scalar_lea.vmem %s8, %s1752
      $region72: #{psp_head_forward.3} parent=67 // pred_fallthru
        _
    $region68: #{psp_head_forward.3} parent=5 // pred_fallthru
      _
  $region6: #{psp_head_forward.3} parent=0 // loop_footer
    %s18 = sadd.s32 1, %s14
  $region7: #{psp_head_forward.3} parent=0 // loop_footer_branch
    %13 = sbr.rel target = $region3
  $region8: #{psp_head_forward.3} parent=0 // loop_exit
    _

</llo_original>
